<compile_context>
chip_gen: v7x
topology: tpu7x:2x2x1
jax: 0.10.0
libtpu: 0.0.40
codegen_flags: <defaults>
</compile_context>

<pallas_src>
import jax
import jax.numpy as jnp
from jax import lax
from jax.experimental import pallas as pl
from jax.experimental.pallas import tpu as pltpu


def _lovasz_hinge_kernel(gts_ref, e_row_ref, e_col_ref, y_col_ref,
                         out_ref, acc_ge_ref, acc_gt_ref):
    b = pl.program_id(0)
    j = pl.program_id(2)
    nj = pl.num_programs(2)
    tj = y_col_ref.shape[1]

    @pl.when(j == 0)
    def _():
        acc_ge_ref[...] = jnp.zeros_like(acc_ge_ref)
        acc_gt_ref[...] = jnp.zeros_like(acc_gt_ref)

    e_i = e_col_ref[0]          # (TI, 1)  hinge errors of this i-tile (column)
    e_j = e_row_ref[0]          # (1, TJ)  hinge errors of this j-tile (row)
    y_j = y_col_ref[0]          # (TJ, 1)  labels of this j-tile (column)

    # {0,1} comparison masks for this (i,j) tile pair, stored as bf16 (exact)
    # so the MXU matmul is single-pass.  (f32 select + pack: lowers on all
    # generations; on v6e/v7x a direct bf16 select would shave ~20-30% VPU.)
    ge = jnp.where(e_j >= e_i, 1.0, 0.0).astype(jnp.bfloat16)   # (TI, TJ)
    gt = jnp.where(e_j > e_i, 1.0, 0.0).astype(jnp.bfloat16)    # (TI, TJ)

    # Tiny stationary weight (TJ, 8): col 0 -> ones (counts), col 1 -> y_j
    # (cumulative positives); cols 2..7 are never read from the accumulator.
    col_id = lax.broadcasted_iota(jnp.int32, (tj, 8), 1)
    w = jnp.where(col_id < 1, 1.0,
                  jnp.broadcast_to(y_j, (tj, 8))).astype(jnp.bfloat16)

    # Masks are the streamed MXU operand; weight load is O(TJ).  f32 accumulate
    # of integer-valued counts is exact (N < 2^24 asserted in the wrapper).
    acc_ge_ref[...] += jnp.dot(ge, w, preferred_element_type=jnp.float32)
    acc_gt_ref[...] += jnp.dot(gt, w, preferred_element_type=jnp.float32)

    @pl.when(j == nj - 1)
    def _():
        gts = gts_ref[b].astype(jnp.float32)   # total positives of this image
        acc_ge = acc_ge_ref[...]               # (TI, 8)
        acc_gt = acc_gt_ref[...]
        b_cnt = acc_ge[:, 0:1]                 # rank at end of tied block (>=1)
        h = acc_ge[:, 1:2]                     # positives up to end of block
        a_cnt = acc_gt[:, 0:1]                 # rank just before tied block
        g = acc_gt[:, 1:2]                     # positives just before block

        jac_hi = 1.0 - (gts - h) / (gts + b_cnt - h)            # denom >= 1
        denom_lo = jnp.where(a_cnt > 0.5, gts + a_cnt - g, 1.0)  # guard a == 0
        jac_lo = jnp.where(a_cnt > 0.5, 1.0 - (gts - g) / denom_lo, 0.0)

        contrib = jnp.maximum(e_i, 0.0) * (jac_hi - jac_lo) / (b_cnt - a_cnt)
        part = jnp.sum(contrib)                # partial loss of this i-tile
        out_ref[...] = jnp.full(out_ref.shape, part, dtype=jnp.float32)


def _round_up(x, m):
    return ((x + m - 1) // m) * m


def _plan(n):
    """Pick (padded N, i-tile, j-tile): multiples of 128, both divide padded N."""
    q = 512 if n >= 512 else max(128, _round_up(n, 128))
    n_pad = _round_up(n, q)
    ti = q
    tj = q
    for cand in (2048, 1024):           # larger j-tiles when they divide n_pad
        if cand <= n_pad and n_pad % cand == 0:
            tj = cand
            break
    return n_pad, ti, tj


def _vmem_limit_bytes():
    """Generation-aware scoped-VMEM limit (v7x has 64 MiB physical per TC)."""
    try:
        cap = int(pltpu.get_tpu_info().vmem_capacity_bytes)
    except Exception:
        cap = 64 * 1024 * 1024
    return max(32 * 1024 * 1024, min(cap // 2, 64 * 1024 * 1024))


def lovasz_hinge_loss(logits_nchw, target_nchw):
    """Forward of LovaszHingeLoss: input/target (B, 1, H, W) -> scalar f32."""
    B, C, H, W = logits_nchw.shape
    assert C == 1, "module squeezes channel dim; expects C == 1"
    N = H * W
    assert N < (1 << 24), "f32 count accumulation exact only below 2^24 pixels"

    x = logits_nchw.astype(jnp.float32).reshape(B, N)
    y = target_nchw.astype(jnp.float32).reshape(B, N)
    # hinge errors: e = 1 - logit * (2*label - 1)    (O(N) preprocessing)
    e = 1.0 - x * (2.0 * y - 1.0)
    gts = jnp.sum(y, axis=1).astype(jnp.int32)        # exact: labels in {0,1}

    n_pad, ti, tj = _plan(N)
    if n_pad != N:
        pad = n_pad - N
        # Sentinel pixels: very negative hinge error, label 0 -> contribute 0.
        e = jnp.pad(e, ((0, 0), (0, pad)), constant_values=-1e30)
        y = jnp.pad(y, ((0, 0), (0, pad)), constant_values=0.0)

    e_row = e.reshape(B, 1, n_pad)     # j-tiles read as rows
    e_col = e.reshape(B, n_pad, 1)     # i-tiles read as columns
    y_col = y.reshape(B, n_pad, 1)     # j-tiles read as columns (weight col 1)

    ni = n_pad // ti
    nj = n_pad // tj

    out = pl.pallas_call(
        _lovasz_hinge_kernel,
        out_shape=jax.ShapeDtypeStruct((B, ni, 8, 128), jnp.float32),
        grid_spec=pltpu.PrefetchScalarGridSpec(
            num_scalar_prefetch=1,
            grid=(B, ni, nj),
            in_specs=[
                pl.BlockSpec((1, 1, tj), lambda b, i, j, g: (b, 0, j)),  # e row (j)
                pl.BlockSpec((1, ti, 1), lambda b, i, j, g: (b, i, 0)),  # e col (i)
                pl.BlockSpec((1, tj, 1), lambda b, i, j, g: (b, j, 0)),  # y col (j)
            ],
            out_specs=pl.BlockSpec((1, 1, 8, 128),
                                   lambda b, i, j, g: (b, i, 0, 0)),
            scratch_shapes=[pltpu.VMEM((ti, 8), jnp.float32),
                            pltpu.VMEM((ti, 8), jnp.float32)],
        ),
        compiler_params=pltpu.CompilerParams(
            dimension_semantics=("parallel", "parallel", "arbitrary"),
            vmem_limit_bytes=_vmem_limit_bytes(),
        ),
    )(gts, e_row, e_col, y_col)

    per_image = jnp.sum(out[:, :, 0, 0], axis=1)   # sum i-tile partials
    return jnp.mean(per_image)


def _lovasz_hinge_ref(logits, labels):
    """Pure-JAX reference (sort-based), logits/labels: (B, N)."""

    def per_image(lg, lb):
        signs = 2.0 * lb - 1.0
        errors = 1.0 - lg * signs
        order = jnp.argsort(-errors)
        errors_sorted = errors[order]
        gt_sorted = lb[order]
        gts = gt_sorted.sum()
        inter = gts - jnp.cumsum(gt_sorted)
        union = gts + jnp.cumsum(1.0 - gt_sorted)
        jac = 1.0 - inter / union
        grad = jnp.concatenate([jac[:1], jac[1:] - jac[:-1]])
        return jnp.dot(jnp.maximum(errors_sorted, 0.0), grad)

    return jnp.mean(jax.vmap(per_image)(logits, labels))


if __name__ == "__main__":
    key = jax.random.PRNGKey(0)
    k1, k2, k3, k4 = jax.random.split(key, 4)

    # Primary small case consistent with the module: (B, 1, H, W).
    B, C, H, W = 2, 1, 16, 16
    logits = jax.random.normal(k1, (B, C, H, W), dtype=jnp.float32)
    target = (jax.random.uniform(k2, (B, C, H, W)) > 0.5).astype(jnp.float32)

    loss = jax.block_until_ready(lovasz_hinge_loss(logits, target))
    ref = _lovasz_hinge_ref(logits.reshape(B, -1), target.reshape(B, -1))
    assert jnp.allclose(loss, ref, rtol=1e-4, atol=1e-5), (loss, ref)

    # Exercise the padded, multi-tile accumulation path
    # (N = 48*48 = 2304 -> padded to 2560, 5 i-tiles x 5 j-tiles).
    H2, W2 = 48, 48
    logits2 = jax.random.normal(k3, (B, C, H2, W2), dtype=jnp.float32)
    target2 = (jax.random.uniform(k4, (B, C, H2, W2)) > 0.5).astype(jnp.float32)

    loss2 = jax.block_until_ready(lovasz_hinge_loss(logits2, target2))
    ref2 = _lovasz_hinge_ref(logits2.reshape(B, -1), target2.reshape(B, -1))
    assert jnp.allclose(loss2, ref2, rtol=1e-4, atol=1e-5), (loss2, ref2)

    print("KERNEL_OK")
</pallas_src>

<mosaic_0001>
module attributes {stable_mosaic.version = 11 : i64} {
  func.func @_lovasz_hinge_kernel(%arg0: i32, %arg1: i32, %arg2: i32, %arg3: memref<2xi32, #tpu.memory_space<smem>>, %arg4: memref<1x1x256xf32, #tpu.memory_space<vmem>>, %arg5: memref<1x256x1xf32, #tpu.memory_space<vmem>>, %arg6: memref<1x256x1xf32, #tpu.memory_space<vmem>>, %arg7: memref<1x1x8x128xf32, #tpu.memory_space<vmem>>, %arg8: memref<256x8xf32, #tpu.memory_space<vmem>>, %arg9: memref<256x8xf32, #tpu.memory_space<vmem>>) attributes {dimension_semantics = [#tpu.dimension_semantics<parallel>, #tpu.dimension_semantics<parallel>, #tpu.dimension_semantics<arbitrary>], iteration_bounds = array<i64: 2, 1, 1>, scalar_prefetch = 1 : i64, scratch_operands = 2 : i64, tpu.core_type = #tpu.core_type<tc>, window_params = [{transform_indices = @transform_0, window_bounds = array<i64: 1, 1, 256>}, {transform_indices = @transform_1, window_bounds = array<i64: 1, 256, 1>}, {transform_indices = @transform_2, window_bounds = array<i64: 1, 256, 1>}, {transform_indices = @transform_3, window_bounds = array<i64: 1, 1, 8, 128>}]} {
    %c0_i32 = arith.constant 0 : i32
    %0 = arith.cmpi eq, %arg2, %c0_i32 : i32
    %1 = arith.extui %0 : i1 to i32
    %c0_i32_0 = arith.constant 0 : i32
    %2 = arith.cmpi ne, %1, %c0_i32_0 : i32
    scf.if %2 {
      %cst_25 = arith.constant 0.000000e+00 : f32
      %42 = vector.broadcast %cst_25 : f32 to vector<256x8xf32>
      %c0_26 = arith.constant 0 : index
      %c0_27 = arith.constant 0 : index
      %43 = vector.load %arg8[%c0_26, %c0_27] : memref<256x8xf32, #tpu.memory_space<vmem>>, vector<256x8xf32>
      tpu.vector_store %arg8[%c0_26, %c0_27], %42 {strides = array<i32>} : memref<256x8xf32, #tpu.memory_space<vmem>>, vector<256x8xf32>,
      %cst_28 = arith.constant 0.000000e+00 : f32
      %44 = vector.broadcast %cst_28 : f32 to vector<256x8xf32>
      %c0_29 = arith.constant 0 : index
      %c0_30 = arith.constant 0 : index
      %45 = vector.load %arg9[%c0_29, %c0_30] : memref<256x8xf32, #tpu.memory_space<vmem>>, vector<256x8xf32>
      tpu.vector_store %arg9[%c0_29, %c0_30], %44 {strides = array<i32>} : memref<256x8xf32, #tpu.memory_space<vmem>>, vector<256x8xf32>,
    } else {
    }
    %c0 = arith.constant 0 : index
    %c0_1 = arith.constant 0 : index
    %c0_2 = arith.constant 0 : index
    %3 = vector.load %arg5[%c0, %c0_1, %c0_2] : memref<1x256x1xf32, #tpu.memory_space<vmem>>, vector<1x256x1xf32>
    %4 = vector.shape_cast %3 : vector<1x256x1xf32> to vector<256x1xf32>
    %c0_3 = arith.constant 0 : index
    %c0_4 = arith.constant 0 : index
    %c0_5 = arith.constant 0 : index
    %5 = vector.load %arg4[%c0_3, %c0_4, %c0_5] : memref<1x1x256xf32, #tpu.memory_space<vmem>>, vector<1x1x256xf32>
    %6 = vector.shape_cast %5 : vector<1x1x256xf32> to vector<1x256xf32>
    %c0_6 = arith.constant 0 : index
    %c0_7 = arith.constant 0 : index
    %c0_8 = arith.constant 0 : index
    %7 = vector.load %arg6[%c0_6, %c0_7, %c0_8] : memref<1x256x1xf32, #tpu.memory_space<vmem>>, vector<1x256x1xf32>
    %8 = vector.shape_cast %7 : vector<1x256x1xf32> to vector<256x1xf32>
    %9 = vector.broadcast %6 : vector<1x256xf32> to vector<256x256xf32>
    %10 = vector.broadcast %4 : vector<256x1xf32> to vector<256x256xf32>
    %11 = arith.cmpf oge, %9, %10 : vector<256x256xf32>
    %cst = arith.constant 1.000000e+00 : f32
    %cst_9 = arith.constant 0.000000e+00 : f32
    %12 = vector.broadcast %cst : f32 to vector<256x256xf32>
    %13 = vector.broadcast %cst_9 : f32 to vector<256x256xf32>
    %14 = arith.select %11, %12, %13 : vector<256x256xi1>, vector<256x256xf32>
    %15 = arith.truncf %14 : vector<256x256xf32> to vector<256x256xbf16>
    %16 = vector.broadcast %6 : vector<1x256xf32> to vector<256x256xf32>
    %17 = vector.broadcast %4 : vector<256x1xf32> to vector<256x256xf32>
    %18 = arith.cmpf ogt, %16, %17 : vector<256x256xf32>
    %cst_10 = arith.constant 1.000000e+00 : f32
    %cst_11 = arith.constant 0.000000e+00 : f32
    %19 = vector.broadcast %cst_10 : f32 to vector<256x256xf32>
    %20 = vector.broadcast %cst_11 : f32 to vector<256x256xf32>
    %21 = arith.select %18, %19, %20 : vector<256x256xi1>, vector<256x256xf32>
    %22 = arith.truncf %21 : vector<256x256xf32> to vector<256x256xbf16>
    %23 = tpu.iota {dimensions = array<i32: 1>} : vector<256x8xi32>
    %c1_i32 = arith.constant 1 : i32
    %24 = vector.broadcast %c1_i32 : i32 to vector<256x8xi32>
    %25 = arith.cmpi slt, %23, %24 : vector<256x8xi32>
    %26 = vector.shape_cast %8 : vector<256x1xf32> to vector<256x1xf32>
    %27 = vector.broadcast %26 : vector<256x1xf32> to vector<256x8xf32>
    %cst_12 = arith.constant 1.000000e+00 : f32
    %28 = vector.broadcast %cst_12 : f32 to vector<256x8xf32>
    %29 = arith.select %25, %28, %27 : vector<256x8xi1>, vector<256x8xf32>
    %30 = arith.truncf %29 : vector<256x8xf32> to vector<256x8xbf16>
    %c0_13 = arith.constant 0 : index
    %c0_14 = arith.constant 0 : index
    %31 = vector.load %arg8[%c0_13, %c0_14] : memref<256x8xf32, #tpu.memory_space<vmem>>, vector<256x8xf32>
    %cst_15 = arith.constant dense<0.000000e+00> : vector<256x8xf32>
    %32 = tpu.matmul %15, %30, %cst_15 {dimension_numbers = #tpu.dot_dimension_numbers<[1], [0], [0], [1], [0, 0, 1, 1], [], []>} : vector<256x256xbf16>, vector<256x8xbf16>, vector<256x8xf32> -> vector<256x8xf32>
    %33 = arith.addf %31, %32 : vector<256x8xf32>
    %c0_16 = arith.constant 0 : index
    %c0_17 = arith.constant 0 : index
    %34 = vector.load %arg8[%c0_16, %c0_17] : memref<256x8xf32, #tpu.memory_space<vmem>>, vector<256x8xf32>
    tpu.vector_store %arg8[%c0_16, %c0_17], %33 {strides = array<i32>} : memref<256x8xf32, #tpu.memory_space<vmem>>, vector<256x8xf32>,
    %c0_18 = arith.constant 0 : index
    %c0_19 = arith.constant 0 : index
    %35 = vector.load %arg9[%c0_18, %c0_19] : memref<256x8xf32, #tpu.memory_space<vmem>>, vector<256x8xf32>
    %cst_20 = arith.constant dense<0.000000e+00> : vector<256x8xf32>
    %36 = tpu.matmul %22, %30, %cst_20 {dimension_numbers = #tpu.dot_dimension_numbers<[1], [0], [0], [1], [0, 0, 1, 1], [], []>} : vector<256x256xbf16>, vector<256x8xbf16>, vector<256x8xf32> -> vector<256x8xf32>
    %37 = arith.addf %35, %36 : vector<256x8xf32>
    %c0_21 = arith.constant 0 : index
    %c0_22 = arith.constant 0 : index
    %38 = vector.load %arg9[%c0_21, %c0_22] : memref<256x8xf32, #tpu.memory_space<vmem>>, vector<256x8xf32>
    tpu.vector_store %arg9[%c0_21, %c0_22], %37 {strides = array<i32>} : memref<256x8xf32, #tpu.memory_space<vmem>>, vector<256x8xf32>,
    %c0_i32_23 = arith.constant 0 : i32
    %39 = arith.cmpi eq, %arg2, %c0_i32_23 : i32
    %40 = arith.extui %39 : i1 to i32
    %c0_i32_24 = arith.constant 0 : i32
    %41 = arith.cmpi ne, %40, %c0_i32_24 : i32
    scf.if %41 {
      %42 = arith.index_cast %arg0 : i32 to index
      %43 = memref.load %arg3[%42] : memref<2xi32, #tpu.memory_space<smem>>
      %44 = arith.sitofp %43 : i32 to f32
      %c0_25 = arith.constant 0 : index
      %c0_26 = arith.constant 0 : index
      %45 = vector.load %arg8[%c0_25, %c0_26] : memref<256x8xf32, #tpu.memory_space<vmem>>, vector<256x8xf32>
      %c0_27 = arith.constant 0 : index
      %c0_28 = arith.constant 0 : index
      %46 = vector.load %arg9[%c0_27, %c0_28] : memref<256x8xf32, #tpu.memory_space<vmem>>, vector<256x8xf32>
      %47 = vector.extract_strided_slice %45 {offsets = [0, 0], sizes = [256, 1], strides = [1, 1]} : vector<256x8xf32> to vector<256x1xf32>
      %48 = vector.extract_strided_slice %45 {offsets = [0, 1], sizes = [256, 1], strides = [1, 1]} : vector<256x8xf32> to vector<256x1xf32>
      %49 = vector.extract_strided_slice %46 {offsets = [0, 0], sizes = [256, 1], strides = [1, 1]} : vector<256x8xf32> to vector<256x1xf32>
      %50 = vector.extract_strided_slice %46 {offsets = [0, 1], sizes = [256, 1], strides = [1, 1]} : vector<256x8xf32> to vector<256x1xf32>
      %51 = vector.broadcast %44 : f32 to vector<256x1xf32>
      %52 = arith.subf %51, %48 : vector<256x1xf32>
      %53 = vector.broadcast %44 : f32 to vector<256x1xf32>
      %54 = arith.addf %53, %47 : vector<256x1xf32>
      %55 = arith.subf %54, %48 : vector<256x1xf32>
      %56 = arith.divf %52, %55 : vector<256x1xf32>
      %cst_29 = arith.constant 1.000000e+00 : f32
      %57 = vector.broadcast %cst_29 : f32 to vector<256x1xf32>
      %58 = arith.subf %57, %56 : vector<256x1xf32>
      %cst_30 = arith.constant 5.000000e-01 : f32
      %59 = vector.broadcast %cst_30 : f32 to vector<256x1xf32>
      %60 = arith.cmpf ogt, %49, %59 : vector<256x1xf32>
      %61 = vector.broadcast %44 : f32 to vector<256x1xf32>
      %62 = arith.addf %61, %49 : vector<256x1xf32>
      %63 = arith.subf %62, %50 : vector<256x1xf32>
      %cst_31 = arith.constant 1.000000e+00 : f32
      %64 = vector.broadcast %cst_31 : f32 to vector<256x1xf32>
      %65 = arith.select %60, %63, %64 : vector<256x1xi1>, vector<256x1xf32>
      %cst_32 = arith.constant 5.000000e-01 : f32
      %66 = vector.broadcast %cst_32 : f32 to vector<256x1xf32>
      %67 = arith.cmpf ogt, %49, %66 : vector<256x1xf32>
      %68 = vector.broadcast %44 : f32 to vector<256x1xf32>
      %69 = arith.subf %68, %50 : vector<256x1xf32>
      %70 = arith.divf %69, %65 : vector<256x1xf32>
      %cst_33 = arith.constant 1.000000e+00 : f32
      %71 = vector.broadcast %cst_33 : f32 to vector<256x1xf32>
      %72 = arith.subf %71, %70 : vector<256x1xf32>
      %cst_34 = arith.constant 0.000000e+00 : f32
      %73 = vector.broadcast %cst_34 : f32 to vector<256x1xf32>
      %74 = arith.select %67, %72, %73 : vector<256x1xi1>, vector<256x1xf32>
      %cst_35 = arith.constant 0.000000e+00 : f32
      %75 = vector.broadcast %cst_35 : f32 to vector<256x1xf32>
      %76 = arith.maximumf %4, %75 : vector<256x1xf32>
      %77 = arith.subf %58, %74 : vector<256x1xf32>
      %78 = arith.mulf %76, %77 : vector<256x1xf32>
      %79 = arith.subf %47, %49 : vector<256x1xf32>
      %80 = arith.divf %78, %79 : vector<256x1xf32>
      %81 = vector.shape_cast %80 : vector<256x1xf32> to vector<1x256x1xf32>
      %cst_36 = arith.constant dense<0.000000e+00> : vector<1xf32>
      %82 = vector.multi_reduction <add>, %81, %cst_36 [1, 2] : vector<1x256x1xf32> to vector<1xf32>
      %83 = vector.shape_cast %82 : vector<1xf32> to vector<1x1x1xf32>
      %84 = vector.extract %83[0, 0, 0] : f32 from vector<1x1x1xf32>
      %85 = vector.broadcast %84 : f32 to vector<1x1x8x128xf32>
      %c0_37 = arith.constant 0 : index
      %c0_38 = arith.constant 0 : index
      %c0_39 = arith.constant 0 : index
      %c0_40 = arith.constant 0 : index
      %86 = vector.load %arg7[%c0_37, %c0_38, %c0_39, %c0_40] : memref<1x1x8x128xf32, #tpu.memory_space<vmem>>, vector<1x1x8x128xf32>
      tpu.vector_store %arg7[%c0_37, %c0_38, %c0_39, %c0_40], %85 {strides = array<i32>} : memref<1x1x8x128xf32, #tpu.memory_space<vmem>>, vector<1x1x8x128xf32>,
    } else {
    }
    return
  }
  func.func @transform_0(%arg0: i32, %arg1: i32, %arg2: i32, %arg3: memref<2xi32, #tpu.memory_space<smem>>) -> (i32, i32, i32) {
    %c0_i32 = arith.constant 0 : i32
    %c0_i32_0 = arith.constant 0 : i32
    return %arg0, %c0_i32, %arg2 : i32, i32, i32
  }
  func.func @transform_1(%arg0: i32, %arg1: i32, %arg2: i32, %arg3: memref<2xi32, #tpu.memory_space<smem>>) -> (i32, i32, i32) {
    %c0_i32 = arith.constant 0 : i32
    %c0_i32_0 = arith.constant 0 : i32
    return %arg0, %arg1, %c0_i32 : i32, i32, i32
  }
  func.func @transform_2(%arg0: i32, %arg1: i32, %arg2: i32, %arg3: memref<2xi32, #tpu.memory_space<smem>>) -> (i32, i32, i32) {
    %c0_i32 = arith.constant 0 : i32
    %c0_i32_0 = arith.constant 0 : i32
    return %arg0, %arg2, %c0_i32 : i32, i32, i32
  }
  func.func @transform_3(%arg0: i32, %arg1: i32, %arg2: i32, %arg3: memref<2xi32, #tpu.memory_space<smem>>) -> (i32, i32, i32, i32) {
    %c0_i32 = arith.constant 0 : i32
    %c0_i32_0 = arith.constant 0 : i32
    %c0_i32_1 = arith.constant 0 : i32
    return %arg0, %arg1, %c0_i32, %c0_i32_0 : i32, i32, i32, i32
  }
}

</mosaic_0001>

<llo_original>
// kernel: tpu_custom_call.1
$region0: #{tpu_custom_call.1}
  #allocation0 [shape = 'u32[]', space=smem, size = 0x4, offset = 0x4, fixed_abs, tag = 'smem constant byte address 0x4 - core index']
  #allocation1 [shape = 'u32[144,128]{1,0:T(1,128)}', space=vmem, size = 0x12000, scoped, tag = 'internal scratch']
  #allocation2 [shape = 'f32[256,8]{1,0:T(8,128)}', space=vmem, size = 0x20000, scoped, tag = 'scratch operand']
  #allocation3 [shape = 'f32[256,8]{1,0:T(8,128)}', space=vmem, size = 0x20000, scoped, tag = 'scratch operand']
  #allocation4 [shape = 's32[1]{0}', space=sflag, size = 0x4, scoped, tag = 'scoped memory for tpu_custom_call.1']
  #allocation5 [shape = 'u8[512]{0}', space=smem, size = 0x200, scoped, tag = 'prefetched SMEM operand 0']
  %s0 = inlined_call_operand.vmem [shape: s32[2], index: 0, kind: input, shape index: {}]
  %s1 = inlined_call_operand.vmem [shape: f32[2,1,256], index: 1, kind: input, shape index: {}]
  %s2 = inlined_call_operand.vmem [shape: f32[2,256,1], index: 2, kind: input, shape index: {}]
  %s3 = inlined_call_operand.vmem [shape: f32[2,256,1], index: 3, kind: input, shape index: {}]
  %s4 = inlined_call_operand.hbm [shape: f32[2,1,8,128], index: 4, kind: output, shape index: {}]
  %s5 = sld [smem:[#allocation0]]
  $region53: #{tpu_custom_call.1} parent=0
    _
  %s7 = ssub.s32 1, %s5
  %s8 = scalar_select 0, %s7, %s5
  %s9 = sshll.u32 %s0, 4
  %s10 = int_to_ptr.vmem [resolvable:$true] %s9
  %12 = dma.vmem_to_smem %s10, 16, [#allocation5], [#allocation4]
  %13 = dma.done [#allocation4], 16
  %14 = sfence
  $region1: #{tpu_custom_call.1} parent=0
    #allocation6 [shape = 'u8[8192]{0}', space=vmem, size = 0x2000, scoped, tag = 'output window, operand 0']
    #allocation7 [shape = 's32[2]{0}', space=sflag, size = 0x8, scoped, tag = 'scoped memory for tpu_custom_call.1']
    %15 = vsyncpa [#allocation7], 0
    %s16 = scalar_lea.sflag [#allocation7], 1
    %17 = vsyncpa %s16, 0
    loop: start=0, step=1, limit=4
    $region2: #{tpu_custom_call.1} parent=1 // loop_pre_header
      _
    $region3: #{tpu_custom_call.1} parent=1 // loop_header
      %s19 = sphi 0, %s23
      %p20 = scmp.ge.s32.totalorder %s19, 4
      %s26 = sphi 0, %s45
      %s27 = sphi 0, %s41
      %s28 = sphi 0, %s37
      %s29 = sphi 0, %s26
      %s30 = sphi 0, %s27
      %s31 = sphi 0, %s28
      %s32 = sphi 0, %s29
      %s33 = sphi 0, %s30
      %s34 = sphi 0, %s31
      %s50 = sphi 0, %s52
      %s53 = sphi 0, %s50
      %s54 = sphi 0, %s53
      %s70 = sphi 0, %s54
      %s78 = sphi 0, %s80
      %s81 = sphi 0, %s78
      %s82 = sphi 0, %s81
      %s98 = sphi 0, %s82
      %s106 = sphi 0, %s108
      %s109 = sphi 0, %s106
      %s110 = sphi 0, %s109
      %s126 = sphi 0, %s110
      %s134 = sphi 0, %s136
      %s137 = sphi 0, %s134
      %s138 = sphi 0, %s137
      %s154 = sphi 0, %s138
    $region4: #{tpu_custom_call.1} parent=1 // loop_header_branch
      %22 = sbr.rel (%p20) target = $region8
    $region5: #{tpu_custom_call.1} parent=1 // loop_body
      %s24 = ssub.s32 %s19, 1
      %s25 = ssub.s32 %s19, 2
      %s35 = sadd.s32 1, %s28
      %p36 = scmp.ge.s32.totalorder %s35, 1
      %s37 = scalar_select %p36, 0, %s35
      %s38 = sadd.s32 1, %s27
      %s39 = scalar_select %p36, %s38, %s27
      %p40 = scmp.ge.s32.totalorder %s39, 1
      %s41 = scalar_select %p40, 0, %s39
      %s42 = sadd.s32 1, %s26
      %s43 = scalar_select %p40, %s42, %s26
      %p44 = scmp.ge.s32.totalorder %s43, 2
      %s45 = scalar_select %p44, 0, %s43
      %s46 = ssub.s32 %s26, %s45
      %s47 = ssub.s32 %s28, %s37
      %s48 = sor.u32 %s46, %s47
      %p49 = scmp.eq.s32.totalorder %s48, 0
      %s51 = sadd.s32 %s50, 1
      %s52 = scalar_select %p49, %s50, %s51
      %p55 = pneg %p49
      %p56 = scmp.eq.s32.totalorder %s19, 1
      %p57 = por %p55, %p56
      %p58 = scmp.ne.s32.totalorder %s50, %s53
      %p59 = scmp.eq.s32.totalorder %s19, 0
      %p60 = por %p58, %p59
      %p61 = scmp.ne.s32.totalorder %s50, %s53
      %p62 = scmp.eq.s32.totalorder %s24, 1
      %p63 = por %p61, %p62
      %p64 = scmp.ne.s32.totalorder %s53, %s54
      %p65 = scmp.eq.s32.totalorder %s24, 0
      %p66 = por %p64, %p65
      %p67 = scmp.ne.s32.totalorder %s53, %s54
      %p68 = scmp.eq.s32.totalorder %s25, 1
      %p69 = por %p67, %p68
      %p71 = scmp.ne.s32.totalorder %s54, %s70
      %p72 = scmp.eq.s32.totalorder %s25, 0
      %p73 = por %p71, %p72
      %s74 = ssub.s32 %s26, %s45
      %s75 = ssub.s32 %s27, %s41
      %s76 = sor.u32 %s74, %s75
      %p77 = scmp.eq.s32.totalorder %s76, 0
      %s79 = sadd.s32 %s78, 1
      %s80 = scalar_select %p77, %s78, %s79
      %p83 = pneg %p77
      %p84 = scmp.eq.s32.totalorder %s19, 1
      %p85 = por %p83, %p84
      %p86 = scmp.ne.s32.totalorder %s78, %s81
      %p87 = scmp.eq.s32.totalorder %s19, 0
      %p88 = por %p86, %p87
      %p89 = scmp.ne.s32.totalorder %s78, %s81
      %p90 = scmp.eq.s32.totalorder %s24, 1
      %p91 = por %p89, %p90
      %p92 = scmp.ne.s32.totalorder %s81, %s82
      %p93 = scmp.eq.s32.totalorder %s24, 0
      %p94 = por %p92, %p93
      %p95 = scmp.ne.s32.totalorder %s81, %s82
      %p96 = scmp.eq.s32.totalorder %s25, 1
      %p97 = por %p95, %p96
      %p99 = scmp.ne.s32.totalorder %s82, %s98
      %p100 = scmp.eq.s32.totalorder %s25, 0
      %p101 = por %p99, %p100
      %s102 = ssub.s32 %s26, %s45
      %s103 = ssub.s32 %s28, %s37
      %s104 = sor.u32 %s102, %s103
      %p105 = scmp.eq.s32.totalorder %s104, 0
      %s107 = sadd.s32 %s106, 1
      %s108 = scalar_select %p105, %s106, %s107
      %p111 = pneg %p105
      %p112 = scmp.eq.s32.totalorder %s19, 1
      %p113 = por %p111, %p112
      %p114 = scmp.ne.s32.totalorder %s106, %s109
      %p115 = scmp.eq.s32.totalorder %s19, 0
      %p116 = por %p114, %p115
      %p117 = scmp.ne.s32.totalorder %s106, %s109
      %p118 = scmp.eq.s32.totalorder %s24, 1
      %p119 = por %p117, %p118
      %p120 = scmp.ne.s32.totalorder %s109, %s110
      %p121 = scmp.eq.s32.totalorder %s24, 0
      %p122 = por %p120, %p121
      %p123 = scmp.ne.s32.totalorder %s109, %s110
      %p124 = scmp.eq.s32.totalorder %s25, 1
      %p125 = por %p123, %p124
      %p127 = scmp.ne.s32.totalorder %s110, %s126
      %p128 = scmp.eq.s32.totalorder %s25, 0
      %p129 = por %p127, %p128
      %s130 = ssub.s32 %s26, %s45
      %s131 = ssub.s32 %s27, %s41
      %s132 = sor.u32 %s130, %s131
      %p133 = scmp.eq.s32.totalorder %s132, 0
      %s135 = sadd.s32 %s134, 1
      %s136 = scalar_select %p133, %s134, %s135
      %p139 = pneg %p133
      %p140 = scmp.eq.s32.totalorder %s19, 1
      %p141 = por %p139, %p140
      %p142 = scmp.ne.s32.totalorder %s134, %s137
      %p143 = scmp.eq.s32.totalorder %s19, 0
      %p144 = por %p142, %p143
      %p145 = scmp.ne.s32.totalorder %s134, %s137
      %p146 = scmp.eq.s32.totalorder %s24, 1
      %p147 = por %p145, %p146
      %p148 = scmp.ne.s32.totalorder %s137, %s138
      %p149 = scmp.eq.s32.totalorder %s24, 0
      %p150 = por %p148, %p149
      %p151 = scmp.ne.s32.totalorder %s137, %s138
      %p152 = scmp.eq.s32.totalorder %s25, 1
      %p153 = por %p151, %p152
      %p155 = scmp.ne.s32.totalorder %s138, %s154
      %p156 = scmp.eq.s32.totalorder %s25, 0
      %p157 = por %p155, %p156
      %p158 = scmp.le.s32.totalorder 1, %s19
      %p159 = scmp.lt.s32.totalorder %s19, 3
      %p160 = pnand %p158, %p159
      %p161 = pneg %p160
      // Predicated region
      $region9: #{tpu_custom_call.1} parent=5 // pred_check
        _
      $region10: #{tpu_custom_call.1} parent=5 // pred_check_branch
        %163 = sbr.rel (%p160) target = $region12
      $region11: #{tpu_custom_call.1} parent=5 // pred_region
        %s164 = ssub.s32 %s19, 1
      $region12: #{tpu_custom_call.1} parent=5 // pred_fallthru
        _
      %p165 = scmp.lt.s32.totalorder %s19, 2
      // Predicated region
      $region13: #{tpu_custom_call.1} parent=5 // pred_check
        %p166 = pneg %p165
      $region14: #{tpu_custom_call.1} parent=5 // pred_check_branch
        %168 = sbr.rel (%p166) target = $region16
      $region15: #{tpu_custom_call.1} parent=5 // pred_region
        // Predicated region
        $region17: #{tpu_custom_call.1} parent=15 // pred_check
          %p169 = pneg %p60
        $region18: #{tpu_custom_call.1} parent=15 // pred_check_branch
          %171 = sbr.rel (%p169) target = $region20
        $region19: #{tpu_custom_call.1} parent=15 // pred_region
          %s172 = smul.u32 2, %s28
          %p173 = scmp.lt.s32.totalorder %s26, 1
          %s174 = scalar_select %p173, %s26, 1
          %p175 = scmp.lt.s32.totalorder %s172, 1
          %s176 = scalar_select %p175, %s172, 1
          %s177 = smul.addr %s174, 2
          %s178 = sadd.s32 %s176, %s177
          %s179 = scalar_lea.vmem %s1, %s178
          %s180 = smul.u32 2, %s28
        $region20: #{tpu_custom_call.1} parent=15 // pred_fallthru
          _
        // Predicated region
        $region21: #{tpu_custom_call.1} parent=15 // pred_check
          %p181 = pneg %p88
        $region22: #{tpu_custom_call.1} parent=15 // pred_check_branch
          %183 = sbr.rel (%p181) target = $region24
        $region23: #{tpu_custom_call.1} parent=15 // pred_region
          %s184 = smul.u32 32, %s27
          %p185 = scmp.lt.s32.totalorder %s26, 1
          %s186 = scalar_select %p185, %s26, 1
          %p187 = scmp.lt.s32.totalorder %s184, 31
          %s188 = scalar_select %p187, %s184, 31
          %s189 = smul.addr %s186, 32
          %s190 = sadd.s32 %s188, %s189
          %s191 = smul.addr %s190, 8
          %s192 = scalar_lea.vmem %s2, %s191
          %s193 = smul.u32 32, %s27
        $region24: #{tpu_custom_call.1} parent=15 // pred_fallthru
          _
        // Predicated region
        $region25: #{tpu_custom_call.1} parent=15 // pred_check
          %p194 = pneg %p116
        $region26: #{tpu_custom_call.1} parent=15 // pred_check_branch
          %196 = sbr.rel (%p194) target = $region28
        $region27: #{tpu_custom_call.1} parent=15 // pred_region
          %s197 = smul.u32 32, %s28
          %p198 = scmp.lt.s32.totalorder %s26, 1
          %s199 = scalar_select %p198, %s26, 1
          %p200 = scmp.lt.s32.totalorder %s197, 31
          %s201 = scalar_select %p200, %s197, 31
          %s202 = smul.addr %s199, 32
          %s203 = sadd.s32 %s201, %s202
          %s204 = smul.addr %s203, 8
          %s205 = scalar_lea.vmem %s3, %s204
          %s206 = smul.u32 32, %s28
        $region28: #{tpu_custom_call.1} parent=15 // pred_fallthru
          _
      $region16: #{tpu_custom_call.1} parent=5 // pred_fallthru
        _
      %p207 = scmp.le.s32.totalorder 1, %s19
      %p208 = scmp.lt.s32.totalorder %s19, 3
      %p209 = pnand %p207, %p208
      %p210 = pneg %p209
      // Predicated region
      $region29: #{tpu_custom_call.1} parent=5 // pred_check
        _
      $region30: #{tpu_custom_call.1} parent=5 // pred_check_branch
        %212 = sbr.rel (%p209) target = $region32
      $region31: #{tpu_custom_call.1} parent=5 // pred_region
        %s213 = ssub.s32 %s19, 1
        %s214 = smul.u32 2, %s31
        %p215 = scmp.lt.s32.totalorder %s29, 1
        %s216 = scalar_select %p215, %s29, 1
        %p217 = scmp.lt.s32.totalorder %s214, 1
        %s218 = scalar_select %p217, %s214, 1
        %s219 = smul.addr %s216, 2
        %s220 = sadd.s32 %s218, %s219
        %s221 = scalar_lea.vmem %s1, %s220
        %p222 = pneg %p66
        %p223 = pneg %p63
        %s224 = smul.u32 32, %s30
        %p225 = scmp.lt.s32.totalorder %s29, 1
        %s226 = scalar_select %p225, %s29, 1
        %p227 = scmp.lt.s32.totalorder %s224, 31
        %s228 = scalar_select %p227, %s224, 31
        %s229 = smul.addr %s226, 32
        %s230 = sadd.s32 %s228, %s229
        %s231 = smul.addr %s230, 8
        %s232 = scalar_lea.vmem %s2, %s231
        %p233 = pneg %p94
        %p234 = pneg %p91
        %s235 = smul.u32 32, %s31
        %p236 = scmp.lt.s32.totalorder %s29, 1
        %s237 = scalar_select %p236, %s29, 1
        %p238 = scmp.lt.s32.totalorder %s235, 31
        %s239 = scalar_select %p238, %s235, 31
        %s240 = smul.addr %s237, 32
        %s241 = sadd.s32 %s239, %s240
        %s242 = smul.addr %s241, 8
        %s243 = scalar_lea.vmem %s3, %s242
        %p244 = pneg %p122
        %p245 = pneg %p119
        %p246 = pneg %p150
        %p247 = pneg %p147
        %s248 = sand.u32 %s137, 1
        %s249 = scalar_lea.sflag [#allocation7], %s248
        %s250 = sand.u32 %s137, 1
        %s251 = smul.addr %s250, 8
        %s252 = scalar_lea.vmem [#allocation6], %s251
        %s253 = smul.u32 2, %s31
        %p254 = scmp.lt.s32.totalorder %s29, 1
        %s255 = scalar_select %p254, %s29, 1
        %p256 = scmp.lt.s32.totalorder %s253, 1
        %s257 = scalar_select %p256, %s253, 1
        %s258 = smul.addr %s255, 2
        %s259 = sadd.s32 %s257, %s258
        %s260 = scalar_lea.vmem %s1, %s259
        %s261 = smul.u32 2, %s31
        %s262 = smul.u32 32, %s30
        %p263 = scmp.lt.s32.totalorder %s29, 1
        %s264 = scalar_select %p263, %s29, 1
        %p265 = scmp.lt.s32.totalorder %s262, 31
        %s266 = scalar_select %p265, %s262, 31
        %s267 = smul.addr %s264, 32
        %s268 = sadd.s32 %s266, %s267
        %s269 = smul.addr %s268, 8
        %s270 = scalar_lea.vmem %s2, %s269
        %s271 = smul.u32 32, %s30
        %s272 = smul.u32 32, %s31
        %p273 = scmp.lt.s32.totalorder %s29, 1
        %s274 = scalar_select %p273, %s29, 1
        %p275 = scmp.lt.s32.totalorder %s272, 31
        %s276 = scalar_select %p275, %s272, 31
        %s277 = smul.addr %s274, 32
        %s278 = sadd.s32 %s276, %s277
        %s279 = smul.addr %s278, 8
        %s280 = scalar_lea.vmem %s3, %s279
        %s281 = smul.u32 32, %s31
        %p283 = scmp.eq.s32.totalorder %s31, 0
        // Predicated region
        $region33: #{tpu_custom_call.1} parent=31 // pred_check
          %p284 = pneg %p283
        $region34: #{tpu_custom_call.1} parent=31 // pred_check_branch
          %286 = sbr.rel (%p284) target = $region36
        $region35: #{tpu_custom_call.1} parent=31 // pred_region
          %vm287 = vcmask 64512
          %288 = vst.msk [vmem:[#allocation2] sm:$0xff] %vm287, 0.0
          %289 = vst.msk [vmem:[#allocation2 + $0x8] sm:$0xff] %vm287, 0.0
          %290 = vst.msk [vmem:[#allocation2 + $0x10] sm:$0xff] %vm287, 0.0
          %291 = vst.msk [vmem:[#allocation2 + $0x18] sm:$0xff] %vm287, 0.0
          %292 = vst.msk [vmem:[#allocation2 + $0x20] sm:$0xff] %vm287, 0.0
          %293 = vst.msk [vmem:[#allocation2 + $0x28] sm:$0xff] %vm287, 0.0
          %294 = vst.msk [vmem:[#allocation2 + $0x30] sm:$0xff] %vm287, 0.0
          %295 = vst.msk [vmem:[#allocation2 + $0x38] sm:$0xff] %vm287, 0.0
          %296 = vst.msk [vmem:[#allocation2 + $0x40] sm:$0xff] %vm287, 0.0
          %297 = vst.msk [vmem:[#allocation2 + $0x48] sm:$0xff] %vm287, 0.0
          %298 = vst.msk [vmem:[#allocation2 + $0x50] sm:$0xff] %vm287, 0.0
          %299 = vst.msk [vmem:[#allocation2 + $0x58] sm:$0xff] %vm287, 0.0
          %300 = vst.msk [vmem:[#allocation2 + $0x60] sm:$0xff] %vm287, 0.0
          %301 = vst.msk [vmem:[#allocation2 + $0x68] sm:$0xff] %vm287, 0.0
          %302 = vst.msk [vmem:[#allocation2 + $0x70] sm:$0xff] %vm287, 0.0
          %303 = vst.msk [vmem:[#allocation2 + $0x78] sm:$0xff] %vm287, 0.0
          %304 = vst.msk [vmem:[#allocation2 + $0x80] sm:$0xff] %vm287, 0.0
          %305 = vst.msk [vmem:[#allocation2 + $0x88] sm:$0xff] %vm287, 0.0
          %306 = vst.msk [vmem:[#allocation2 + $0x90] sm:$0xff] %vm287, 0.0
          %307 = vst.msk [vmem:[#allocation2 + $0x98] sm:$0xff] %vm287, 0.0
          %308 = vst.msk [vmem:[#allocation2 + $0xa0] sm:$0xff] %vm287, 0.0
          %309 = vst.msk [vmem:[#allocation2 + $0xa8] sm:$0xff] %vm287, 0.0
          %310 = vst.msk [vmem:[#allocation2 + $0xb0] sm:$0xff] %vm287, 0.0
          %311 = vst.msk [vmem:[#allocation2 + $0xb8] sm:$0xff] %vm287, 0.0
          %312 = vst.msk [vmem:[#allocation2 + $0xc0] sm:$0xff] %vm287, 0.0
          %313 = vst.msk [vmem:[#allocation2 + $0xc8] sm:$0xff] %vm287, 0.0
          %314 = vst.msk [vmem:[#allocation2 + $0xd0] sm:$0xff] %vm287, 0.0
          %315 = vst.msk [vmem:[#allocation2 + $0xd8] sm:$0xff] %vm287, 0.0
          %316 = vst.msk [vmem:[#allocation2 + $0xe0] sm:$0xff] %vm287, 0.0
          %317 = vst.msk [vmem:[#allocation2 + $0xe8] sm:$0xff] %vm287, 0.0
          %318 = vst.msk [vmem:[#allocation2 + $0xf0] sm:$0xff] %vm287, 0.0
          %319 = vst.msk [vmem:[#allocation2 + $0xf8] sm:$0xff] %vm287, 0.0
          %320 = vst.msk [vmem:[#allocation3] sm:$0xff] %vm287, 0.0
          %321 = vst.msk [vmem:[#allocation3 + $0x8] sm:$0xff] %vm287, 0.0
          %322 = vst.msk [vmem:[#allocation3 + $0x10] sm:$0xff] %vm287, 0.0
          %323 = vst.msk [vmem:[#allocation3 + $0x18] sm:$0xff] %vm287, 0.0
          %324 = vst.msk [vmem:[#allocation3 + $0x20] sm:$0xff] %vm287, 0.0
          %325 = vst.msk [vmem:[#allocation3 + $0x28] sm:$0xff] %vm287, 0.0
          %326 = vst.msk [vmem:[#allocation3 + $0x30] sm:$0xff] %vm287, 0.0
          %327 = vst.msk [vmem:[#allocation3 + $0x38] sm:$0xff] %vm287, 0.0
          %328 = vst.msk [vmem:[#allocation3 + $0x40] sm:$0xff] %vm287, 0.0
          %329 = vst.msk [vmem:[#allocation3 + $0x48] sm:$0xff] %vm287, 0.0
          %330 = vst.msk [vmem:[#allocation3 + $0x50] sm:$0xff] %vm287, 0.0
          %331 = vst.msk [vmem:[#allocation3 + $0x58] sm:$0xff] %vm287, 0.0
          %332 = vst.msk [vmem:[#allocation3 + $0x60] sm:$0xff] %vm287, 0.0
          %333 = vst.msk [vmem:[#allocation3 + $0x68] sm:$0xff] %vm287, 0.0
          %334 = vst.msk [vmem:[#allocation3 + $0x70] sm:$0xff] %vm287, 0.0
          %335 = vst.msk [vmem:[#allocation3 + $0x78] sm:$0xff] %vm287, 0.0
          %336 = vst.msk [vmem:[#allocation3 + $0x80] sm:$0xff] %vm287, 0.0
          %337 = vst.msk [vmem:[#allocation3 + $0x88] sm:$0xff] %vm287, 0.0
          %338 = vst.msk [vmem:[#allocation3 + $0x90] sm:$0xff] %vm287, 0.0
          %339 = vst.msk [vmem:[#allocation3 + $0x98] sm:$0xff] %vm287, 0.0
          %340 = vst.msk [vmem:[#allocation3 + $0xa0] sm:$0xff] %vm287, 0.0
          %341 = vst.msk [vmem:[#allocation3 + $0xa8] sm:$0xff] %vm287, 0.0
          %342 = vst.msk [vmem:[#allocation3 + $0xb0] sm:$0xff] %vm287, 0.0
          %343 = vst.msk [vmem:[#allocation3 + $0xb8] sm:$0xff] %vm287, 0.0
          %344 = vst.msk [vmem:[#allocation3 + $0xc0] sm:$0xff] %vm287, 0.0
          %345 = vst.msk [vmem:[#allocation3 + $0xc8] sm:$0xff] %vm287, 0.0
          %346 = vst.msk [vmem:[#allocation3 + $0xd0] sm:$0xff] %vm287, 0.0
          %347 = vst.msk [vmem:[#allocation3 + $0xd8] sm:$0xff] %vm287, 0.0
          %348 = vst.msk [vmem:[#allocation3 + $0xe0] sm:$0xff] %vm287, 0.0
          %349 = vst.msk [vmem:[#allocation3 + $0xe8] sm:$0xff] %vm287, 0.0
          %350 = vst.msk [vmem:[#allocation3 + $0xf0] sm:$0xff] %vm287, 0.0
          %351 = vst.msk [vmem:[#allocation3 + $0xf8] sm:$0xff] %vm287, 0.0
        $region36: #{tpu_custom_call.1} parent=31 // pred_fallthru
          _
        %v352 = vld [vmem:[%s270] sm:$0xff]
        %v353 = vld [vmem:[%s270 + $0x8] sm:$0xff]
        %v354 = vld [vmem:[%s270 + $0x10] sm:$0xff]
        %v355 = vld [vmem:[%s270 + $0x18] sm:$0xff]
        %v356 = vld [vmem:[%s270 + $0x20] sm:$0xff]
        %v357 = vld [vmem:[%s270 + $0x28] sm:$0xff]
        %v358 = vld [vmem:[%s270 + $0x30] sm:$0xff]
        %v359 = vld [vmem:[%s270 + $0x38] sm:$0xff]
        %v360 = vld [vmem:[%s270 + $0x40] sm:$0xff]
        %v361 = vld [vmem:[%s270 + $0x48] sm:$0xff]
        %v362 = vld [vmem:[%s270 + $0x50] sm:$0xff]
        %v363 = vld [vmem:[%s270 + $0x58] sm:$0xff]
        %v364 = vld [vmem:[%s270 + $0x60] sm:$0xff]
        %v365 = vld [vmem:[%s270 + $0x68] sm:$0xff]
        %v366 = vld [vmem:[%s270 + $0x70] sm:$0xff]
        %v367 = vld [vmem:[%s270 + $0x78] sm:$0xff]
        %v368 = vld [vmem:[%s270 + $0x80] sm:$0xff]
        %v369 = vld [vmem:[%s270 + $0x88] sm:$0xff]
        %v370 = vld [vmem:[%s270 + $0x90] sm:$0xff]
        %v371 = vld [vmem:[%s270 + $0x98] sm:$0xff]
        %v372 = vld [vmem:[%s270 + $0xa0] sm:$0xff]
        %v373 = vld [vmem:[%s270 + $0xa8] sm:$0xff]
        %v374 = vld [vmem:[%s270 + $0xb0] sm:$0xff]
        %v375 = vld [vmem:[%s270 + $0xb8] sm:$0xff]
        %v376 = vld [vmem:[%s270 + $0xc0] sm:$0xff]
        %v377 = vld [vmem:[%s270 + $0xc8] sm:$0xff]
        %v378 = vld [vmem:[%s270 + $0xd0] sm:$0xff]
        %v379 = vld [vmem:[%s270 + $0xd8] sm:$0xff]
        %v380 = vld [vmem:[%s270 + $0xe0] sm:$0xff]
        %v381 = vld [vmem:[%s270 + $0xe8] sm:$0xff]
        %v382 = vld [vmem:[%s270 + $0xf0] sm:$0xff]
        %v383 = vld [vmem:[%s270 + $0xf8] sm:$0xff]
        %v384 = vld [vmem:[%s260] sm:$0x3]
        %v385 = vld [vmem:[%s280] sm:$0xff]
        %v386 = vld [vmem:[%s280 + $0x8] sm:$0xff]
        %v387 = vld [vmem:[%s280 + $0x10] sm:$0xff]
        %v388 = vld [vmem:[%s280 + $0x18] sm:$0xff]
        %v389 = vld [vmem:[%s280 + $0x20] sm:$0xff]
        %v390 = vld [vmem:[%s280 + $0x28] sm:$0xff]
        %v391 = vld [vmem:[%s280 + $0x30] sm:$0xff]
        %v392 = vld [vmem:[%s280 + $0x38] sm:$0xff]
        %v393 = vld [vmem:[%s280 + $0x40] sm:$0xff]
        %v394 = vld [vmem:[%s280 + $0x48] sm:$0xff]
        %v395 = vld [vmem:[%s280 + $0x50] sm:$0xff]
        %v396 = vld [vmem:[%s280 + $0x58] sm:$0xff]
        %v397 = vld [vmem:[%s280 + $0x60] sm:$0xff]
        %v398 = vld [vmem:[%s280 + $0x68] sm:$0xff]
        %v399 = vld [vmem:[%s280 + $0x70] sm:$0xff]
        %v400 = vld [vmem:[%s280 + $0x78] sm:$0xff]
        %v401 = vld [vmem:[%s280 + $0x80] sm:$0xff]
        %v402 = vld [vmem:[%s280 + $0x88] sm:$0xff]
        %v403 = vld [vmem:[%s280 + $0x90] sm:$0xff]
        %v404 = vld [vmem:[%s280 + $0x98] sm:$0xff]
        %v405 = vld [vmem:[%s280 + $0xa0] sm:$0xff]
        %v406 = vld [vmem:[%s280 + $0xa8] sm:$0xff]
        %v407 = vld [vmem:[%s280 + $0xb0] sm:$0xff]
        %v408 = vld [vmem:[%s280 + $0xb8] sm:$0xff]
        %v409 = vld [vmem:[%s280 + $0xc0] sm:$0xff]
        %v410 = vld [vmem:[%s280 + $0xc8] sm:$0xff]
        %v411 = vld [vmem:[%s280 + $0xd0] sm:$0xff]
        %v412 = vld [vmem:[%s280 + $0xd8] sm:$0xff]
        %v413 = vld [vmem:[%s280 + $0xe0] sm:$0xff]
        %v414 = vld [vmem:[%s280 + $0xe8] sm:$0xff]
        %v415 = vld [vmem:[%s280 + $0xf0] sm:$0xff]
        %v416 = vld [vmem:[%s280 + $0xf8] sm:$0xff]
        %v418 = vlaneseq
        %v419 = vshrl.u32 %v418, 7
        %v420 = vsub.s32 0, %v419
        %v421 = vrot.slane %v384, %v420
        %v422 = vlaneseq
        %v423 = vshrl.u32 %v422, 7
        %v424 = vsub.s32 1, %v423
        %v425 = vrot.slane %v384, %v424
        %429 = vset.pattern.permute.xlu0 0
        %430 = vperm.xlu0 %429, %v352
        %v431 = vpop.permute.xlu0 %430
        %434 = vset.pattern.permute.xlu0 0
        %435 = vperm.xlu0 %434, %v353
        %v436 = vpop.permute.xlu0 %435
        %439 = vset.pattern.permute.xlu0 0
        %440 = vperm.xlu0 %439, %v354
        %v441 = vpop.permute.xlu0 %440
        %444 = vset.pattern.permute.xlu0 0
        %445 = vperm.xlu0 %444, %v355
        %v446 = vpop.permute.xlu0 %445
        %449 = vset.pattern.permute.xlu0 0
        %450 = vperm.xlu0 %449, %v356
        %v451 = vpop.permute.xlu0 %450
        %454 = vset.pattern.permute.xlu0 0
        %455 = vperm.xlu0 %454, %v357
        %v456 = vpop.permute.xlu0 %455
        %459 = vset.pattern.permute.xlu0 0
        %460 = vperm.xlu0 %459, %v358
        %v461 = vpop.permute.xlu0 %460
        %464 = vset.pattern.permute.xlu0 0
        %465 = vperm.xlu0 %464, %v359
        %v466 = vpop.permute.xlu0 %465
        %469 = vset.pattern.permute.xlu0 0
        %470 = vperm.xlu0 %469, %v360
        %v471 = vpop.permute.xlu0 %470
        %474 = vset.pattern.permute.xlu0 0
        %475 = vperm.xlu0 %474, %v361
        %v476 = vpop.permute.xlu0 %475
        %479 = vset.pattern.permute.xlu0 0
        %480 = vperm.xlu0 %479, %v362
        %v481 = vpop.permute.xlu0 %480
        %484 = vset.pattern.permute.xlu0 0
        %485 = vperm.xlu0 %484, %v363
        %v486 = vpop.permute.xlu0 %485
        %489 = vset.pattern.permute.xlu0 0
        %490 = vperm.xlu0 %489, %v364
        %v491 = vpop.permute.xlu0 %490
        %494 = vset.pattern.permute.xlu0 0
        %495 = vperm.xlu0 %494, %v365
        %v496 = vpop.permute.xlu0 %495
        %499 = vset.pattern.permute.xlu0 0
        %500 = vperm.xlu0 %499, %v366
        %v501 = vpop.permute.xlu0 %500
        %504 = vset.pattern.permute.xlu0 0
        %505 = vperm.xlu0 %504, %v367
        %v506 = vpop.permute.xlu0 %505
        %509 = vset.pattern.permute.xlu0 0
        %510 = vperm.xlu0 %509, %v368
        %v511 = vpop.permute.xlu0 %510
        %514 = vset.pattern.permute.xlu0 0
        %515 = vperm.xlu0 %514, %v369
        %v516 = vpop.permute.xlu0 %515
        %519 = vset.pattern.permute.xlu0 0
        %520 = vperm.xlu0 %519, %v370
        %v521 = vpop.permute.xlu0 %520
        %524 = vset.pattern.permute.xlu0 0
        %525 = vperm.xlu0 %524, %v371
        %v526 = vpop.permute.xlu0 %525
        %529 = vset.pattern.permute.xlu0 0
        %530 = vperm.xlu0 %529, %v372
        %v531 = vpop.permute.xlu0 %530
        %534 = vset.pattern.permute.xlu0 0
        %535 = vperm.xlu0 %534, %v373
        %v536 = vpop.permute.xlu0 %535
        %539 = vset.pattern.permute.xlu0 0
        %540 = vperm.xlu0 %539, %v374
        %v541 = vpop.permute.xlu0 %540
        %544 = vset.pattern.permute.xlu0 0
        %545 = vperm.xlu0 %544, %v375
        %v546 = vpop.permute.xlu0 %545
        %549 = vset.pattern.permute.xlu0 0
        %550 = vperm.xlu0 %549, %v376
        %v551 = vpop.permute.xlu0 %550
        %554 = vset.pattern.permute.xlu0 0
        %555 = vperm.xlu0 %554, %v377
        %v556 = vpop.permute.xlu0 %555
        %559 = vset.pattern.permute.xlu0 0
        %560 = vperm.xlu0 %559, %v378
        %v561 = vpop.permute.xlu0 %560
        %564 = vset.pattern.permute.xlu0 0
        %565 = vperm.xlu0 %564, %v379
        %v566 = vpop.permute.xlu0 %565
        %569 = vset.pattern.permute.xlu0 0
        %570 = vperm.xlu0 %569, %v380
        %v571 = vpop.permute.xlu0 %570
        %574 = vset.pattern.permute.xlu0 0
        %575 = vperm.xlu0 %574, %v381
        %v576 = vpop.permute.xlu0 %575
        %579 = vset.pattern.permute.xlu0 0
        %580 = vperm.xlu0 %579, %v382
        %v581 = vpop.permute.xlu0 %580
        %584 = vset.pattern.permute.xlu0 0
        %585 = vperm.xlu0 %584, %v383
        %v586 = vpop.permute.xlu0 %585
        %vm588 = vcmp.ge.f32.partialorder %v421, %v431
        %vm589 = vcmp.ge.f32.partialorder %v425, %v431
        %vm590 = vcmp.ge.f32.partialorder %v421, %v436
        %vm591 = vcmp.ge.f32.partialorder %v425, %v436
        %vm592 = vcmp.ge.f32.partialorder %v421, %v441
        %vm593 = vcmp.ge.f32.partialorder %v425, %v441
        %vm594 = vcmp.ge.f32.partialorder %v421, %v446
        %vm595 = vcmp.ge.f32.partialorder %v425, %v446
        %vm596 = vcmp.ge.f32.partialorder %v421, %v451
        %vm597 = vcmp.ge.f32.partialorder %v425, %v451
        %vm598 = vcmp.ge.f32.partialorder %v421, %v456
        %vm599 = vcmp.ge.f32.partialorder %v425, %v456
        %vm600 = vcmp.ge.f32.partialorder %v421, %v461
        %vm601 = vcmp.ge.f32.partialorder %v425, %v461
        %vm602 = vcmp.ge.f32.partialorder %v421, %v466
        %vm603 = vcmp.ge.f32.partialorder %v425, %v466
        %vm604 = vcmp.ge.f32.partialorder %v421, %v471
        %vm605 = vcmp.ge.f32.partialorder %v425, %v471
        %vm606 = vcmp.ge.f32.partialorder %v421, %v476
        %vm607 = vcmp.ge.f32.partialorder %v425, %v476
        %vm608 = vcmp.ge.f32.partialorder %v421, %v481
        %vm609 = vcmp.ge.f32.partialorder %v425, %v481
        %vm610 = vcmp.ge.f32.partialorder %v421, %v486
        %vm611 = vcmp.ge.f32.partialorder %v425, %v486
        %vm612 = vcmp.ge.f32.partialorder %v421, %v491
        %vm613 = vcmp.ge.f32.partialorder %v425, %v491
        %vm614 = vcmp.ge.f32.partialorder %v421, %v496
        %vm615 = vcmp.ge.f32.partialorder %v425, %v496
        %vm616 = vcmp.ge.f32.partialorder %v421, %v501
        %vm617 = vcmp.ge.f32.partialorder %v425, %v501
        %vm618 = vcmp.ge.f32.partialorder %v421, %v506
        %vm619 = vcmp.ge.f32.partialorder %v425, %v506
        %vm620 = vcmp.ge.f32.partialorder %v421, %v511
        %vm621 = vcmp.ge.f32.partialorder %v425, %v511
        %vm622 = vcmp.ge.f32.partialorder %v421, %v516
        %vm623 = vcmp.ge.f32.partialorder %v425, %v516
        %vm624 = vcmp.ge.f32.partialorder %v421, %v521
        %vm625 = vcmp.ge.f32.partialorder %v425, %v521
        %vm626 = vcmp.ge.f32.partialorder %v421, %v526
        %vm627 = vcmp.ge.f32.partialorder %v425, %v526
        %vm628 = vcmp.ge.f32.partialorder %v421, %v531
        %vm629 = vcmp.ge.f32.partialorder %v425, %v531
        %vm630 = vcmp.ge.f32.partialorder %v421, %v536
        %vm631 = vcmp.ge.f32.partialorder %v425, %v536
        %vm632 = vcmp.ge.f32.partialorder %v421, %v541
        %vm633 = vcmp.ge.f32.partialorder %v425, %v541
        %vm634 = vcmp.ge.f32.partialorder %v421, %v546
        %vm635 = vcmp.ge.f32.partialorder %v425, %v546
        %vm636 = vcmp.ge.f32.partialorder %v421, %v551
        %vm637 = vcmp.ge.f32.partialorder %v425, %v551
        %vm638 = vcmp.ge.f32.partialorder %v421, %v556
        %vm639 = vcmp.ge.f32.partialorder %v425, %v556
        %vm640 = vcmp.ge.f32.partialorder %v421, %v561
        %vm641 = vcmp.ge.f32.partialorder %v425, %v561
        %vm642 = vcmp.ge.f32.partialorder %v421, %v566
        %vm643 = vcmp.ge.f32.partialorder %v425, %v566
        %vm644 = vcmp.ge.f32.partialorder %v421, %v571
        %vm645 = vcmp.ge.f32.partialorder %v425, %v571
        %vm646 = vcmp.ge.f32.partialorder %v421, %v576
        %vm647 = vcmp.ge.f32.partialorder %v425, %v576
        %vm648 = vcmp.ge.f32.partialorder %v421, %v581
        %vm649 = vcmp.ge.f32.partialorder %v425, %v581
        %vm650 = vcmp.ge.f32.partialorder %v421, %v586
        %vm651 = vcmp.ge.f32.partialorder %v425, %v586
        %v652 = vsel %vm588, 1.0, 0.0
        %v653 = vsel %vm589, 1.0, 0.0
        %v654 = vsel %vm590, 1.0, 0.0
        %v655 = vsel %vm591, 1.0, 0.0
        %v656 = vsel %vm592, 1.0, 0.0
        %v657 = vsel %vm593, 1.0, 0.0
        %v658 = vsel %vm594, 1.0, 0.0
        %v659 = vsel %vm595, 1.0, 0.0
        %v660 = vsel %vm596, 1.0, 0.0
        %v661 = vsel %vm597, 1.0, 0.0
        %v662 = vsel %vm598, 1.0, 0.0
        %v663 = vsel %vm599, 1.0, 0.0
        %v664 = vsel %vm600, 1.0, 0.0
        %v665 = vsel %vm601, 1.0, 0.0
        %v666 = vsel %vm602, 1.0, 0.0
        %v667 = vsel %vm603, 1.0, 0.0
        %v668 = vsel %vm604, 1.0, 0.0
        %v669 = vsel %vm605, 1.0, 0.0
        %v670 = vsel %vm606, 1.0, 0.0
        %v671 = vsel %vm607, 1.0, 0.0
        %v672 = vsel %vm608, 1.0, 0.0
        %v673 = vsel %vm609, 1.0, 0.0
        %v674 = vsel %vm610, 1.0, 0.0
        %v675 = vsel %vm611, 1.0, 0.0
        %v676 = vsel %vm612, 1.0, 0.0
        %v677 = vsel %vm613, 1.0, 0.0
        %v678 = vsel %vm614, 1.0, 0.0
        %v679 = vsel %vm615, 1.0, 0.0
        %v680 = vsel %vm616, 1.0, 0.0
        %v681 = vsel %vm617, 1.0, 0.0
        %v682 = vsel %vm618, 1.0, 0.0
        %v683 = vsel %vm619, 1.0, 0.0
        %v684 = vsel %vm620, 1.0, 0.0
        %v685 = vsel %vm621, 1.0, 0.0
        %v686 = vsel %vm622, 1.0, 0.0
        %v687 = vsel %vm623, 1.0, 0.0
        %v688 = vsel %vm624, 1.0, 0.0
        %v689 = vsel %vm625, 1.0, 0.0
        %v690 = vsel %vm626, 1.0, 0.0
        %v691 = vsel %vm627, 1.0, 0.0
        %v692 = vsel %vm628, 1.0, 0.0
        %v693 = vsel %vm629, 1.0, 0.0
        %v694 = vsel %vm630, 1.0, 0.0
        %v695 = vsel %vm631, 1.0, 0.0
        %v696 = vsel %vm632, 1.0, 0.0
        %v697 = vsel %vm633, 1.0, 0.0
        %v698 = vsel %vm634, 1.0, 0.0
        %v699 = vsel %vm635, 1.0, 0.0
        %v700 = vsel %vm636, 1.0, 0.0
        %v701 = vsel %vm637, 1.0, 0.0
        %v702 = vsel %vm638, 1.0, 0.0
        %v703 = vsel %vm639, 1.0, 0.0
        %v704 = vsel %vm640, 1.0, 0.0
        %v705 = vsel %vm641, 1.0, 0.0
        %v706 = vsel %vm642, 1.0, 0.0
        %v707 = vsel %vm643, 1.0, 0.0
        %v708 = vsel %vm644, 1.0, 0.0
        %v709 = vsel %vm645, 1.0, 0.0
        %v710 = vsel %vm646, 1.0, 0.0
        %v711 = vsel %vm647, 1.0, 0.0
        %v712 = vsel %vm648, 1.0, 0.0
        %v713 = vsel %vm649, 1.0, 0.0
        %v714 = vsel %vm650, 1.0, 0.0
        %v715 = vsel %vm651, 1.0, 0.0
        %v716 = vpack.c.bf16 %v654, %v652
        %v717 = vpack.c.bf16 %v655, %v653
        %v718 = vpack.c.bf16 %v658, %v656
        %v719 = vpack.c.bf16 %v659, %v657
        %v720 = vpack.c.bf16 %v662, %v660
        %v721 = vpack.c.bf16 %v663, %v661
        %v722 = vpack.c.bf16 %v666, %v664
        %v723 = vpack.c.bf16 %v667, %v665
        %v724 = vpack.c.bf16 %v670, %v668
        %v725 = vpack.c.bf16 %v671, %v669
        %v726 = vpack.c.bf16 %v674, %v672
        %v727 = vpack.c.bf16 %v675, %v673
        %v728 = vpack.c.bf16 %v678, %v676
        %v729 = vpack.c.bf16 %v679, %v677
        %v730 = vpack.c.bf16 %v682, %v680
        %v731 = vpack.c.bf16 %v683, %v681
        %v732 = vpack.c.bf16 %v686, %v684
        %v733 = vpack.c.bf16 %v687, %v685
        %v734 = vpack.c.bf16 %v690, %v688
        %v735 = vpack.c.bf16 %v691, %v689
        %v736 = vpack.c.bf16 %v694, %v692
        %v737 = vpack.c.bf16 %v695, %v693
        %v738 = vpack.c.bf16 %v698, %v696
        %v739 = vpack.c.bf16 %v699, %v697
        %v740 = vpack.c.bf16 %v702, %v700
        %v741 = vpack.c.bf16 %v703, %v701
        %v742 = vpack.c.bf16 %v706, %v704
        %v743 = vpack.c.bf16 %v707, %v705
        %v744 = vpack.c.bf16 %v710, %v708
        %v745 = vpack.c.bf16 %v711, %v709
        %v746 = vpack.c.bf16 %v714, %v712
        %v747 = vpack.c.bf16 %v715, %v713
        %vm748 = vcmp.gt.f32.partialorder %v421, %v431
        %vm749 = vcmp.gt.f32.partialorder %v425, %v431
        %vm750 = vcmp.gt.f32.partialorder %v421, %v436
        %vm751 = vcmp.gt.f32.partialorder %v425, %v436
        %vm752 = vcmp.gt.f32.partialorder %v421, %v441
        %vm753 = vcmp.gt.f32.partialorder %v425, %v441
        %vm754 = vcmp.gt.f32.partialorder %v421, %v446
        %vm755 = vcmp.gt.f32.partialorder %v425, %v446
        %vm756 = vcmp.gt.f32.partialorder %v421, %v451
        %vm757 = vcmp.gt.f32.partialorder %v425, %v451
        %vm758 = vcmp.gt.f32.partialorder %v421, %v456
        %vm759 = vcmp.gt.f32.partialorder %v425, %v456
        %vm760 = vcmp.gt.f32.partialorder %v421, %v461
        %vm761 = vcmp.gt.f32.partialorder %v425, %v461
        %vm762 = vcmp.gt.f32.partialorder %v421, %v466
        %vm763 = vcmp.gt.f32.partialorder %v425, %v466
        %vm764 = vcmp.gt.f32.partialorder %v421, %v471
        %vm765 = vcmp.gt.f32.partialorder %v425, %v471
        %vm766 = vcmp.gt.f32.partialorder %v421, %v476
        %vm767 = vcmp.gt.f32.partialorder %v425, %v476
        %vm768 = vcmp.gt.f32.partialorder %v421, %v481
        %vm769 = vcmp.gt.f32.partialorder %v425, %v481
        %vm770 = vcmp.gt.f32.partialorder %v421, %v486
        %vm771 = vcmp.gt.f32.partialorder %v425, %v486
        %vm772 = vcmp.gt.f32.partialorder %v421, %v491
        %vm773 = vcmp.gt.f32.partialorder %v425, %v491
        %vm774 = vcmp.gt.f32.partialorder %v421, %v496
        %vm775 = vcmp.gt.f32.partialorder %v425, %v496
        %vm776 = vcmp.gt.f32.partialorder %v421, %v501
        %vm777 = vcmp.gt.f32.partialorder %v425, %v501
        %vm778 = vcmp.gt.f32.partialorder %v421, %v506
        %vm779 = vcmp.gt.f32.partialorder %v425, %v506
        %vm780 = vcmp.gt.f32.partialorder %v421, %v511
        %vm781 = vcmp.gt.f32.partialorder %v425, %v511
        %vm782 = vcmp.gt.f32.partialorder %v421, %v516
        %vm783 = vcmp.gt.f32.partialorder %v425, %v516
        %vm784 = vcmp.gt.f32.partialorder %v421, %v521
        %vm785 = vcmp.gt.f32.partialorder %v425, %v521
        %vm786 = vcmp.gt.f32.partialorder %v421, %v526
        %vm787 = vcmp.gt.f32.partialorder %v425, %v526
        %vm788 = vcmp.gt.f32.partialorder %v421, %v531
        %vm789 = vcmp.gt.f32.partialorder %v425, %v531
        %vm790 = vcmp.gt.f32.partialorder %v421, %v536
        %vm791 = vcmp.gt.f32.partialorder %v425, %v536
        %vm792 = vcmp.gt.f32.partialorder %v421, %v541
        %vm793 = vcmp.gt.f32.partialorder %v425, %v541
        %vm794 = vcmp.gt.f32.partialorder %v421, %v546
        %vm795 = vcmp.gt.f32.partialorder %v425, %v546
        %vm796 = vcmp.gt.f32.partialorder %v421, %v551
        %vm797 = vcmp.gt.f32.partialorder %v425, %v551
        %vm798 = vcmp.gt.f32.partialorder %v421, %v556
        %vm799 = vcmp.gt.f32.partialorder %v425, %v556
        %vm800 = vcmp.gt.f32.partialorder %v421, %v561
        %vm801 = vcmp.gt.f32.partialorder %v425, %v561
        %vm802 = vcmp.gt.f32.partialorder %v421, %v566
        %vm803 = vcmp.gt.f32.partialorder %v425, %v566
        %vm804 = vcmp.gt.f32.partialorder %v421, %v571
        %vm805 = vcmp.gt.f32.partialorder %v425, %v571
        %vm806 = vcmp.gt.f32.partialorder %v421, %v576
        %vm807 = vcmp.gt.f32.partialorder %v425, %v576
        %vm808 = vcmp.gt.f32.partialorder %v421, %v581
        %vm809 = vcmp.gt.f32.partialorder %v425, %v581
        %vm810 = vcmp.gt.f32.partialorder %v421, %v586
        %vm811 = vcmp.gt.f32.partialorder %v425, %v586
        %v812 = vsel %vm748, 1.0, 0.0
        %v813 = vsel %vm749, 1.0, 0.0
        %v814 = vsel %vm750, 1.0, 0.0
        %v815 = vsel %vm751, 1.0, 0.0
        %v816 = vsel %vm752, 1.0, 0.0
        %v817 = vsel %vm753, 1.0, 0.0
        %v818 = vsel %vm754, 1.0, 0.0
        %v819 = vsel %vm755, 1.0, 0.0
        %v820 = vsel %vm756, 1.0, 0.0
        %v821 = vsel %vm757, 1.0, 0.0
        %v822 = vsel %vm758, 1.0, 0.0
        %v823 = vsel %vm759, 1.0, 0.0
        %v824 = vsel %vm760, 1.0, 0.0
        %v825 = vsel %vm761, 1.0, 0.0
        %v826 = vsel %vm762, 1.0, 0.0
        %v827 = vsel %vm763, 1.0, 0.0
        %v828 = vsel %vm764, 1.0, 0.0
        %v829 = vsel %vm765, 1.0, 0.0
        %v830 = vsel %vm766, 1.0, 0.0
        %v831 = vsel %vm767, 1.0, 0.0
        %v832 = vsel %vm768, 1.0, 0.0
        %v833 = vsel %vm769, 1.0, 0.0
        %v834 = vsel %vm770, 1.0, 0.0
        %v835 = vsel %vm771, 1.0, 0.0
        %v836 = vsel %vm772, 1.0, 0.0
        %v837 = vsel %vm773, 1.0, 0.0
        %v838 = vsel %vm774, 1.0, 0.0
        %v839 = vsel %vm775, 1.0, 0.0
        %v840 = vsel %vm776, 1.0, 0.0
        %v841 = vsel %vm777, 1.0, 0.0
        %v842 = vsel %vm778, 1.0, 0.0
        %v843 = vsel %vm779, 1.0, 0.0
        %v844 = vsel %vm780, 1.0, 0.0
        %v845 = vsel %vm781, 1.0, 0.0
        %v846 = vsel %vm782, 1.0, 0.0
        %v847 = vsel %vm783, 1.0, 0.0
        %v848 = vsel %vm784, 1.0, 0.0
        %v849 = vsel %vm785, 1.0, 0.0
        %v850 = vsel %vm786, 1.0, 0.0
        %v851 = vsel %vm787, 1.0, 0.0
        %v852 = vsel %vm788, 1.0, 0.0
        %v853 = vsel %vm789, 1.0, 0.0
        %v854 = vsel %vm790, 1.0, 0.0
        %v855 = vsel %vm791, 1.0, 0.0
        %v856 = vsel %vm792, 1.0, 0.0
        %v857 = vsel %vm793, 1.0, 0.0
        %v858 = vsel %vm794, 1.0, 0.0
        %v859 = vsel %vm795, 1.0, 0.0
        %v860 = vsel %vm796, 1.0, 0.0
        %v861 = vsel %vm797, 1.0, 0.0
        %v862 = vsel %vm798, 1.0, 0.0
        %v863 = vsel %vm799, 1.0, 0.0
        %v864 = vsel %vm800, 1.0, 0.0
        %v865 = vsel %vm801, 1.0, 0.0
        %v866 = vsel %vm802, 1.0, 0.0
        %v867 = vsel %vm803, 1.0, 0.0
        %v868 = vsel %vm804, 1.0, 0.0
        %v869 = vsel %vm805, 1.0, 0.0
        %v870 = vsel %vm806, 1.0, 0.0
        %v871 = vsel %vm807, 1.0, 0.0
        %v872 = vsel %vm808, 1.0, 0.0
        %v873 = vsel %vm809, 1.0, 0.0
        %v874 = vsel %vm810, 1.0, 0.0
        %v875 = vsel %vm811, 1.0, 0.0
        %v876 = vpack.c.bf16 %v814, %v812
        %v877 = vpack.c.bf16 %v815, %v813
        %v878 = vpack.c.bf16 %v818, %v816
        %v879 = vpack.c.bf16 %v819, %v817
        %v880 = vpack.c.bf16 %v822, %v820
        %v881 = vpack.c.bf16 %v823, %v821
        %v882 = vpack.c.bf16 %v826, %v824
        %v883 = vpack.c.bf16 %v827, %v825
        %v884 = vpack.c.bf16 %v830, %v828
        %v885 = vpack.c.bf16 %v831, %v829
        %v886 = vpack.c.bf16 %v834, %v832
        %v887 = vpack.c.bf16 %v835, %v833
        %v888 = vpack.c.bf16 %v838, %v836
        %v889 = vpack.c.bf16 %v839, %v837
        %v890 = vpack.c.bf16 %v842, %v840
        %v891 = vpack.c.bf16 %v843, %v841
        %v892 = vpack.c.bf16 %v846, %v844
        %v893 = vpack.c.bf16 %v847, %v845
        %v894 = vpack.c.bf16 %v850, %v848
        %v895 = vpack.c.bf16 %v851, %v849
        %v896 = vpack.c.bf16 %v854, %v852
        %v897 = vpack.c.bf16 %v855, %v853
        %v898 = vpack.c.bf16 %v858, %v856
        %v899 = vpack.c.bf16 %v859, %v857
        %v900 = vpack.c.bf16 %v862, %v860
        %v901 = vpack.c.bf16 %v863, %v861
        %v902 = vpack.c.bf16 %v866, %v864
        %v903 = vpack.c.bf16 %v867, %v865
        %v904 = vpack.c.bf16 %v870, %v868
        %v905 = vpack.c.bf16 %v871, %v869
        %v906 = vpack.c.bf16 %v874, %v872
        %v907 = vpack.c.bf16 %v875, %v873
        %v908 = vlaneseq
        %v909 = vand.u32 %v908, 127
        %vm910 = vcmp.lt.s32.totalorder %v909, 1
        %912 = vset.pattern.permute.xlu0 0
        %913 = vperm.xlu0 %912, %v385
        %v914 = vpop.permute.xlu0 %913
        %917 = vset.pattern.permute.xlu0 0
        %918 = vperm.xlu0 %917, %v386
        %v919 = vpop.permute.xlu0 %918
        %922 = vset.pattern.permute.xlu0 0
        %923 = vperm.xlu0 %922, %v387
        %v924 = vpop.permute.xlu0 %923
        %927 = vset.pattern.permute.xlu0 0
        %928 = vperm.xlu0 %927, %v388
        %v929 = vpop.permute.xlu0 %928
        %932 = vset.pattern.permute.xlu0 0
        %933 = vperm.xlu0 %932, %v389
        %v934 = vpop.permute.xlu0 %933
        %937 = vset.pattern.permute.xlu0 0
        %938 = vperm.xlu0 %937, %v390
        %v939 = vpop.permute.xlu0 %938
        %942 = vset.pattern.permute.xlu0 0
        %943 = vperm.xlu0 %942, %v391
        %v944 = vpop.permute.xlu0 %943
        %947 = vset.pattern.permute.xlu0 0
        %948 = vperm.xlu0 %947, %v392
        %v949 = vpop.permute.xlu0 %948
        %952 = vset.pattern.permute.xlu0 0
        %953 = vperm.xlu0 %952, %v393
        %v954 = vpop.permute.xlu0 %953
        %957 = vset.pattern.permute.xlu0 0
        %958 = vperm.xlu0 %957, %v394
        %v959 = vpop.permute.xlu0 %958
        %962 = vset.pattern.permute.xlu0 0
        %963 = vperm.xlu0 %962, %v395
        %v964 = vpop.permute.xlu0 %963
        %967 = vset.pattern.permute.xlu0 0
        %968 = vperm.xlu0 %967, %v396
        %v969 = vpop.permute.xlu0 %968
        %972 = vset.pattern.permute.xlu0 0
        %973 = vperm.xlu0 %972, %v397
        %v974 = vpop.permute.xlu0 %973
        %977 = vset.pattern.permute.xlu0 0
        %978 = vperm.xlu0 %977, %v398
        %v979 = vpop.permute.xlu0 %978
        %982 = vset.pattern.permute.xlu0 0
        %983 = vperm.xlu0 %982, %v399
        %v984 = vpop.permute.xlu0 %983
        %987 = vset.pattern.permute.xlu0 0
        %988 = vperm.xlu0 %987, %v400
        %v989 = vpop.permute.xlu0 %988
        %992 = vset.pattern.permute.xlu0 0
        %993 = vperm.xlu0 %992, %v401
        %v994 = vpop.permute.xlu0 %993
        %997 = vset.pattern.permute.xlu0 0
        %998 = vperm.xlu0 %997, %v402
        %v999 = vpop.permute.xlu0 %998
        %1002 = vset.pattern.permute.xlu0 0
        %1003 = vperm.xlu0 %1002, %v403
        %v1004 = vpop.permute.xlu0 %1003
        %1007 = vset.pattern.permute.xlu0 0
        %1008 = vperm.xlu0 %1007, %v404
        %v1009 = vpop.permute.xlu0 %1008
        %1012 = vset.pattern.permute.xlu0 0
        %1013 = vperm.xlu0 %1012, %v405
        %v1014 = vpop.permute.xlu0 %1013
        %1017 = vset.pattern.permute.xlu0 0
        %1018 = vperm.xlu0 %1017, %v406
        %v1019 = vpop.permute.xlu0 %1018
        %1022 = vset.pattern.permute.xlu0 0
        %1023 = vperm.xlu0 %1022, %v407
        %v1024 = vpop.permute.xlu0 %1023
        %1027 = vset.pattern.permute.xlu0 0
        %1028 = vperm.xlu0 %1027, %v408
        %v1029 = vpop.permute.xlu0 %1028
        %1032 = vset.pattern.permute.xlu0 0
        %1033 = vperm.xlu0 %1032, %v409
        %v1034 = vpop.permute.xlu0 %1033
        %1037 = vset.pattern.permute.xlu0 0
        %1038 = vperm.xlu0 %1037, %v410
        %v1039 = vpop.permute.xlu0 %1038
        %1042 = vset.pattern.permute.xlu0 0
        %1043 = vperm.xlu0 %1042, %v411
        %v1044 = vpop.permute.xlu0 %1043
        %1047 = vset.pattern.permute.xlu0 0
        %1048 = vperm.xlu0 %1047, %v412
        %v1049 = vpop.permute.xlu0 %1048
        %1052 = vset.pattern.permute.xlu0 0
        %1053 = vperm.xlu0 %1052, %v413
        %v1054 = vpop.permute.xlu0 %1053
        %1057 = vset.pattern.permute.xlu0 0
        %1058 = vperm.xlu0 %1057, %v414
        %v1059 = vpop.permute.xlu0 %1058
        %1062 = vset.pattern.permute.xlu0 0
        %1063 = vperm.xlu0 %1062, %v415
        %v1064 = vpop.permute.xlu0 %1063
        %1067 = vset.pattern.permute.xlu0 0
        %1068 = vperm.xlu0 %1067, %v416
        %v1069 = vpop.permute.xlu0 %1068
        %v1071 = vsel %vm910, 1.0, %v914
        %v1072 = vsel %vm910, 1.0, %v919
        %v1073 = vsel %vm910, 1.0, %v924
        %v1074 = vsel %vm910, 1.0, %v929
        %v1075 = vsel %vm910, 1.0, %v934
        %v1076 = vsel %vm910, 1.0, %v939
        %v1077 = vsel %vm910, 1.0, %v944
        %v1078 = vsel %vm910, 1.0, %v949
        %v1079 = vsel %vm910, 1.0, %v954
        %v1080 = vsel %vm910, 1.0, %v959
        %v1081 = vsel %vm910, 1.0, %v964
        %v1082 = vsel %vm910, 1.0, %v969
        %v1083 = vsel %vm910, 1.0, %v974
        %v1084 = vsel %vm910, 1.0, %v979
        %v1085 = vsel %vm910, 1.0, %v984
        %v1086 = vsel %vm910, 1.0, %v989
        %v1087 = vsel %vm910, 1.0, %v994
        %v1088 = vsel %vm910, 1.0, %v999
        %v1089 = vsel %vm910, 1.0, %v1004
        %v1090 = vsel %vm910, 1.0, %v1009
        %v1091 = vsel %vm910, 1.0, %v1014
        %v1092 = vsel %vm910, 1.0, %v1019
        %v1093 = vsel %vm910, 1.0, %v1024
        %v1094 = vsel %vm910, 1.0, %v1029
        %v1095 = vsel %vm910, 1.0, %v1034
        %v1096 = vsel %vm910, 1.0, %v1039
        %v1097 = vsel %vm910, 1.0, %v1044
        %v1098 = vsel %vm910, 1.0, %v1049
        %v1099 = vsel %vm910, 1.0, %v1054
        %v1100 = vsel %vm910, 1.0, %v1059
        %v1101 = vsel %vm910, 1.0, %v1064
        %v1102 = vsel %vm910, 1.0, %v1069
        %v1103 = vpack.c.bf16 %v1072, %v1071
        %v1104 = vpack.c.bf16 %v1074, %v1073
        %v1105 = vpack.c.bf16 %v1076, %v1075
        %v1106 = vpack.c.bf16 %v1078, %v1077
        %v1107 = vpack.c.bf16 %v1080, %v1079
        %v1108 = vpack.c.bf16 %v1082, %v1081
        %v1109 = vpack.c.bf16 %v1084, %v1083
        %v1110 = vpack.c.bf16 %v1086, %v1085
        %v1111 = vpack.c.bf16 %v1088, %v1087
        %v1112 = vpack.c.bf16 %v1090, %v1089
        %v1113 = vpack.c.bf16 %v1092, %v1091
        %v1114 = vpack.c.bf16 %v1094, %v1093
        %v1115 = vpack.c.bf16 %v1096, %v1095
        %v1116 = vpack.c.bf16 %v1098, %v1097
        %v1117 = vpack.c.bf16 %v1100, %v1099
        %v1118 = vpack.c.bf16 %v1102, %v1101
        %v1119 = vld [vmem:[#allocation2] sm:$0xff]
        %v1120 = vld [vmem:[#allocation2 + $0x8] sm:$0xff]
        %v1121 = vld [vmem:[#allocation2 + $0x10] sm:$0xff]
        %v1122 = vld [vmem:[#allocation2 + $0x18] sm:$0xff]
        %v1123 = vld [vmem:[#allocation2 + $0x20] sm:$0xff]
        %v1124 = vld [vmem:[#allocation2 + $0x28] sm:$0xff]
        %v1125 = vld [vmem:[#allocation2 + $0x30] sm:$0xff]
        %v1126 = vld [vmem:[#allocation2 + $0x38] sm:$0xff]
        %v1127 = vld [vmem:[#allocation2 + $0x40] sm:$0xff]
        %v1128 = vld [vmem:[#allocation2 + $0x48] sm:$0xff]
        %v1129 = vld [vmem:[#allocation2 + $0x50] sm:$0xff]
        %v1130 = vld [vmem:[#allocation2 + $0x58] sm:$0xff]
        %v1131 = vld [vmem:[#allocation2 + $0x60] sm:$0xff]
        %v1132 = vld [vmem:[#allocation2 + $0x68] sm:$0xff]
        %v1133 = vld [vmem:[#allocation2 + $0x70] sm:$0xff]
        %v1134 = vld [vmem:[#allocation2 + $0x78] sm:$0xff]
        %v1135 = vld [vmem:[#allocation2 + $0x80] sm:$0xff]
        %v1136 = vld [vmem:[#allocation2 + $0x88] sm:$0xff]
        %v1137 = vld [vmem:[#allocation2 + $0x90] sm:$0xff]
        %v1138 = vld [vmem:[#allocation2 + $0x98] sm:$0xff]
        %v1139 = vld [vmem:[#allocation2 + $0xa0] sm:$0xff]
        %v1140 = vld [vmem:[#allocation2 + $0xa8] sm:$0xff]
        %v1141 = vld [vmem:[#allocation2 + $0xb0] sm:$0xff]
        %v1142 = vld [vmem:[#allocation2 + $0xb8] sm:$0xff]
        %v1143 = vld [vmem:[#allocation2 + $0xc0] sm:$0xff]
        %v1144 = vld [vmem:[#allocation2 + $0xc8] sm:$0xff]
        %v1145 = vld [vmem:[#allocation2 + $0xd0] sm:$0xff]
        %v1146 = vld [vmem:[#allocation2 + $0xd8] sm:$0xff]
        %v1147 = vld [vmem:[#allocation2 + $0xe0] sm:$0xff]
        %v1148 = vld [vmem:[#allocation2 + $0xe8] sm:$0xff]
        %v1149 = vld [vmem:[#allocation2 + $0xf0] sm:$0xff]
        %v1150 = vld [vmem:[#allocation2 + $0xf8] sm:$0xff]
        %1151 = vmatprep.subr.bf16.mxu0 0
        %1152 = vmatpush1.bf16.msra.mxu0 %v1103
        %1153 = vmatprep.subr.bf16.mxu0 0
        %1154 = vmatpush1.bf16.msra.mxu0 %v1104
        %1155 = vmatprep.subr.bf16.mxu0 0
        %1156 = vmatpush1.bf16.msra.mxu0 %v1105
        %1157 = vmatprep.subr.bf16.mxu0 0
        %1158 = vmatpush1.bf16.msra.mxu0 %v1106
        %1159 = vmatprep.subr.bf16.mxu0 0
        %1160 = vmatpush1.bf16.msra.mxu0 %v1107
        %1161 = vmatprep.subr.bf16.mxu0 0
        %1162 = vmatpush1.bf16.msra.mxu0 %v1108
        %1163 = vmatprep.subr.bf16.mxu0 0
        %1164 = vmatpush1.bf16.msra.mxu0 %v1109
        %1165 = vmatprep.subr.bf16.mxu0 0
        %1166 = vmatpush1.bf16.msra.mxu0 %v1110
        %1167 = vmatprep.subr.bf16.mxu0 0
        %1168 = vmatpush1.bf16.msra.mxu0 %v1111
        %1169 = vmatprep.subr.bf16.mxu0 0
        %1170 = vmatpush1.bf16.msra.mxu0 %v1112
        %1171 = vmatprep.subr.bf16.mxu0 0
        %1172 = vmatpush1.bf16.msra.mxu0 %v1113
        %1173 = vmatprep.subr.bf16.mxu0 0
        %1174 = vmatpush1.bf16.msra.mxu0 %v1114
        %1175 = vmatprep.subr.bf16.mxu0 0
        %1176 = vmatpush1.bf16.msra.mxu0 %v1115
        %1177 = vmatprep.subr.bf16.mxu0 0
        %1178 = vmatpush1.bf16.msra.mxu0 %v1116
        %1179 = vmatprep.subr.bf16.mxu0 0
        %1180 = vmatpush1.bf16.msra.mxu0 %v1117
        %1181 = vmatprep.subr.bf16.mxu0 0
        %1182 = vmatpush1.bf16.msra.mxu0 %v1118
        %1183 = vmatprep.mubr.bf16.mxu0 %v717
        %1184 = vmatmul.mubr.bf16.gmra.mrb[0].mxu0 %v716
        %v1185 = vpop.f32.mrb[0].mxu0
        %v1186 = vadd.f32 0.0, %v1185
        %v1187 = vpop.f32.mrb[0].mxu0
        %v1188 = vpop.f32.mrb[0].mxu0
        %v1189 = vadd.f32 0.0, %v1188
        %v1190 = vpop.f32.mrb[0].mxu0
        %1191 = vmatprep.mubr.bf16.mxu0 %v719
        %1192 = vmatmul.mubr.bf16.gmra.mrb[0].mxu0 %v718
        %v1193 = vpop.f32.mrb[0].mxu0
        %v1194 = vadd.f32 0.0, %v1193
        %v1195 = vpop.f32.mrb[0].mxu0
        %v1196 = vpop.f32.mrb[0].mxu0
        %v1197 = vadd.f32 0.0, %v1196
        %v1198 = vpop.f32.mrb[0].mxu0
        %1199 = vmatprep.mubr.bf16.mxu0 %v721
        %1200 = vmatmul.mubr.bf16.gmra.mrb[0].mxu0 %v720
        %v1201 = vpop.f32.mrb[0].mxu0
        %v1202 = vadd.f32 0.0, %v1201
        %v1203 = vpop.f32.mrb[0].mxu0
        %v1204 = vpop.f32.mrb[0].mxu0
        %v1205 = vadd.f32 0.0, %v1204
        %v1206 = vpop.f32.mrb[0].mxu0
        %1207 = vmatprep.mubr.bf16.mxu0 %v723
        %1208 = vmatmul.mubr.bf16.gmra.mrb[0].mxu0 %v722
        %v1209 = vpop.f32.mrb[0].mxu0
        %v1210 = vadd.f32 0.0, %v1209
        %v1211 = vpop.f32.mrb[0].mxu0
        %v1212 = vpop.f32.mrb[0].mxu0
        %v1213 = vadd.f32 0.0, %v1212
        %v1214 = vpop.f32.mrb[0].mxu0
        %1215 = vmatprep.mubr.bf16.mxu0 %v725
        %1216 = vmatmul.mubr.bf16.gmra.mrb[0].mxu0 %v724
        %v1217 = vpop.f32.mrb[0].mxu0
        %v1218 = vadd.f32 0.0, %v1217
        %v1219 = vpop.f32.mrb[0].mxu0
        %v1220 = vpop.f32.mrb[0].mxu0
        %v1221 = vadd.f32 0.0, %v1220
        %v1222 = vpop.f32.mrb[0].mxu0
        %1223 = vmatprep.mubr.bf16.mxu0 %v727
        %1224 = vmatmul.mubr.bf16.gmra.mrb[0].mxu0 %v726
        %v1225 = vpop.f32.mrb[0].mxu0
        %v1226 = vadd.f32 0.0, %v1225
        %v1227 = vpop.f32.mrb[0].mxu0
        %v1228 = vpop.f32.mrb[0].mxu0
        %v1229 = vadd.f32 0.0, %v1228
        %v1230 = vpop.f32.mrb[0].mxu0
        %1231 = vmatprep.mubr.bf16.mxu0 %v729
        %1232 = vmatmul.mubr.bf16.gmra.mrb[0].mxu0 %v728
        %v1233 = vpop.f32.mrb[0].mxu0
        %v1234 = vadd.f32 0.0, %v1233
        %v1235 = vpop.f32.mrb[0].mxu0
        %v1236 = vpop.f32.mrb[0].mxu0
        %v1237 = vadd.f32 0.0, %v1236
        %v1238 = vpop.f32.mrb[0].mxu0
        %1239 = vmatprep.mubr.bf16.mxu0 %v731
        %1240 = vmatmul.mubr.bf16.gmra.mrb[0].mxu0 %v730
        %v1241 = vpop.f32.mrb[0].mxu0
        %v1242 = vadd.f32 0.0, %v1241
        %v1243 = vpop.f32.mrb[0].mxu0
        %v1244 = vpop.f32.mrb[0].mxu0
        %v1245 = vadd.f32 0.0, %v1244
        %v1246 = vpop.f32.mrb[0].mxu0
        %1247 = vmatprep.mubr.bf16.mxu0 %v733
        %1248 = vmatmul.mubr.bf16.gmra.mrb[0].mxu0 %v732
        %v1249 = vpop.f32.mrb[0].mxu0
        %v1250 = vadd.f32 0.0, %v1249
        %v1251 = vpop.f32.mrb[0].mxu0
        %v1252 = vpop.f32.mrb[0].mxu0
        %v1253 = vadd.f32 0.0, %v1252
        %v1254 = vpop.f32.mrb[0].mxu0
        %1255 = vmatprep.mubr.bf16.mxu0 %v735
        %1256 = vmatmul.mubr.bf16.gmra.mrb[0].mxu0 %v734
        %v1257 = vpop.f32.mrb[0].mxu0
        %v1258 = vadd.f32 0.0, %v1257
        %v1259 = vpop.f32.mrb[0].mxu0
        %v1260 = vpop.f32.mrb[0].mxu0
        %v1261 = vadd.f32 0.0, %v1260
        %v1262 = vpop.f32.mrb[0].mxu0
        %1263 = vmatprep.mubr.bf16.mxu0 %v737
        %1264 = vmatmul.mubr.bf16.gmra.mrb[0].mxu0 %v736
        %v1265 = vpop.f32.mrb[0].mxu0
        %v1266 = vadd.f32 0.0, %v1265
        %v1267 = vpop.f32.mrb[0].mxu0
        %v1268 = vpop.f32.mrb[0].mxu0
        %v1269 = vadd.f32 0.0, %v1268
        %v1270 = vpop.f32.mrb[0].mxu0
        %1271 = vmatprep.mubr.bf16.mxu0 %v739
        %1272 = vmatmul.mubr.bf16.gmra.mrb[0].mxu0 %v738
        %v1273 = vpop.f32.mrb[0].mxu0
        %v1274 = vadd.f32 0.0, %v1273
        %v1275 = vpop.f32.mrb[0].mxu0
        %v1276 = vpop.f32.mrb[0].mxu0
        %v1277 = vadd.f32 0.0, %v1276
        %v1278 = vpop.f32.mrb[0].mxu0
        %1279 = vmatprep.mubr.bf16.mxu0 %v741
        %1280 = vmatmul.mubr.bf16.gmra.mrb[0].mxu0 %v740
        %v1281 = vpop.f32.mrb[0].mxu0
        %v1282 = vadd.f32 0.0, %v1281
        %v1283 = vpop.f32.mrb[0].mxu0
        %v1284 = vpop.f32.mrb[0].mxu0
        %v1285 = vadd.f32 0.0, %v1284
        %v1286 = vpop.f32.mrb[0].mxu0
        %1287 = vmatprep.mubr.bf16.mxu0 %v743
        %1288 = vmatmul.mubr.bf16.gmra.mrb[0].mxu0 %v742
        %v1289 = vpop.f32.mrb[0].mxu0
        %v1290 = vadd.f32 0.0, %v1289
        %v1291 = vpop.f32.mrb[0].mxu0
        %v1292 = vpop.f32.mrb[0].mxu0
        %v1293 = vadd.f32 0.0, %v1292
        %v1294 = vpop.f32.mrb[0].mxu0
        %1295 = vmatprep.mubr.bf16.mxu0 %v745
        %1296 = vmatmul.mubr.bf16.gmra.mrb[0].mxu0 %v744
        %v1297 = vpop.f32.mrb[0].mxu0
        %v1298 = vadd.f32 0.0, %v1297
        %v1299 = vpop.f32.mrb[0].mxu0
        %v1300 = vpop.f32.mrb[0].mxu0
        %v1301 = vadd.f32 0.0, %v1300
        %v1302 = vpop.f32.mrb[0].mxu0
        %1303 = vmatprep.mubr.bf16.mxu0 %v747
        %1304 = vmatmul.mubr.bf16.gmra.mrb[0].mxu0 %v746
        %v1305 = vpop.f32.mrb[0].mxu0
        %v1306 = vadd.f32 0.0, %v1305
        %v1307 = vpop.f32.mrb[0].mxu0
        %v1308 = vpop.f32.mrb[0].mxu0
        %v1309 = vadd.f32 0.0, %v1308
        %v1310 = vpop.f32.mrb[0].mxu0
        %1311 = vdwg.mxu0
        %v1312 = vadd.f32 %v1119, %v1186
        %v1313 = vadd.f32 %v1120, %v1189
        %v1314 = vadd.f32 %v1121, %v1194
        %v1315 = vadd.f32 %v1122, %v1197
        %v1316 = vadd.f32 %v1123, %v1202
        %v1317 = vadd.f32 %v1124, %v1205
        %v1318 = vadd.f32 %v1125, %v1210
        %v1319 = vadd.f32 %v1126, %v1213
        %v1320 = vadd.f32 %v1127, %v1218
        %v1321 = vadd.f32 %v1128, %v1221
        %v1322 = vadd.f32 %v1129, %v1226
        %v1323 = vadd.f32 %v1130, %v1229
        %v1324 = vadd.f32 %v1131, %v1234
        %v1325 = vadd.f32 %v1132, %v1237
        %v1326 = vadd.f32 %v1133, %v1242
        %v1327 = vadd.f32 %v1134, %v1245
        %v1328 = vadd.f32 %v1135, %v1250
        %v1329 = vadd.f32 %v1136, %v1253
        %v1330 = vadd.f32 %v1137, %v1258
        %v1331 = vadd.f32 %v1138, %v1261
        %v1332 = vadd.f32 %v1139, %v1266
        %v1333 = vadd.f32 %v1140, %v1269
        %v1334 = vadd.f32 %v1141, %v1274
        %v1335 = vadd.f32 %v1142, %v1277
        %v1336 = vadd.f32 %v1143, %v1282
        %v1337 = vadd.f32 %v1144, %v1285
        %v1338 = vadd.f32 %v1145, %v1290
        %v1339 = vadd.f32 %v1146, %v1293
        %v1340 = vadd.f32 %v1147, %v1298
        %v1341 = vadd.f32 %v1148, %v1301
        %v1342 = vadd.f32 %v1149, %v1306
        %v1343 = vadd.f32 %v1150, %v1309
        %vm1344 = vcmask 64512
        %1345 = vst.msk [vmem:[#allocation2] sm:$0xff] %vm1344, %v1312
        %1346 = vst.msk [vmem:[#allocation2 + $0x8] sm:$0xff] %vm1344, %v1313
        %1347 = vst.msk [vmem:[#allocation2 + $0x10] sm:$0xff] %vm1344, %v1314
        %1348 = vst.msk [vmem:[#allocation2 + $0x18] sm:$0xff] %vm1344, %v1315
        %1349 = vst.msk [vmem:[#allocation2 + $0x20] sm:$0xff] %vm1344, %v1316
        %1350 = vst.msk [vmem:[#allocation2 + $0x28] sm:$0xff] %vm1344, %v1317
        %1351 = vst.msk [vmem:[#allocation2 + $0x30] sm:$0xff] %vm1344, %v1318
        %1352 = vst.msk [vmem:[#allocation2 + $0x38] sm:$0xff] %vm1344, %v1319
        %1353 = vst.msk [vmem:[#allocation2 + $0x40] sm:$0xff] %vm1344, %v1320
        %1354 = vst.msk [vmem:[#allocation2 + $0x48] sm:$0xff] %vm1344, %v1321
        %1355 = vst.msk [vmem:[#allocation2 + $0x50] sm:$0xff] %vm1344, %v1322
        %1356 = vst.msk [vmem:[#allocation2 + $0x58] sm:$0xff] %vm1344, %v1323
        %1357 = vst.msk [vmem:[#allocation2 + $0x60] sm:$0xff] %vm1344, %v1324
        %1358 = vst.msk [vmem:[#allocation2 + $0x68] sm:$0xff] %vm1344, %v1325
        %1359 = vst.msk [vmem:[#allocation2 + $0x70] sm:$0xff] %vm1344, %v1326
        %1360 = vst.msk [vmem:[#allocation2 + $0x78] sm:$0xff] %vm1344, %v1327
        %1361 = vst.msk [vmem:[#allocation2 + $0x80] sm:$0xff] %vm1344, %v1328
        %1362 = vst.msk [vmem:[#allocation2 + $0x88] sm:$0xff] %vm1344, %v1329
        %1363 = vst.msk [vmem:[#allocation2 + $0x90] sm:$0xff] %vm1344, %v1330
        %1364 = vst.msk [vmem:[#allocation2 + $0x98] sm:$0xff] %vm1344, %v1331
        %1365 = vst.msk [vmem:[#allocation2 + $0xa0] sm:$0xff] %vm1344, %v1332
        %1366 = vst.msk [vmem:[#allocation2 + $0xa8] sm:$0xff] %vm1344, %v1333
        %1367 = vst.msk [vmem:[#allocation2 + $0xb0] sm:$0xff] %vm1344, %v1334
        %1368 = vst.msk [vmem:[#allocation2 + $0xb8] sm:$0xff] %vm1344, %v1335
        %1369 = vst.msk [vmem:[#allocation2 + $0xc0] sm:$0xff] %vm1344, %v1336
        %1370 = vst.msk [vmem:[#allocation2 + $0xc8] sm:$0xff] %vm1344, %v1337
        %1371 = vst.msk [vmem:[#allocation2 + $0xd0] sm:$0xff] %vm1344, %v1338
        %1372 = vst.msk [vmem:[#allocation2 + $0xd8] sm:$0xff] %vm1344, %v1339
        %1373 = vst.msk [vmem:[#allocation2 + $0xe0] sm:$0xff] %vm1344, %v1340
        %1374 = vst.msk [vmem:[#allocation2 + $0xe8] sm:$0xff] %vm1344, %v1341
        %1375 = vst.msk [vmem:[#allocation2 + $0xf0] sm:$0xff] %vm1344, %v1342
        %1376 = vst.msk [vmem:[#allocation2 + $0xf8] sm:$0xff] %vm1344, %v1343
        %v1377 = vld [vmem:[#allocation3] sm:$0xff]
        %v1378 = vld [vmem:[#allocation3 + $0x8] sm:$0xff]
        %v1379 = vld [vmem:[#allocation3 + $0x10] sm:$0xff]
        %v1380 = vld [vmem:[#allocation3 + $0x18] sm:$0xff]
        %v1381 = vld [vmem:[#allocation3 + $0x20] sm:$0xff]
        %v1382 = vld [vmem:[#allocation3 + $0x28] sm:$0xff]
        %v1383 = vld [vmem:[#allocation3 + $0x30] sm:$0xff]
        %v1384 = vld [vmem:[#allocation3 + $0x38] sm:$0xff]
        %v1385 = vld [vmem:[#allocation3 + $0x40] sm:$0xff]
        %v1386 = vld [vmem:[#allocation3 + $0x48] sm:$0xff]
        %v1387 = vld [vmem:[#allocation3 + $0x50] sm:$0xff]
        %v1388 = vld [vmem:[#allocation3 + $0x58] sm:$0xff]
        %v1389 = vld [vmem:[#allocation3 + $0x60] sm:$0xff]
        %v1390 = vld [vmem:[#allocation3 + $0x68] sm:$0xff]
        %v1391 = vld [vmem:[#allocation3 + $0x70] sm:$0xff]
        %v1392 = vld [vmem:[#allocation3 + $0x78] sm:$0xff]
        %v1393 = vld [vmem:[#allocation3 + $0x80] sm:$0xff]
        %v1394 = vld [vmem:[#allocation3 + $0x88] sm:$0xff]
        %v1395 = vld [vmem:[#allocation3 + $0x90] sm:$0xff]
        %v1396 = vld [vmem:[#allocation3 + $0x98] sm:$0xff]
        %v1397 = vld [vmem:[#allocation3 + $0xa0] sm:$0xff]
        %v1398 = vld [vmem:[#allocation3 + $0xa8] sm:$0xff]
        %v1399 = vld [vmem:[#allocation3 + $0xb0] sm:$0xff]
        %v1400 = vld [vmem:[#allocation3 + $0xb8] sm:$0xff]
        %v1401 = vld [vmem:[#allocation3 + $0xc0] sm:$0xff]
        %v1402 = vld [vmem:[#allocation3 + $0xc8] sm:$0xff]
        %v1403 = vld [vmem:[#allocation3 + $0xd0] sm:$0xff]
        %v1404 = vld [vmem:[#allocation3 + $0xd8] sm:$0xff]
        %v1405 = vld [vmem:[#allocation3 + $0xe0] sm:$0xff]
        %v1406 = vld [vmem:[#allocation3 + $0xe8] sm:$0xff]
        %v1407 = vld [vmem:[#allocation3 + $0xf0] sm:$0xff]
        %v1408 = vld [vmem:[#allocation3 + $0xf8] sm:$0xff]
        %1409 = vmatprep.subr.bf16.mxu0 0
        %1410 = vmatpush1.bf16.msra.mxu0 %v1103
        %1411 = vmatprep.subr.bf16.mxu0 0
        %1412 = vmatpush1.bf16.msra.mxu0 %v1104
        %1413 = vmatprep.subr.bf16.mxu0 0
        %1414 = vmatpush1.bf16.msra.mxu0 %v1105
        %1415 = vmatprep.subr.bf16.mxu0 0
        %1416 = vmatpush1.bf16.msra.mxu0 %v1106
        %1417 = vmatprep.subr.bf16.mxu0 0
        %1418 = vmatpush1.bf16.msra.mxu0 %v1107
        %1419 = vmatprep.subr.bf16.mxu0 0
        %1420 = vmatpush1.bf16.msra.mxu0 %v1108
        %1421 = vmatprep.subr.bf16.mxu0 0
        %1422 = vmatpush1.bf16.msra.mxu0 %v1109
        %1423 = vmatprep.subr.bf16.mxu0 0
        %1424 = vmatpush1.bf16.msra.mxu0 %v1110
        %1425 = vmatprep.subr.bf16.mxu0 0
        %1426 = vmatpush1.bf16.msra.mxu0 %v1111
        %1427 = vmatprep.subr.bf16.mxu0 0
        %1428 = vmatpush1.bf16.msra.mxu0 %v1112
        %1429 = vmatprep.subr.bf16.mxu0 0
        %1430 = vmatpush1.bf16.msra.mxu0 %v1113
        %1431 = vmatprep.subr.bf16.mxu0 0
        %1432 = vmatpush1.bf16.msra.mxu0 %v1114
        %1433 = vmatprep.subr.bf16.mxu0 0
        %1434 = vmatpush1.bf16.msra.mxu0 %v1115
        %1435 = vmatprep.subr.bf16.mxu0 0
        %1436 = vmatpush1.bf16.msra.mxu0 %v1116
        %1437 = vmatprep.subr.bf16.mxu0 0
        %1438 = vmatpush1.bf16.msra.mxu0 %v1117
        %1439 = vmatprep.subr.bf16.mxu0 0
        %1440 = vmatpush1.bf16.msra.mxu0 %v1118
        %1441 = vmatprep.mubr.bf16.mxu0 %v877
        %1442 = vmatmul.mubr.bf16.gmra.mrb[0].mxu0 %v876
        %v1443 = vpop.f32.mrb[0].mxu0
        %v1444 = vadd.f32 0.0, %v1443
        %v1445 = vpop.f32.mrb[0].mxu0
        %v1446 = vpop.f32.mrb[0].mxu0
        %v1447 = vadd.f32 0.0, %v1446
        %v1448 = vpop.f32.mrb[0].mxu0
        %1449 = vmatprep.mubr.bf16.mxu0 %v879
        %1450 = vmatmul.mubr.bf16.gmra.mrb[0].mxu0 %v878
        %v1451 = vpop.f32.mrb[0].mxu0
        %v1452 = vadd.f32 0.0, %v1451
        %v1453 = vpop.f32.mrb[0].mxu0
        %v1454 = vpop.f32.mrb[0].mxu0
        %v1455 = vadd.f32 0.0, %v1454
        %v1456 = vpop.f32.mrb[0].mxu0
        %1457 = vmatprep.mubr.bf16.mxu0 %v881
        %1458 = vmatmul.mubr.bf16.gmra.mrb[0].mxu0 %v880
        %v1459 = vpop.f32.mrb[0].mxu0
        %v1460 = vadd.f32 0.0, %v1459
        %v1461 = vpop.f32.mrb[0].mxu0
        %v1462 = vpop.f32.mrb[0].mxu0
        %v1463 = vadd.f32 0.0, %v1462
        %v1464 = vpop.f32.mrb[0].mxu0
        %1465 = vmatprep.mubr.bf16.mxu0 %v883
        %1466 = vmatmul.mubr.bf16.gmra.mrb[0].mxu0 %v882
        %v1467 = vpop.f32.mrb[0].mxu0
        %v1468 = vadd.f32 0.0, %v1467
        %v1469 = vpop.f32.mrb[0].mxu0
        %v1470 = vpop.f32.mrb[0].mxu0
        %v1471 = vadd.f32 0.0, %v1470
        %v1472 = vpop.f32.mrb[0].mxu0
        %1473 = vmatprep.mubr.bf16.mxu0 %v885
        %1474 = vmatmul.mubr.bf16.gmra.mrb[0].mxu0 %v884
        %v1475 = vpop.f32.mrb[0].mxu0
        %v1476 = vadd.f32 0.0, %v1475
        %v1477 = vpop.f32.mrb[0].mxu0
        %v1478 = vpop.f32.mrb[0].mxu0
        %v1479 = vadd.f32 0.0, %v1478
        %v1480 = vpop.f32.mrb[0].mxu0
        %1481 = vmatprep.mubr.bf16.mxu0 %v887
        %1482 = vmatmul.mubr.bf16.gmra.mrb[0].mxu0 %v886
        %v1483 = vpop.f32.mrb[0].mxu0
        %v1484 = vadd.f32 0.0, %v1483
        %v1485 = vpop.f32.mrb[0].mxu0
        %v1486 = vpop.f32.mrb[0].mxu0
        %v1487 = vadd.f32 0.0, %v1486
        %v1488 = vpop.f32.mrb[0].mxu0
        %1489 = vmatprep.mubr.bf16.mxu0 %v889
        %1490 = vmatmul.mubr.bf16.gmra.mrb[0].mxu0 %v888
        %v1491 = vpop.f32.mrb[0].mxu0
        %v1492 = vadd.f32 0.0, %v1491
        %v1493 = vpop.f32.mrb[0].mxu0
        %v1494 = vpop.f32.mrb[0].mxu0
        %v1495 = vadd.f32 0.0, %v1494
        %v1496 = vpop.f32.mrb[0].mxu0
        %1497 = vmatprep.mubr.bf16.mxu0 %v891
        %1498 = vmatmul.mubr.bf16.gmra.mrb[0].mxu0 %v890
        %v1499 = vpop.f32.mrb[0].mxu0
        %v1500 = vadd.f32 0.0, %v1499
        %v1501 = vpop.f32.mrb[0].mxu0
        %v1502 = vpop.f32.mrb[0].mxu0
        %v1503 = vadd.f32 0.0, %v1502
        %v1504 = vpop.f32.mrb[0].mxu0
        %1505 = vmatprep.mubr.bf16.mxu0 %v893
        %1506 = vmatmul.mubr.bf16.gmra.mrb[0].mxu0 %v892
        %v1507 = vpop.f32.mrb[0].mxu0
        %v1508 = vadd.f32 0.0, %v1507
        %v1509 = vpop.f32.mrb[0].mxu0
        %v1510 = vpop.f32.mrb[0].mxu0
        %v1511 = vadd.f32 0.0, %v1510
        %v1512 = vpop.f32.mrb[0].mxu0
        %1513 = vmatprep.mubr.bf16.mxu0 %v895
        %1514 = vmatmul.mubr.bf16.gmra.mrb[0].mxu0 %v894
        %v1515 = vpop.f32.mrb[0].mxu0
        %v1516 = vadd.f32 0.0, %v1515
        %v1517 = vpop.f32.mrb[0].mxu0
        %v1518 = vpop.f32.mrb[0].mxu0
        %v1519 = vadd.f32 0.0, %v1518
        %v1520 = vpop.f32.mrb[0].mxu0
        %1521 = vmatprep.mubr.bf16.mxu0 %v897
        %1522 = vmatmul.mubr.bf16.gmra.mrb[0].mxu0 %v896
        %v1523 = vpop.f32.mrb[0].mxu0
        %v1524 = vadd.f32 0.0, %v1523
        %v1525 = vpop.f32.mrb[0].mxu0
        %v1526 = vpop.f32.mrb[0].mxu0
        %v1527 = vadd.f32 0.0, %v1526
        %v1528 = vpop.f32.mrb[0].mxu0
        %1529 = vmatprep.mubr.bf16.mxu0 %v899
        %1530 = vmatmul.mubr.bf16.gmra.mrb[0].mxu0 %v898
        %v1531 = vpop.f32.mrb[0].mxu0
        %v1532 = vadd.f32 0.0, %v1531
        %v1533 = vpop.f32.mrb[0].mxu0
        %v1534 = vpop.f32.mrb[0].mxu0
        %v1535 = vadd.f32 0.0, %v1534
        %v1536 = vpop.f32.mrb[0].mxu0
        %1537 = vmatprep.mubr.bf16.mxu0 %v901
        %1538 = vmatmul.mubr.bf16.gmra.mrb[0].mxu0 %v900
        %v1539 = vpop.f32.mrb[0].mxu0
        %v1540 = vadd.f32 0.0, %v1539
        %v1541 = vpop.f32.mrb[0].mxu0
        %v1542 = vpop.f32.mrb[0].mxu0
        %v1543 = vadd.f32 0.0, %v1542
        %v1544 = vpop.f32.mrb[0].mxu0
        %1545 = vmatprep.mubr.bf16.mxu0 %v903
        %1546 = vmatmul.mubr.bf16.gmra.mrb[0].mxu0 %v902
        %v1547 = vpop.f32.mrb[0].mxu0
        %v1548 = vadd.f32 0.0, %v1547
        %v1549 = vpop.f32.mrb[0].mxu0
        %v1550 = vpop.f32.mrb[0].mxu0
        %v1551 = vadd.f32 0.0, %v1550
        %v1552 = vpop.f32.mrb[0].mxu0
        %1553 = vmatprep.mubr.bf16.mxu0 %v905
        %1554 = vmatmul.mubr.bf16.gmra.mrb[0].mxu0 %v904
        %v1555 = vpop.f32.mrb[0].mxu0
        %v1556 = vadd.f32 0.0, %v1555
        %v1557 = vpop.f32.mrb[0].mxu0
        %v1558 = vpop.f32.mrb[0].mxu0
        %v1559 = vadd.f32 0.0, %v1558
        %v1560 = vpop.f32.mrb[0].mxu0
        %1561 = vmatprep.mubr.bf16.mxu0 %v907
        %1562 = vmatmul.mubr.bf16.gmra.mrb[0].mxu0 %v906
        %v1563 = vpop.f32.mrb[0].mxu0
        %v1564 = vadd.f32 0.0, %v1563
        %v1565 = vpop.f32.mrb[0].mxu0
        %v1566 = vpop.f32.mrb[0].mxu0
        %v1567 = vadd.f32 0.0, %v1566
        %v1568 = vpop.f32.mrb[0].mxu0
        %1569 = vdwg.mxu0
        %v1570 = vadd.f32 %v1377, %v1444
        %v1571 = vadd.f32 %v1378, %v1447
        %v1572 = vadd.f32 %v1379, %v1452
        %v1573 = vadd.f32 %v1380, %v1455
        %v1574 = vadd.f32 %v1381, %v1460
        %v1575 = vadd.f32 %v1382, %v1463
        %v1576 = vadd.f32 %v1383, %v1468
        %v1577 = vadd.f32 %v1384, %v1471
        %v1578 = vadd.f32 %v1385, %v1476
        %v1579 = vadd.f32 %v1386, %v1479
        %v1580 = vadd.f32 %v1387, %v1484
        %v1581 = vadd.f32 %v1388, %v1487
        %v1582 = vadd.f32 %v1389, %v1492
        %v1583 = vadd.f32 %v1390, %v1495
        %v1584 = vadd.f32 %v1391, %v1500
        %v1585 = vadd.f32 %v1392, %v1503
        %v1586 = vadd.f32 %v1393, %v1508
        %v1587 = vadd.f32 %v1394, %v1511
        %v1588 = vadd.f32 %v1395, %v1516
        %v1589 = vadd.f32 %v1396, %v1519
        %v1590 = vadd.f32 %v1397, %v1524
        %v1591 = vadd.f32 %v1398, %v1527
        %v1592 = vadd.f32 %v1399, %v1532
        %v1593 = vadd.f32 %v1400, %v1535
        %v1594 = vadd.f32 %v1401, %v1540
        %v1595 = vadd.f32 %v1402, %v1543
        %v1596 = vadd.f32 %v1403, %v1548
        %v1597 = vadd.f32 %v1404, %v1551
        %v1598 = vadd.f32 %v1405, %v1556
        %v1599 = vadd.f32 %v1406, %v1559
        %v1600 = vadd.f32 %v1407, %v1564
        %v1601 = vadd.f32 %v1408, %v1567
        %1602 = vst.msk [vmem:[#allocation3] sm:$0xff] %vm1344, %v1570
        %1603 = vst.msk [vmem:[#allocation3 + $0x8] sm:$0xff] %vm1344, %v1571
        %1604 = vst.msk [vmem:[#allocation3 + $0x10] sm:$0xff] %vm1344, %v1572
        %1605 = vst.msk [vmem:[#allocation3 + $0x18] sm:$0xff] %vm1344, %v1573
        %1606 = vst.msk [vmem:[#allocation3 + $0x20] sm:$0xff] %vm1344, %v1574
        %1607 = vst.msk [vmem:[#allocation3 + $0x28] sm:$0xff] %vm1344, %v1575
        %1608 = vst.msk [vmem:[#allocation3 + $0x30] sm:$0xff] %vm1344, %v1576
        %1609 = vst.msk [vmem:[#allocation3 + $0x38] sm:$0xff] %vm1344, %v1577
        %1610 = vst.msk [vmem:[#allocation3 + $0x40] sm:$0xff] %vm1344, %v1578
        %1611 = vst.msk [vmem:[#allocation3 + $0x48] sm:$0xff] %vm1344, %v1579
        %1612 = vst.msk [vmem:[#allocation3 + $0x50] sm:$0xff] %vm1344, %v1580
        %1613 = vst.msk [vmem:[#allocation3 + $0x58] sm:$0xff] %vm1344, %v1581
        %1614 = vst.msk [vmem:[#allocation3 + $0x60] sm:$0xff] %vm1344, %v1582
        %1615 = vst.msk [vmem:[#allocation3 + $0x68] sm:$0xff] %vm1344, %v1583
        %1616 = vst.msk [vmem:[#allocation3 + $0x70] sm:$0xff] %vm1344, %v1584
        %1617 = vst.msk [vmem:[#allocation3 + $0x78] sm:$0xff] %vm1344, %v1585
        %1618 = vst.msk [vmem:[#allocation3 + $0x80] sm:$0xff] %vm1344, %v1586
        %1619 = vst.msk [vmem:[#allocation3 + $0x88] sm:$0xff] %vm1344, %v1587
        %1620 = vst.msk [vmem:[#allocation3 + $0x90] sm:$0xff] %vm1344, %v1588
        %1621 = vst.msk [vmem:[#allocation3 + $0x98] sm:$0xff] %vm1344, %v1589
        %1622 = vst.msk [vmem:[#allocation3 + $0xa0] sm:$0xff] %vm1344, %v1590
        %1623 = vst.msk [vmem:[#allocation3 + $0xa8] sm:$0xff] %vm1344, %v1591
        %1624 = vst.msk [vmem:[#allocation3 + $0xb0] sm:$0xff] %vm1344, %v1592
        %1625 = vst.msk [vmem:[#allocation3 + $0xb8] sm:$0xff] %vm1344, %v1593
        %1626 = vst.msk [vmem:[#allocation3 + $0xc0] sm:$0xff] %vm1344, %v1594
        %1627 = vst.msk [vmem:[#allocation3 + $0xc8] sm:$0xff] %vm1344, %v1595
        %1628 = vst.msk [vmem:[#allocation3 + $0xd0] sm:$0xff] %vm1344, %v1596
        %1629 = vst.msk [vmem:[#allocation3 + $0xd8] sm:$0xff] %vm1344, %v1597
        %1630 = vst.msk [vmem:[#allocation3 + $0xe0] sm:$0xff] %vm1344, %v1598
        %1631 = vst.msk [vmem:[#allocation3 + $0xe8] sm:$0xff] %vm1344, %v1599
        %1632 = vst.msk [vmem:[#allocation3 + $0xf0] sm:$0xff] %vm1344, %v1600
        %1633 = vst.msk [vmem:[#allocation3 + $0xf8] sm:$0xff] %vm1344, %v1601
        // Predicated region
        $region37: #{tpu_custom_call.1} parent=31 // pred_check
          %p1634 = pneg %p283
        $region38: #{tpu_custom_call.1} parent=31 // pred_check_branch
          %1636 = sbr.rel (%p1634) target = $region40
        $region39: #{tpu_custom_call.1} parent=31 // pred_region
          %s1637 = sld [smem:[#allocation5 + %s29]]
          %s1638 = scvt.s32.f32 %s1637
          %v1639 = vld [vmem:[#allocation2] sm:$0xff]
          %v1640 = vld [vmem:[#allocation2 + $0x8] sm:$0xff]
          %v1641 = vld [vmem:[#allocation2 + $0x10] sm:$0xff]
          %v1642 = vld [vmem:[#allocation2 + $0x18] sm:$0xff]
          %v1643 = vld [vmem:[#allocation2 + $0x20] sm:$0xff]
          %v1644 = vld [vmem:[#allocation2 + $0x28] sm:$0xff]
          %v1645 = vld [vmem:[#allocation2 + $0x30] sm:$0xff]
          %v1646 = vld [vmem:[#allocation2 + $0x38] sm:$0xff]
          %v1647 = vld [vmem:[#allocation2 + $0x40] sm:$0xff]
          %v1648 = vld [vmem:[#allocation2 + $0x48] sm:$0xff]
          %v1649 = vld [vmem:[#allocation2 + $0x50] sm:$0xff]
          %v1650 = vld [vmem:[#allocation2 + $0x58] sm:$0xff]
          %v1651 = vld [vmem:[#allocation2 + $0x60] sm:$0xff]
          %v1652 = vld [vmem:[#allocation2 + $0x68] sm:$0xff]
          %v1653 = vld [vmem:[#allocation2 + $0x70] sm:$0xff]
          %v1654 = vld [vmem:[#allocation2 + $0x78] sm:$0xff]
          %v1655 = vld [vmem:[#allocation2 + $0x80] sm:$0xff]
          %v1656 = vld [vmem:[#allocation2 + $0x88] sm:$0xff]
          %v1657 = vld [vmem:[#allocation2 + $0x90] sm:$0xff]
          %v1658 = vld [vmem:[#allocation2 + $0x98] sm:$0xff]
          %v1659 = vld [vmem:[#allocation2 + $0xa0] sm:$0xff]
          %v1660 = vld [vmem:[#allocation2 + $0xa8] sm:$0xff]
          %v1661 = vld [vmem:[#allocation2 + $0xb0] sm:$0xff]
          %v1662 = vld [vmem:[#allocation2 + $0xb8] sm:$0xff]
          %v1663 = vld [vmem:[#allocation2 + $0xc0] sm:$0xff]
          %v1664 = vld [vmem:[#allocation2 + $0xc8] sm:$0xff]
          %v1665 = vld [vmem:[#allocation2 + $0xd0] sm:$0xff]
          %v1666 = vld [vmem:[#allocation2 + $0xd8] sm:$0xff]
          %v1667 = vld [vmem:[#allocation2 + $0xe0] sm:$0xff]
          %v1668 = vld [vmem:[#allocation2 + $0xe8] sm:$0xff]
          %v1669 = vld [vmem:[#allocation2 + $0xf0] sm:$0xff]
          %v1670 = vld [vmem:[#allocation2 + $0xf8] sm:$0xff]
          %v1671 = vld [vmem:[#allocation3] sm:$0xff]
          %v1672 = vld [vmem:[#allocation3 + $0x8] sm:$0xff]
          %v1673 = vld [vmem:[#allocation3 + $0x10] sm:$0xff]
          %v1674 = vld [vmem:[#allocation3 + $0x18] sm:$0xff]
          %v1675 = vld [vmem:[#allocation3 + $0x20] sm:$0xff]
          %v1676 = vld [vmem:[#allocation3 + $0x28] sm:$0xff]
          %v1677 = vld [vmem:[#allocation3 + $0x30] sm:$0xff]
          %v1678 = vld [vmem:[#allocation3 + $0x38] sm:$0xff]
          %v1679 = vld [vmem:[#allocation3 + $0x40] sm:$0xff]
          %v1680 = vld [vmem:[#allocation3 + $0x48] sm:$0xff]
          %v1681 = vld [vmem:[#allocation3 + $0x50] sm:$0xff]
          %v1682 = vld [vmem:[#allocation3 + $0x58] sm:$0xff]
          %v1683 = vld [vmem:[#allocation3 + $0x60] sm:$0xff]
          %v1684 = vld [vmem:[#allocation3 + $0x68] sm:$0xff]
          %v1685 = vld [vmem:[#allocation3 + $0x70] sm:$0xff]
          %v1686 = vld [vmem:[#allocation3 + $0x78] sm:$0xff]
          %v1687 = vld [vmem:[#allocation3 + $0x80] sm:$0xff]
          %v1688 = vld [vmem:[#allocation3 + $0x88] sm:$0xff]
          %v1689 = vld [vmem:[#allocation3 + $0x90] sm:$0xff]
          %v1690 = vld [vmem:[#allocation3 + $0x98] sm:$0xff]
          %v1691 = vld [vmem:[#allocation3 + $0xa0] sm:$0xff]
          %v1692 = vld [vmem:[#allocation3 + $0xa8] sm:$0xff]
          %v1693 = vld [vmem:[#allocation3 + $0xb0] sm:$0xff]
          %v1694 = vld [vmem:[#allocation3 + $0xb8] sm:$0xff]
          %v1695 = vld [vmem:[#allocation3 + $0xc0] sm:$0xff]
          %v1696 = vld [vmem:[#allocation3 + $0xc8] sm:$0xff]
          %v1697 = vld [vmem:[#allocation3 + $0xd0] sm:$0xff]
          %v1698 = vld [vmem:[#allocation3 + $0xd8] sm:$0xff]
          %v1699 = vld [vmem:[#allocation3 + $0xe0] sm:$0xff]
          %v1700 = vld [vmem:[#allocation3 + $0xe8] sm:$0xff]
          %v1701 = vld [vmem:[#allocation3 + $0xf0] sm:$0xff]
          %v1702 = vld [vmem:[#allocation3 + $0xf8] sm:$0xff]
          %v1703 = vstv %s1638
          %v1704 = vsub.f32 %v1703, %v1639
          %v1705 = vsub.f32 %v1703, %v1640
          %v1706 = vsub.f32 %v1703, %v1641
          %v1707 = vsub.f32 %v1703, %v1642
          %v1708 = vsub.f32 %v1703, %v1643
          %v1709 = vsub.f32 %v1703, %v1644
          %v1710 = vsub.f32 %v1703, %v1645
          %v1711 = vsub.f32 %v1703, %v1646
          %v1712 = vsub.f32 %v1703, %v1647
          %v1713 = vsub.f32 %v1703, %v1648
          %v1714 = vsub.f32 %v1703, %v1649
          %v1715 = vsub.f32 %v1703, %v1650
          %v1716 = vsub.f32 %v1703, %v1651
          %v1717 = vsub.f32 %v1703, %v1652
          %v1718 = vsub.f32 %v1703, %v1653
          %v1719 = vsub.f32 %v1703, %v1654
          %v1720 = vsub.f32 %v1703, %v1655
          %v1721 = vsub.f32 %v1703, %v1656
          %v1722 = vsub.f32 %v1703, %v1657
          %v1723 = vsub.f32 %v1703, %v1658
          %v1724 = vsub.f32 %v1703, %v1659
          %v1725 = vsub.f32 %v1703, %v1660
          %v1726 = vsub.f32 %v1703, %v1661
          %v1727 = vsub.f32 %v1703, %v1662
          %v1728 = vsub.f32 %v1703, %v1663
          %v1729 = vsub.f32 %v1703, %v1664
          %v1730 = vsub.f32 %v1703, %v1665
          %v1731 = vsub.f32 %v1703, %v1666
          %v1732 = vsub.f32 %v1703, %v1667
          %v1733 = vsub.f32 %v1703, %v1668
          %v1734 = vsub.f32 %v1703, %v1669
          %v1735 = vsub.f32 %v1703, %v1670
          %v1736 = vadd.f32 %v1703, %v1639
          %v1737 = vadd.f32 %v1703, %v1640
          %v1738 = vadd.f32 %v1703, %v1641
          %v1739 = vadd.f32 %v1703, %v1642
          %v1740 = vadd.f32 %v1703, %v1643
          %v1741 = vadd.f32 %v1703, %v1644
          %v1742 = vadd.f32 %v1703, %v1645
          %v1743 = vadd.f32 %v1703, %v1646
          %v1744 = vadd.f32 %v1703, %v1647
          %v1745 = vadd.f32 %v1703, %v1648
          %v1746 = vadd.f32 %v1703, %v1649
          %v1747 = vadd.f32 %v1703, %v1650
          %v1748 = vadd.f32 %v1703, %v1651
          %v1749 = vadd.f32 %v1703, %v1652
          %v1750 = vadd.f32 %v1703, %v1653
          %v1751 = vadd.f32 %v1703, %v1654
          %v1752 = vadd.f32 %v1703, %v1655
          %v1753 = vadd.f32 %v1703, %v1656
          %v1754 = vadd.f32 %v1703, %v1657
          %v1755 = vadd.f32 %v1703, %v1658
          %v1756 = vadd.f32 %v1703, %v1659
          %v1757 = vadd.f32 %v1703, %v1660
          %v1758 = vadd.f32 %v1703, %v1661
          %v1759 = vadd.f32 %v1703, %v1662
          %v1760 = vadd.f32 %v1703, %v1663
          %v1761 = vadd.f32 %v1703, %v1664
          %v1762 = vadd.f32 %v1703, %v1665
          %v1763 = vadd.f32 %v1703, %v1666
          %v1764 = vadd.f32 %v1703, %v1667
          %v1765 = vadd.f32 %v1703, %v1668
          %v1766 = vadd.f32 %v1703, %v1669
          %v1767 = vadd.f32 %v1703, %v1670
          %1800 = vrot.lane.b32.xlu0 %v1639, 127
          %v1801 = vpop.permute.xlu0 %1800
          %1802 = vrot.lane.b32.xlu0 %v1640, 127
          %v1803 = vpop.permute.xlu0 %1802
          %1804 = vrot.lane.b32.xlu0 %v1641, 127
          %v1805 = vpop.permute.xlu0 %1804
          %1806 = vrot.lane.b32.xlu0 %v1642, 127
          %v1807 = vpop.permute.xlu0 %1806
          %1808 = vrot.lane.b32.xlu0 %v1643, 127
          %v1809 = vpop.permute.xlu0 %1808
          %1810 = vrot.lane.b32.xlu0 %v1644, 127
          %v1811 = vpop.permute.xlu0 %1810
          %1812 = vrot.lane.b32.xlu0 %v1645, 127
          %v1813 = vpop.permute.xlu0 %1812
          %1814 = vrot.lane.b32.xlu0 %v1646, 127
          %v1815 = vpop.permute.xlu0 %1814
          %1816 = vrot.lane.b32.xlu0 %v1647, 127
          %v1817 = vpop.permute.xlu0 %1816
          %1818 = vrot.lane.b32.xlu0 %v1648, 127
          %v1819 = vpop.permute.xlu0 %1818
          %1820 = vrot.lane.b32.xlu0 %v1649, 127
          %v1821 = vpop.permute.xlu0 %1820
          %1822 = vrot.lane.b32.xlu0 %v1650, 127
          %v1823 = vpop.permute.xlu0 %1822
          %1824 = vrot.lane.b32.xlu0 %v1651, 127
          %v1825 = vpop.permute.xlu0 %1824
          %1826 = vrot.lane.b32.xlu0 %v1652, 127
          %v1827 = vpop.permute.xlu0 %1826
          %1828 = vrot.lane.b32.xlu0 %v1653, 127
          %v1829 = vpop.permute.xlu0 %1828
          %1830 = vrot.lane.b32.xlu0 %v1654, 127
          %v1831 = vpop.permute.xlu0 %1830
          %1832 = vrot.lane.b32.xlu0 %v1655, 127
          %v1833 = vpop.permute.xlu0 %1832
          %1834 = vrot.lane.b32.xlu0 %v1656, 127
          %v1835 = vpop.permute.xlu0 %1834
          %1836 = vrot.lane.b32.xlu0 %v1657, 127
          %v1837 = vpop.permute.xlu0 %1836
          %1838 = vrot.lane.b32.xlu0 %v1658, 127
          %v1839 = vpop.permute.xlu0 %1838
          %1840 = vrot.lane.b32.xlu0 %v1659, 127
          %v1841 = vpop.permute.xlu0 %1840
          %1842 = vrot.lane.b32.xlu0 %v1660, 127
          %v1843 = vpop.permute.xlu0 %1842
          %1844 = vrot.lane.b32.xlu0 %v1661, 127
          %v1845 = vpop.permute.xlu0 %1844
          %1846 = vrot.lane.b32.xlu0 %v1662, 127
          %v1847 = vpop.permute.xlu0 %1846
          %1848 = vrot.lane.b32.xlu0 %v1663, 127
          %v1849 = vpop.permute.xlu0 %1848
          %1850 = vrot.lane.b32.xlu0 %v1664, 127
          %v1851 = vpop.permute.xlu0 %1850
          %1852 = vrot.lane.b32.xlu0 %v1665, 127
          %v1853 = vpop.permute.xlu0 %1852
          %1854 = vrot.lane.b32.xlu0 %v1666, 127
          %v1855 = vpop.permute.xlu0 %1854
          %1856 = vrot.lane.b32.xlu0 %v1667, 127
          %v1857 = vpop.permute.xlu0 %1856
          %1858 = vrot.lane.b32.xlu0 %v1668, 127
          %v1859 = vpop.permute.xlu0 %1858
          %1860 = vrot.lane.b32.xlu0 %v1669, 127
          %v1861 = vpop.permute.xlu0 %1860
          %1862 = vrot.lane.b32.xlu0 %v1670, 127
          %v1863 = vpop.permute.xlu0 %1862
          %v1896 = vsub.f32 %v1736, %v1801
          %v1897 = vsub.f32 %v1737, %v1803
          %v1898 = vsub.f32 %v1738, %v1805
          %v1899 = vsub.f32 %v1739, %v1807
          %v1900 = vsub.f32 %v1740, %v1809
          %v1901 = vsub.f32 %v1741, %v1811
          %v1902 = vsub.f32 %v1742, %v1813
          %v1903 = vsub.f32 %v1743, %v1815
          %v1904 = vsub.f32 %v1744, %v1817
          %v1905 = vsub.f32 %v1745, %v1819
          %v1906 = vsub.f32 %v1746, %v1821
          %v1907 = vsub.f32 %v1747, %v1823
          %v1908 = vsub.f32 %v1748, %v1825
          %v1909 = vsub.f32 %v1749, %v1827
          %v1910 = vsub.f32 %v1750, %v1829
          %v1911 = vsub.f32 %v1751, %v1831
          %v1912 = vsub.f32 %v1752, %v1833
          %v1913 = vsub.f32 %v1753, %v1835
          %v1914 = vsub.f32 %v1754, %v1837
          %v1915 = vsub.f32 %v1755, %v1839
          %v1916 = vsub.f32 %v1756, %v1841
          %v1917 = vsub.f32 %v1757, %v1843
          %v1918 = vsub.f32 %v1758, %v1845
          %v1919 = vsub.f32 %v1759, %v1847
          %v1920 = vsub.f32 %v1760, %v1849
          %v1921 = vsub.f32 %v1761, %v1851
          %v1922 = vsub.f32 %v1762, %v1853
          %v1923 = vsub.f32 %v1763, %v1855
          %v1924 = vsub.f32 %v1764, %v1857
          %v1925 = vsub.f32 %v1765, %v1859
          %v1926 = vsub.f32 %v1766, %v1861
          %v1927 = vsub.f32 %v1767, %v1863
          %1960 = vrot.lane.b32.xlu0 %v1896, 1
          %v1961 = vpop.permute.xlu0 %1960
          %1962 = vrot.lane.b32.xlu0 %v1897, 1
          %v1963 = vpop.permute.xlu0 %1962
          %1964 = vrot.lane.b32.xlu0 %v1898, 1
          %v1965 = vpop.permute.xlu0 %1964
          %1966 = vrot.lane.b32.xlu0 %v1899, 1
          %v1967 = vpop.permute.xlu0 %1966
          %1968 = vrot.lane.b32.xlu0 %v1900, 1
          %v1969 = vpop.permute.xlu0 %1968
          %1970 = vrot.lane.b32.xlu0 %v1901, 1
          %v1971 = vpop.permute.xlu0 %1970
          %1972 = vrot.lane.b32.xlu0 %v1902, 1
          %v1973 = vpop.permute.xlu0 %1972
          %1974 = vrot.lane.b32.xlu0 %v1903, 1
          %v1975 = vpop.permute.xlu0 %1974
          %1976 = vrot.lane.b32.xlu0 %v1904, 1
          %v1977 = vpop.permute.xlu0 %1976
          %1978 = vrot.lane.b32.xlu0 %v1905, 1
          %v1979 = vpop.permute.xlu0 %1978
          %1980 = vrot.lane.b32.xlu0 %v1906, 1
          %v1981 = vpop.permute.xlu0 %1980
          %1982 = vrot.lane.b32.xlu0 %v1907, 1
          %v1983 = vpop.permute.xlu0 %1982
          %1984 = vrot.lane.b32.xlu0 %v1908, 1
          %v1985 = vpop.permute.xlu0 %1984
          %1986 = vrot.lane.b32.xlu0 %v1909, 1
          %v1987 = vpop.permute.xlu0 %1986
          %1988 = vrot.lane.b32.xlu0 %v1910, 1
          %v1989 = vpop.permute.xlu0 %1988
          %1990 = vrot.lane.b32.xlu0 %v1911, 1
          %v1991 = vpop.permute.xlu0 %1990
          %1992 = vrot.lane.b32.xlu0 %v1912, 1
          %v1993 = vpop.permute.xlu0 %1992
          %1994 = vrot.lane.b32.xlu0 %v1913, 1
          %v1995 = vpop.permute.xlu0 %1994
          %1996 = vrot.lane.b32.xlu0 %v1914, 1
          %v1997 = vpop.permute.xlu0 %1996
          %1998 = vrot.lane.b32.xlu0 %v1915, 1
          %v1999 = vpop.permute.xlu0 %1998
          %2000 = vrot.lane.b32.xlu0 %v1916, 1
          %v2001 = vpop.permute.xlu0 %2000
          %2002 = vrot.lane.b32.xlu0 %v1917, 1
          %v2003 = vpop.permute.xlu0 %2002
          %2004 = vrot.lane.b32.xlu0 %v1918, 1
          %v2005 = vpop.permute.xlu0 %2004
          %2006 = vrot.lane.b32.xlu0 %v1919, 1
          %v2007 = vpop.permute.xlu0 %2006
          %2008 = vrot.lane.b32.xlu0 %v1920, 1
          %v2009 = vpop.permute.xlu0 %2008
          %2010 = vrot.lane.b32.xlu0 %v1921, 1
          %v2011 = vpop.permute.xlu0 %2010
          %2012 = vrot.lane.b32.xlu0 %v1922, 1
          %v2013 = vpop.permute.xlu0 %2012
          %2014 = vrot.lane.b32.xlu0 %v1923, 1
          %v2015 = vpop.permute.xlu0 %2014
          %2016 = vrot.lane.b32.xlu0 %v1924, 1
          %v2017 = vpop.permute.xlu0 %2016
          %2018 = vrot.lane.b32.xlu0 %v1925, 1
          %v2019 = vpop.permute.xlu0 %2018
          %2020 = vrot.lane.b32.xlu0 %v1926, 1
          %v2021 = vpop.permute.xlu0 %2020
          %2022 = vrot.lane.b32.xlu0 %v1927, 1
          %v2023 = vpop.permute.xlu0 %2022
          %v2056 = vrcp.pop %v1961
          %v2057 = vmul.f32 %v1704, %v2056
          %v2058 = vrcp.pop %v1963
          %v2059 = vmul.f32 %v1705, %v2058
          %v2060 = vrcp.pop %v1965
          %v2061 = vmul.f32 %v1706, %v2060
          %v2062 = vrcp.pop %v1967
          %v2063 = vmul.f32 %v1707, %v2062
          %v2064 = vrcp.pop %v1969
          %v2065 = vmul.f32 %v1708, %v2064
          %v2066 = vrcp.pop %v1971
          %v2067 = vmul.f32 %v1709, %v2066
          %v2068 = vrcp.pop %v1973
          %v2069 = vmul.f32 %v1710, %v2068
          %v2070 = vrcp.pop %v1975
          %v2071 = vmul.f32 %v1711, %v2070
          %v2072 = vrcp.pop %v1977
          %v2073 = vmul.f32 %v1712, %v2072
          %v2074 = vrcp.pop %v1979
          %v2075 = vmul.f32 %v1713, %v2074
          %v2076 = vrcp.pop %v1981
          %v2077 = vmul.f32 %v1714, %v2076
          %v2078 = vrcp.pop %v1983
          %v2079 = vmul.f32 %v1715, %v2078
          %v2080 = vrcp.pop %v1985
          %v2081 = vmul.f32 %v1716, %v2080
          %v2082 = vrcp.pop %v1987
          %v2083 = vmul.f32 %v1717, %v2082
          %v2084 = vrcp.pop %v1989
          %v2085 = vmul.f32 %v1718, %v2084
          %v2086 = vrcp.pop %v1991
          %v2087 = vmul.f32 %v1719, %v2086
          %v2088 = vrcp.pop %v1993
          %v2089 = vmul.f32 %v1720, %v2088
          %v2090 = vrcp.pop %v1995
          %v2091 = vmul.f32 %v1721, %v2090
          %v2092 = vrcp.pop %v1997
          %v2093 = vmul.f32 %v1722, %v2092
          %v2094 = vrcp.pop %v1999
          %v2095 = vmul.f32 %v1723, %v2094
          %v2096 = vrcp.pop %v2001
          %v2097 = vmul.f32 %v1724, %v2096
          %v2098 = vrcp.pop %v2003
          %v2099 = vmul.f32 %v1725, %v2098
          %v2100 = vrcp.pop %v2005
          %v2101 = vmul.f32 %v1726, %v2100
          %v2102 = vrcp.pop %v2007
          %v2103 = vmul.f32 %v1727, %v2102
          %v2104 = vrcp.pop %v2009
          %v2105 = vmul.f32 %v1728, %v2104
          %v2106 = vrcp.pop %v2011
          %v2107 = vmul.f32 %v1729, %v2106
          %v2108 = vrcp.pop %v2013
          %v2109 = vmul.f32 %v1730, %v2108
          %v2110 = vrcp.pop %v2015
          %v2111 = vmul.f32 %v1731, %v2110
          %v2112 = vrcp.pop %v2017
          %v2113 = vmul.f32 %v1732, %v2112
          %v2114 = vrcp.pop %v2019
          %v2115 = vmul.f32 %v1733, %v2114
          %v2116 = vrcp.pop %v2021
          %v2117 = vmul.f32 %v1734, %v2116
          %v2118 = vrcp.pop %v2023
          %v2119 = vmul.f32 %v1735, %v2118
          %v2120 = vsub.f32 1.0, %v2057
          %v2121 = vsub.f32 1.0, %v2059
          %v2122 = vsub.f32 1.0, %v2061
          %v2123 = vsub.f32 1.0, %v2063
          %v2124 = vsub.f32 1.0, %v2065
          %v2125 = vsub.f32 1.0, %v2067
          %v2126 = vsub.f32 1.0, %v2069
          %v2127 = vsub.f32 1.0, %v2071
          %v2128 = vsub.f32 1.0, %v2073
          %v2129 = vsub.f32 1.0, %v2075
          %v2130 = vsub.f32 1.0, %v2077
          %v2131 = vsub.f32 1.0, %v2079
          %v2132 = vsub.f32 1.0, %v2081
          %v2133 = vsub.f32 1.0, %v2083
          %v2134 = vsub.f32 1.0, %v2085
          %v2135 = vsub.f32 1.0, %v2087
          %v2136 = vsub.f32 1.0, %v2089
          %v2137 = vsub.f32 1.0, %v2091
          %v2138 = vsub.f32 1.0, %v2093
          %v2139 = vsub.f32 1.0, %v2095
          %v2140 = vsub.f32 1.0, %v2097
          %v2141 = vsub.f32 1.0, %v2099
          %v2142 = vsub.f32 1.0, %v2101
          %v2143 = vsub.f32 1.0, %v2103
          %v2144 = vsub.f32 1.0, %v2105
          %v2145 = vsub.f32 1.0, %v2107
          %v2146 = vsub.f32 1.0, %v2109
          %v2147 = vsub.f32 1.0, %v2111
          %v2148 = vsub.f32 1.0, %v2113
          %v2149 = vsub.f32 1.0, %v2115
          %v2150 = vsub.f32 1.0, %v2117
          %v2151 = vsub.f32 1.0, %v2119
          %vm2152 = vcmp.gt.f32.partialorder %v1671, 0.5
          %vm2153 = vcmp.gt.f32.partialorder %v1672, 0.5
          %vm2154 = vcmp.gt.f32.partialorder %v1673, 0.5
          %vm2155 = vcmp.gt.f32.partialorder %v1674, 0.5
          %vm2156 = vcmp.gt.f32.partialorder %v1675, 0.5
          %vm2157 = vcmp.gt.f32.partialorder %v1676, 0.5
          %vm2158 = vcmp.gt.f32.partialorder %v1677, 0.5
          %vm2159 = vcmp.gt.f32.partialorder %v1678, 0.5
          %vm2160 = vcmp.gt.f32.partialorder %v1679, 0.5
          %vm2161 = vcmp.gt.f32.partialorder %v1680, 0.5
          %vm2162 = vcmp.gt.f32.partialorder %v1681, 0.5
          %vm2163 = vcmp.gt.f32.partialorder %v1682, 0.5
          %vm2164 = vcmp.gt.f32.partialorder %v1683, 0.5
          %vm2165 = vcmp.gt.f32.partialorder %v1684, 0.5
          %vm2166 = vcmp.gt.f32.partialorder %v1685, 0.5
          %vm2167 = vcmp.gt.f32.partialorder %v1686, 0.5
          %vm2168 = vcmp.gt.f32.partialorder %v1687, 0.5
          %vm2169 = vcmp.gt.f32.partialorder %v1688, 0.5
          %vm2170 = vcmp.gt.f32.partialorder %v1689, 0.5
          %vm2171 = vcmp.gt.f32.partialorder %v1690, 0.5
          %vm2172 = vcmp.gt.f32.partialorder %v1691, 0.5
          %vm2173 = vcmp.gt.f32.partialorder %v1692, 0.5
          %vm2174 = vcmp.gt.f32.partialorder %v1693, 0.5
          %vm2175 = vcmp.gt.f32.partialorder %v1694, 0.5
          %vm2176 = vcmp.gt.f32.partialorder %v1695, 0.5
          %vm2177 = vcmp.gt.f32.partialorder %v1696, 0.5
          %vm2178 = vcmp.gt.f32.partialorder %v1697, 0.5
          %vm2179 = vcmp.gt.f32.partialorder %v1698, 0.5
          %vm2180 = vcmp.gt.f32.partialorder %v1699, 0.5
          %vm2181 = vcmp.gt.f32.partialorder %v1700, 0.5
          %vm2182 = vcmp.gt.f32.partialorder %v1701, 0.5
          %vm2183 = vcmp.gt.f32.partialorder %v1702, 0.5
          %v2184 = vadd.f32 %v1703, %v1671
          %v2185 = vadd.f32 %v1703, %v1672
          %v2186 = vadd.f32 %v1703, %v1673
          %v2187 = vadd.f32 %v1703, %v1674
          %v2188 = vadd.f32 %v1703, %v1675
          %v2189 = vadd.f32 %v1703, %v1676
          %v2190 = vadd.f32 %v1703, %v1677
          %v2191 = vadd.f32 %v1703, %v1678
          %v2192 = vadd.f32 %v1703, %v1679
          %v2193 = vadd.f32 %v1703, %v1680
          %v2194 = vadd.f32 %v1703, %v1681
          %v2195 = vadd.f32 %v1703, %v1682
          %v2196 = vadd.f32 %v1703, %v1683
          %v2197 = vadd.f32 %v1703, %v1684
          %v2198 = vadd.f32 %v1703, %v1685
          %v2199 = vadd.f32 %v1703, %v1686
          %v2200 = vadd.f32 %v1703, %v1687
          %v2201 = vadd.f32 %v1703, %v1688
          %v2202 = vadd.f32 %v1703, %v1689
          %v2203 = vadd.f32 %v1703, %v1690
          %v2204 = vadd.f32 %v1703, %v1691
          %v2205 = vadd.f32 %v1703, %v1692
          %v2206 = vadd.f32 %v1703, %v1693
          %v2207 = vadd.f32 %v1703, %v1694
          %v2208 = vadd.f32 %v1703, %v1695
          %v2209 = vadd.f32 %v1703, %v1696
          %v2210 = vadd.f32 %v1703, %v1697
          %v2211 = vadd.f32 %v1703, %v1698
          %v2212 = vadd.f32 %v1703, %v1699
          %v2213 = vadd.f32 %v1703, %v1700
          %v2214 = vadd.f32 %v1703, %v1701
          %v2215 = vadd.f32 %v1703, %v1702
          %2248 = vrot.lane.b32.xlu0 %v1671, 127
          %v2249 = vpop.permute.xlu0 %2248
          %2250 = vrot.lane.b32.xlu0 %v1672, 127
          %v2251 = vpop.permute.xlu0 %2250
          %2252 = vrot.lane.b32.xlu0 %v1673, 127
          %v2253 = vpop.permute.xlu0 %2252
          %2254 = vrot.lane.b32.xlu0 %v1674, 127
          %v2255 = vpop.permute.xlu0 %2254
          %2256 = vrot.lane.b32.xlu0 %v1675, 127
          %v2257 = vpop.permute.xlu0 %2256
          %2258 = vrot.lane.b32.xlu0 %v1676, 127
          %v2259 = vpop.permute.xlu0 %2258
          %2260 = vrot.lane.b32.xlu0 %v1677, 127
          %v2261 = vpop.permute.xlu0 %2260
          %2262 = vrot.lane.b32.xlu0 %v1678, 127
          %v2263 = vpop.permute.xlu0 %2262
          %2264 = vrot.lane.b32.xlu0 %v1679, 127
          %v2265 = vpop.permute.xlu0 %2264
          %2266 = vrot.lane.b32.xlu0 %v1680, 127
          %v2267 = vpop.permute.xlu0 %2266
          %2268 = vrot.lane.b32.xlu0 %v1681, 127
          %v2269 = vpop.permute.xlu0 %2268
          %2270 = vrot.lane.b32.xlu0 %v1682, 127
          %v2271 = vpop.permute.xlu0 %2270
          %2272 = vrot.lane.b32.xlu0 %v1683, 127
          %v2273 = vpop.permute.xlu0 %2272
          %2274 = vrot.lane.b32.xlu0 %v1684, 127
          %v2275 = vpop.permute.xlu0 %2274
          %2276 = vrot.lane.b32.xlu0 %v1685, 127
          %v2277 = vpop.permute.xlu0 %2276
          %2278 = vrot.lane.b32.xlu0 %v1686, 127
          %v2279 = vpop.permute.xlu0 %2278
          %2280 = vrot.lane.b32.xlu0 %v1687, 127
          %v2281 = vpop.permute.xlu0 %2280
          %2282 = vrot.lane.b32.xlu0 %v1688, 127
          %v2283 = vpop.permute.xlu0 %2282
          %2284 = vrot.lane.b32.xlu0 %v1689, 127
          %v2285 = vpop.permute.xlu0 %2284
          %2286 = vrot.lane.b32.xlu0 %v1690, 127
          %v2287 = vpop.permute.xlu0 %2286
          %2288 = vrot.lane.b32.xlu0 %v1691, 127
          %v2289 = vpop.permute.xlu0 %2288
          %2290 = vrot.lane.b32.xlu0 %v1692, 127
          %v2291 = vpop.permute.xlu0 %2290
          %2292 = vrot.lane.b32.xlu0 %v1693, 127
          %v2293 = vpop.permute.xlu0 %2292
          %2294 = vrot.lane.b32.xlu0 %v1694, 127
          %v2295 = vpop.permute.xlu0 %2294
          %2296 = vrot.lane.b32.xlu0 %v1695, 127
          %v2297 = vpop.permute.xlu0 %2296
          %2298 = vrot.lane.b32.xlu0 %v1696, 127
          %v2299 = vpop.permute.xlu0 %2298
          %2300 = vrot.lane.b32.xlu0 %v1697, 127
          %v2301 = vpop.permute.xlu0 %2300
          %2302 = vrot.lane.b32.xlu0 %v1698, 127
          %v2303 = vpop.permute.xlu0 %2302
          %2304 = vrot.lane.b32.xlu0 %v1699, 127
          %v2305 = vpop.permute.xlu0 %2304
          %2306 = vrot.lane.b32.xlu0 %v1700, 127
          %v2307 = vpop.permute.xlu0 %2306
          %2308 = vrot.lane.b32.xlu0 %v1701, 127
          %v2309 = vpop.permute.xlu0 %2308
          %2310 = vrot.lane.b32.xlu0 %v1702, 127
          %v2311 = vpop.permute.xlu0 %2310
          %v2344 = vsub.f32 %v2184, %v2249
          %v2345 = vsub.f32 %v2185, %v2251
          %v2346 = vsub.f32 %v2186, %v2253
          %v2347 = vsub.f32 %v2187, %v2255
          %v2348 = vsub.f32 %v2188, %v2257
          %v2349 = vsub.f32 %v2189, %v2259
          %v2350 = vsub.f32 %v2190, %v2261
          %v2351 = vsub.f32 %v2191, %v2263
          %v2352 = vsub.f32 %v2192, %v2265
          %v2353 = vsub.f32 %v2193, %v2267
          %v2354 = vsub.f32 %v2194, %v2269
          %v2355 = vsub.f32 %v2195, %v2271
          %v2356 = vsub.f32 %v2196, %v2273
          %v2357 = vsub.f32 %v2197, %v2275
          %v2358 = vsub.f32 %v2198, %v2277
          %v2359 = vsub.f32 %v2199, %v2279
          %v2360 = vsub.f32 %v2200, %v2281
          %v2361 = vsub.f32 %v2201, %v2283
          %v2362 = vsub.f32 %v2202, %v2285
          %v2363 = vsub.f32 %v2203, %v2287
          %v2364 = vsub.f32 %v2204, %v2289
          %v2365 = vsub.f32 %v2205, %v2291
          %v2366 = vsub.f32 %v2206, %v2293
          %v2367 = vsub.f32 %v2207, %v2295
          %v2368 = vsub.f32 %v2208, %v2297
          %v2369 = vsub.f32 %v2209, %v2299
          %v2370 = vsub.f32 %v2210, %v2301
          %v2371 = vsub.f32 %v2211, %v2303
          %v2372 = vsub.f32 %v2212, %v2305
          %v2373 = vsub.f32 %v2213, %v2307
          %v2374 = vsub.f32 %v2214, %v2309
          %v2375 = vsub.f32 %v2215, %v2311
          %v2376 = vsel %vm2152, %v2344, 1.0
          %v2377 = vsel %vm2153, %v2345, 1.0
          %v2378 = vsel %vm2154, %v2346, 1.0
          %v2379 = vsel %vm2155, %v2347, 1.0
          %v2380 = vsel %vm2156, %v2348, 1.0
          %v2381 = vsel %vm2157, %v2349, 1.0
          %v2382 = vsel %vm2158, %v2350, 1.0
          %v2383 = vsel %vm2159, %v2351, 1.0
          %v2384 = vsel %vm2160, %v2352, 1.0
          %v2385 = vsel %vm2161, %v2353, 1.0
          %v2386 = vsel %vm2162, %v2354, 1.0
          %v2387 = vsel %vm2163, %v2355, 1.0
          %v2388 = vsel %vm2164, %v2356, 1.0
          %v2389 = vsel %vm2165, %v2357, 1.0
          %v2390 = vsel %vm2166, %v2358, 1.0
          %v2391 = vsel %vm2167, %v2359, 1.0
          %v2392 = vsel %vm2168, %v2360, 1.0
          %v2393 = vsel %vm2169, %v2361, 1.0
          %v2394 = vsel %vm2170, %v2362, 1.0
          %v2395 = vsel %vm2171, %v2363, 1.0
          %v2396 = vsel %vm2172, %v2364, 1.0
          %v2397 = vsel %vm2173, %v2365, 1.0
          %v2398 = vsel %vm2174, %v2366, 1.0
          %v2399 = vsel %vm2175, %v2367, 1.0
          %v2400 = vsel %vm2176, %v2368, 1.0
          %v2401 = vsel %vm2177, %v2369, 1.0
          %v2402 = vsel %vm2178, %v2370, 1.0
          %v2403 = vsel %vm2179, %v2371, 1.0
          %v2404 = vsel %vm2180, %v2372, 1.0
          %v2405 = vsel %vm2181, %v2373, 1.0
          %v2406 = vsel %vm2182, %v2374, 1.0
          %v2407 = vsel %vm2183, %v2375, 1.0
          %v2408 = vsub.f32 %v1703, %v1671
          %v2409 = vsub.f32 %v1703, %v1672
          %v2410 = vsub.f32 %v1703, %v1673
          %v2411 = vsub.f32 %v1703, %v1674
          %v2412 = vsub.f32 %v1703, %v1675
          %v2413 = vsub.f32 %v1703, %v1676
          %v2414 = vsub.f32 %v1703, %v1677
          %v2415 = vsub.f32 %v1703, %v1678
          %v2416 = vsub.f32 %v1703, %v1679
          %v2417 = vsub.f32 %v1703, %v1680
          %v2418 = vsub.f32 %v1703, %v1681
          %v2419 = vsub.f32 %v1703, %v1682
          %v2420 = vsub.f32 %v1703, %v1683
          %v2421 = vsub.f32 %v1703, %v1684
          %v2422 = vsub.f32 %v1703, %v1685
          %v2423 = vsub.f32 %v1703, %v1686
          %v2424 = vsub.f32 %v1703, %v1687
          %v2425 = vsub.f32 %v1703, %v1688
          %v2426 = vsub.f32 %v1703, %v1689
          %v2427 = vsub.f32 %v1703, %v1690
          %v2428 = vsub.f32 %v1703, %v1691
          %v2429 = vsub.f32 %v1703, %v1692
          %v2430 = vsub.f32 %v1703, %v1693
          %v2431 = vsub.f32 %v1703, %v1694
          %v2432 = vsub.f32 %v1703, %v1695
          %v2433 = vsub.f32 %v1703, %v1696
          %v2434 = vsub.f32 %v1703, %v1697
          %v2435 = vsub.f32 %v1703, %v1698
          %v2436 = vsub.f32 %v1703, %v1699
          %v2437 = vsub.f32 %v1703, %v1700
          %v2438 = vsub.f32 %v1703, %v1701
          %v2439 = vsub.f32 %v1703, %v1702
          %2472 = vrot.lane.b32.xlu0 %v2376, 1
          %v2473 = vpop.permute.xlu0 %2472
          %2474 = vrot.lane.b32.xlu0 %v2377, 1
          %v2475 = vpop.permute.xlu0 %2474
          %2476 = vrot.lane.b32.xlu0 %v2378, 1
          %v2477 = vpop.permute.xlu0 %2476
          %2478 = vrot.lane.b32.xlu0 %v2379, 1
          %v2479 = vpop.permute.xlu0 %2478
          %2480 = vrot.lane.b32.xlu0 %v2380, 1
          %v2481 = vpop.permute.xlu0 %2480
          %2482 = vrot.lane.b32.xlu0 %v2381, 1
          %v2483 = vpop.permute.xlu0 %2482
          %2484 = vrot.lane.b32.xlu0 %v2382, 1
          %v2485 = vpop.permute.xlu0 %2484
          %2486 = vrot.lane.b32.xlu0 %v2383, 1
          %v2487 = vpop.permute.xlu0 %2486
          %2488 = vrot.lane.b32.xlu0 %v2384, 1
          %v2489 = vpop.permute.xlu0 %2488
          %2490 = vrot.lane.b32.xlu0 %v2385, 1
          %v2491 = vpop.permute.xlu0 %2490
          %2492 = vrot.lane.b32.xlu0 %v2386, 1
          %v2493 = vpop.permute.xlu0 %2492
          %2494 = vrot.lane.b32.xlu0 %v2387, 1
          %v2495 = vpop.permute.xlu0 %2494
          %2496 = vrot.lane.b32.xlu0 %v2388, 1
          %v2497 = vpop.permute.xlu0 %2496
          %2498 = vrot.lane.b32.xlu0 %v2389, 1
          %v2499 = vpop.permute.xlu0 %2498
          %2500 = vrot.lane.b32.xlu0 %v2390, 1
          %v2501 = vpop.permute.xlu0 %2500
          %2502 = vrot.lane.b32.xlu0 %v2391, 1
          %v2503 = vpop.permute.xlu0 %2502
          %2504 = vrot.lane.b32.xlu0 %v2392, 1
          %v2505 = vpop.permute.xlu0 %2504
          %2506 = vrot.lane.b32.xlu0 %v2393, 1
          %v2507 = vpop.permute.xlu0 %2506
          %2508 = vrot.lane.b32.xlu0 %v2394, 1
          %v2509 = vpop.permute.xlu0 %2508
          %2510 = vrot.lane.b32.xlu0 %v2395, 1
          %v2511 = vpop.permute.xlu0 %2510
          %2512 = vrot.lane.b32.xlu0 %v2396, 1
          %v2513 = vpop.permute.xlu0 %2512
          %2514 = vrot.lane.b32.xlu0 %v2397, 1
          %v2515 = vpop.permute.xlu0 %2514
          %2516 = vrot.lane.b32.xlu0 %v2398, 1
          %v2517 = vpop.permute.xlu0 %2516
          %2518 = vrot.lane.b32.xlu0 %v2399, 1
          %v2519 = vpop.permute.xlu0 %2518
          %2520 = vrot.lane.b32.xlu0 %v2400, 1
          %v2521 = vpop.permute.xlu0 %2520
          %2522 = vrot.lane.b32.xlu0 %v2401, 1
          %v2523 = vpop.permute.xlu0 %2522
          %2524 = vrot.lane.b32.xlu0 %v2402, 1
          %v2525 = vpop.permute.xlu0 %2524
          %2526 = vrot.lane.b32.xlu0 %v2403, 1
          %v2527 = vpop.permute.xlu0 %2526
          %2528 = vrot.lane.b32.xlu0 %v2404, 1
          %v2529 = vpop.permute.xlu0 %2528
          %2530 = vrot.lane.b32.xlu0 %v2405, 1
          %v2531 = vpop.permute.xlu0 %2530
          %2532 = vrot.lane.b32.xlu0 %v2406, 1
          %v2533 = vpop.permute.xlu0 %2532
          %2534 = vrot.lane.b32.xlu0 %v2407, 1
          %v2535 = vpop.permute.xlu0 %2534
          %v2568 = vrcp.pop %v2473
          %v2569 = vmul.f32 %v2408, %v2568
          %v2570 = vrcp.pop %v2475
          %v2571 = vmul.f32 %v2409, %v2570
          %v2572 = vrcp.pop %v2477
          %v2573 = vmul.f32 %v2410, %v2572
          %v2574 = vrcp.pop %v2479
          %v2575 = vmul.f32 %v2411, %v2574
          %v2576 = vrcp.pop %v2481
          %v2577 = vmul.f32 %v2412, %v2576
          %v2578 = vrcp.pop %v2483
          %v2579 = vmul.f32 %v2413, %v2578
          %v2580 = vrcp.pop %v2485
          %v2581 = vmul.f32 %v2414, %v2580
          %v2582 = vrcp.pop %v2487
          %v2583 = vmul.f32 %v2415, %v2582
          %v2584 = vrcp.pop %v2489
          %v2585 = vmul.f32 %v2416, %v2584
          %v2586 = vrcp.pop %v2491
          %v2587 = vmul.f32 %v2417, %v2586
          %v2588 = vrcp.pop %v2493
          %v2589 = vmul.f32 %v2418, %v2588
          %v2590 = vrcp.pop %v2495
          %v2591 = vmul.f32 %v2419, %v2590
          %v2592 = vrcp.pop %v2497
          %v2593 = vmul.f32 %v2420, %v2592
          %v2594 = vrcp.pop %v2499
          %v2595 = vmul.f32 %v2421, %v2594
          %v2596 = vrcp.pop %v2501
          %v2597 = vmul.f32 %v2422, %v2596
          %v2598 = vrcp.pop %v2503
          %v2599 = vmul.f32 %v2423, %v2598
          %v2600 = vrcp.pop %v2505
          %v2601 = vmul.f32 %v2424, %v2600
          %v2602 = vrcp.pop %v2507
          %v2603 = vmul.f32 %v2425, %v2602
          %v2604 = vrcp.pop %v2509
          %v2605 = vmul.f32 %v2426, %v2604
          %v2606 = vrcp.pop %v2511
          %v2607 = vmul.f32 %v2427, %v2606
          %v2608 = vrcp.pop %v2513
          %v2609 = vmul.f32 %v2428, %v2608
          %v2610 = vrcp.pop %v2515
          %v2611 = vmul.f32 %v2429, %v2610
          %v2612 = vrcp.pop %v2517
          %v2613 = vmul.f32 %v2430, %v2612
          %v2614 = vrcp.pop %v2519
          %v2615 = vmul.f32 %v2431, %v2614
          %v2616 = vrcp.pop %v2521
          %v2617 = vmul.f32 %v2432, %v2616
          %v2618 = vrcp.pop %v2523
          %v2619 = vmul.f32 %v2433, %v2618
          %v2620 = vrcp.pop %v2525
          %v2621 = vmul.f32 %v2434, %v2620
          %v2622 = vrcp.pop %v2527
          %v2623 = vmul.f32 %v2435, %v2622
          %v2624 = vrcp.pop %v2529
          %v2625 = vmul.f32 %v2436, %v2624
          %v2626 = vrcp.pop %v2531
          %v2627 = vmul.f32 %v2437, %v2626
          %v2628 = vrcp.pop %v2533
          %v2629 = vmul.f32 %v2438, %v2628
          %v2630 = vrcp.pop %v2535
          %v2631 = vmul.f32 %v2439, %v2630
          %v2632 = vsub.f32 1.0, %v2569
          %v2633 = vsub.f32 1.0, %v2571
          %v2634 = vsub.f32 1.0, %v2573
          %v2635 = vsub.f32 1.0, %v2575
          %v2636 = vsub.f32 1.0, %v2577
          %v2637 = vsub.f32 1.0, %v2579
          %v2638 = vsub.f32 1.0, %v2581
          %v2639 = vsub.f32 1.0, %v2583
          %v2640 = vsub.f32 1.0, %v2585
          %v2641 = vsub.f32 1.0, %v2587
          %v2642 = vsub.f32 1.0, %v2589
          %v2643 = vsub.f32 1.0, %v2591
          %v2644 = vsub.f32 1.0, %v2593
          %v2645 = vsub.f32 1.0, %v2595
          %v2646 = vsub.f32 1.0, %v2597
          %v2647 = vsub.f32 1.0, %v2599
          %v2648 = vsub.f32 1.0, %v2601
          %v2649 = vsub.f32 1.0, %v2603
          %v2650 = vsub.f32 1.0, %v2605
          %v2651 = vsub.f32 1.0, %v2607
          %v2652 = vsub.f32 1.0, %v2609
          %v2653 = vsub.f32 1.0, %v2611
          %v2654 = vsub.f32 1.0, %v2613
          %v2655 = vsub.f32 1.0, %v2615
          %v2656 = vsub.f32 1.0, %v2617
          %v2657 = vsub.f32 1.0, %v2619
          %v2658 = vsub.f32 1.0, %v2621
          %v2659 = vsub.f32 1.0, %v2623
          %v2660 = vsub.f32 1.0, %v2625
          %v2661 = vsub.f32 1.0, %v2627
          %v2662 = vsub.f32 1.0, %v2629
          %v2663 = vsub.f32 1.0, %v2631
          %2696 = vrot.lane.b32.xlu0 %v2632, 127
          %v2697 = vpop.permute.xlu0 %2696
          %2698 = vrot.lane.b32.xlu0 %v2633, 127
          %v2699 = vpop.permute.xlu0 %2698
          %2700 = vrot.lane.b32.xlu0 %v2634, 127
          %v2701 = vpop.permute.xlu0 %2700
          %2702 = vrot.lane.b32.xlu0 %v2635, 127
          %v2703 = vpop.permute.xlu0 %2702
          %2704 = vrot.lane.b32.xlu0 %v2636, 127
          %v2705 = vpop.permute.xlu0 %2704
          %2706 = vrot.lane.b32.xlu0 %v2637, 127
          %v2707 = vpop.permute.xlu0 %2706
          %2708 = vrot.lane.b32.xlu0 %v2638, 127
          %v2709 = vpop.permute.xlu0 %2708
          %2710 = vrot.lane.b32.xlu0 %v2639, 127
          %v2711 = vpop.permute.xlu0 %2710
          %2712 = vrot.lane.b32.xlu0 %v2640, 127
          %v2713 = vpop.permute.xlu0 %2712
          %2714 = vrot.lane.b32.xlu0 %v2641, 127
          %v2715 = vpop.permute.xlu0 %2714
          %2716 = vrot.lane.b32.xlu0 %v2642, 127
          %v2717 = vpop.permute.xlu0 %2716
          %2718 = vrot.lane.b32.xlu0 %v2643, 127
          %v2719 = vpop.permute.xlu0 %2718
          %2720 = vrot.lane.b32.xlu0 %v2644, 127
          %v2721 = vpop.permute.xlu0 %2720
          %2722 = vrot.lane.b32.xlu0 %v2645, 127
          %v2723 = vpop.permute.xlu0 %2722
          %2724 = vrot.lane.b32.xlu0 %v2646, 127
          %v2725 = vpop.permute.xlu0 %2724
          %2726 = vrot.lane.b32.xlu0 %v2647, 127
          %v2727 = vpop.permute.xlu0 %2726
          %2728 = vrot.lane.b32.xlu0 %v2648, 127
          %v2729 = vpop.permute.xlu0 %2728
          %2730 = vrot.lane.b32.xlu0 %v2649, 127
          %v2731 = vpop.permute.xlu0 %2730
          %2732 = vrot.lane.b32.xlu0 %v2650, 127
          %v2733 = vpop.permute.xlu0 %2732
          %2734 = vrot.lane.b32.xlu0 %v2651, 127
          %v2735 = vpop.permute.xlu0 %2734
          %2736 = vrot.lane.b32.xlu0 %v2652, 127
          %v2737 = vpop.permute.xlu0 %2736
          %2738 = vrot.lane.b32.xlu0 %v2653, 127
          %v2739 = vpop.permute.xlu0 %2738
          %2740 = vrot.lane.b32.xlu0 %v2654, 127
          %v2741 = vpop.permute.xlu0 %2740
          %2742 = vrot.lane.b32.xlu0 %v2655, 127
          %v2743 = vpop.permute.xlu0 %2742
          %2744 = vrot.lane.b32.xlu0 %v2656, 127
          %v2745 = vpop.permute.xlu0 %2744
          %2746 = vrot.lane.b32.xlu0 %v2657, 127
          %v2747 = vpop.permute.xlu0 %2746
          %2748 = vrot.lane.b32.xlu0 %v2658, 127
          %v2749 = vpop.permute.xlu0 %2748
          %2750 = vrot.lane.b32.xlu0 %v2659, 127
          %v2751 = vpop.permute.xlu0 %2750
          %2752 = vrot.lane.b32.xlu0 %v2660, 127
          %v2753 = vpop.permute.xlu0 %2752
          %2754 = vrot.lane.b32.xlu0 %v2661, 127
          %v2755 = vpop.permute.xlu0 %2754
          %2756 = vrot.lane.b32.xlu0 %v2662, 127
          %v2757 = vpop.permute.xlu0 %2756
          %2758 = vrot.lane.b32.xlu0 %v2663, 127
          %v2759 = vpop.permute.xlu0 %2758
          %v2792 = vsel %vm2152, %v2697, 0.0
          %v2793 = vsel %vm2153, %v2699, 0.0
          %v2794 = vsel %vm2154, %v2701, 0.0
          %v2795 = vsel %vm2155, %v2703, 0.0
          %v2796 = vsel %vm2156, %v2705, 0.0
          %v2797 = vsel %vm2157, %v2707, 0.0
          %v2798 = vsel %vm2158, %v2709, 0.0
          %v2799 = vsel %vm2159, %v2711, 0.0
          %v2800 = vsel %vm2160, %v2713, 0.0
          %v2801 = vsel %vm2161, %v2715, 0.0
          %v2802 = vsel %vm2162, %v2717, 0.0
          %v2803 = vsel %vm2163, %v2719, 0.0
          %v2804 = vsel %vm2164, %v2721, 0.0
          %v2805 = vsel %vm2165, %v2723, 0.0
          %v2806 = vsel %vm2166, %v2725, 0.0
          %v2807 = vsel %vm2167, %v2727, 0.0
          %v2808 = vsel %vm2168, %v2729, 0.0
          %v2809 = vsel %vm2169, %v2731, 0.0
          %v2810 = vsel %vm2170, %v2733, 0.0
          %v2811 = vsel %vm2171, %v2735, 0.0
          %v2812 = vsel %vm2172, %v2737, 0.0
          %v2813 = vsel %vm2173, %v2739, 0.0
          %v2814 = vsel %vm2174, %v2741, 0.0
          %v2815 = vsel %vm2175, %v2743, 0.0
          %v2816 = vsel %vm2176, %v2745, 0.0
          %v2817 = vsel %vm2177, %v2747, 0.0
          %v2818 = vsel %vm2178, %v2749, 0.0
          %v2819 = vsel %vm2179, %v2751, 0.0
          %v2820 = vsel %vm2180, %v2753, 0.0
          %v2821 = vsel %vm2181, %v2755, 0.0
          %v2822 = vsel %vm2182, %v2757, 0.0
          %v2823 = vsel %vm2183, %v2759, 0.0
          %v2824 = vmax.f32 %v352, 0.0
          %v2825 = vmax.f32 %v353, 0.0
          %v2826 = vmax.f32 %v354, 0.0
          %v2827 = vmax.f32 %v355, 0.0
          %v2828 = vmax.f32 %v356, 0.0
          %v2829 = vmax.f32 %v357, 0.0
          %v2830 = vmax.f32 %v358, 0.0
          %v2831 = vmax.f32 %v359, 0.0
          %v2832 = vmax.f32 %v360, 0.0
          %v2833 = vmax.f32 %v361, 0.0
          %v2834 = vmax.f32 %v362, 0.0
          %v2835 = vmax.f32 %v363, 0.0
          %v2836 = vmax.f32 %v364, 0.0
          %v2837 = vmax.f32 %v365, 0.0
          %v2838 = vmax.f32 %v366, 0.0
          %v2839 = vmax.f32 %v367, 0.0
          %v2840 = vmax.f32 %v368, 0.0
          %v2841 = vmax.f32 %v369, 0.0
          %v2842 = vmax.f32 %v370, 0.0
          %v2843 = vmax.f32 %v371, 0.0
          %v2844 = vmax.f32 %v372, 0.0
          %v2845 = vmax.f32 %v373, 0.0
          %v2846 = vmax.f32 %v374, 0.0
          %v2847 = vmax.f32 %v375, 0.0
          %v2848 = vmax.f32 %v376, 0.0
          %v2849 = vmax.f32 %v377, 0.0
          %v2850 = vmax.f32 %v378, 0.0
          %v2851 = vmax.f32 %v379, 0.0
          %v2852 = vmax.f32 %v380, 0.0
          %v2853 = vmax.f32 %v381, 0.0
          %v2854 = vmax.f32 %v382, 0.0
          %v2855 = vmax.f32 %v383, 0.0
          %2888 = vrot.lane.b32.xlu0 %v2792, 1
          %v2889 = vpop.permute.xlu0 %2888
          %2890 = vrot.lane.b32.xlu0 %v2793, 1
          %v2891 = vpop.permute.xlu0 %2890
          %2892 = vrot.lane.b32.xlu0 %v2794, 1
          %v2893 = vpop.permute.xlu0 %2892
          %2894 = vrot.lane.b32.xlu0 %v2795, 1
          %v2895 = vpop.permute.xlu0 %2894
          %2896 = vrot.lane.b32.xlu0 %v2796, 1
          %v2897 = vpop.permute.xlu0 %2896
          %2898 = vrot.lane.b32.xlu0 %v2797, 1
          %v2899 = vpop.permute.xlu0 %2898
          %2900 = vrot.lane.b32.xlu0 %v2798, 1
          %v2901 = vpop.permute.xlu0 %2900
          %2902 = vrot.lane.b32.xlu0 %v2799, 1
          %v2903 = vpop.permute.xlu0 %2902
          %2904 = vrot.lane.b32.xlu0 %v2800, 1
          %v2905 = vpop.permute.xlu0 %2904
          %2906 = vrot.lane.b32.xlu0 %v2801, 1
          %v2907 = vpop.permute.xlu0 %2906
          %2908 = vrot.lane.b32.xlu0 %v2802, 1
          %v2909 = vpop.permute.xlu0 %2908
          %2910 = vrot.lane.b32.xlu0 %v2803, 1
          %v2911 = vpop.permute.xlu0 %2910
          %2912 = vrot.lane.b32.xlu0 %v2804, 1
          %v2913 = vpop.permute.xlu0 %2912
          %2914 = vrot.lane.b32.xlu0 %v2805, 1
          %v2915 = vpop.permute.xlu0 %2914
          %2916 = vrot.lane.b32.xlu0 %v2806, 1
          %v2917 = vpop.permute.xlu0 %2916
          %2918 = vrot.lane.b32.xlu0 %v2807, 1
          %v2919 = vpop.permute.xlu0 %2918
          %2920 = vrot.lane.b32.xlu0 %v2808, 1
          %v2921 = vpop.permute.xlu0 %2920
          %2922 = vrot.lane.b32.xlu0 %v2809, 1
          %v2923 = vpop.permute.xlu0 %2922
          %2924 = vrot.lane.b32.xlu0 %v2810, 1
          %v2925 = vpop.permute.xlu0 %2924
          %2926 = vrot.lane.b32.xlu0 %v2811, 1
          %v2927 = vpop.permute.xlu0 %2926
          %2928 = vrot.lane.b32.xlu0 %v2812, 1
          %v2929 = vpop.permute.xlu0 %2928
          %2930 = vrot.lane.b32.xlu0 %v2813, 1
          %v2931 = vpop.permute.xlu0 %2930
          %2932 = vrot.lane.b32.xlu0 %v2814, 1
          %v2933 = vpop.permute.xlu0 %2932
          %2934 = vrot.lane.b32.xlu0 %v2815, 1
          %v2935 = vpop.permute.xlu0 %2934
          %2936 = vrot.lane.b32.xlu0 %v2816, 1
          %v2937 = vpop.permute.xlu0 %2936
          %2938 = vrot.lane.b32.xlu0 %v2817, 1
          %v2939 = vpop.permute.xlu0 %2938
          %2940 = vrot.lane.b32.xlu0 %v2818, 1
          %v2941 = vpop.permute.xlu0 %2940
          %2942 = vrot.lane.b32.xlu0 %v2819, 1
          %v2943 = vpop.permute.xlu0 %2942
          %2944 = vrot.lane.b32.xlu0 %v2820, 1
          %v2945 = vpop.permute.xlu0 %2944
          %2946 = vrot.lane.b32.xlu0 %v2821, 1
          %v2947 = vpop.permute.xlu0 %2946
          %2948 = vrot.lane.b32.xlu0 %v2822, 1
          %v2949 = vpop.permute.xlu0 %2948
          %2950 = vrot.lane.b32.xlu0 %v2823, 1
          %v2951 = vpop.permute.xlu0 %2950
          %v2984 = vsub.f32 %v2120, %v2889
          %v2985 = vsub.f32 %v2121, %v2891
          %v2986 = vsub.f32 %v2122, %v2893
          %v2987 = vsub.f32 %v2123, %v2895
          %v2988 = vsub.f32 %v2124, %v2897
          %v2989 = vsub.f32 %v2125, %v2899
          %v2990 = vsub.f32 %v2126, %v2901
          %v2991 = vsub.f32 %v2127, %v2903
          %v2992 = vsub.f32 %v2128, %v2905
          %v2993 = vsub.f32 %v2129, %v2907
          %v2994 = vsub.f32 %v2130, %v2909
          %v2995 = vsub.f32 %v2131, %v2911
          %v2996 = vsub.f32 %v2132, %v2913
          %v2997 = vsub.f32 %v2133, %v2915
          %v2998 = vsub.f32 %v2134, %v2917
          %v2999 = vsub.f32 %v2135, %v2919
          %v3000 = vsub.f32 %v2136, %v2921
          %v3001 = vsub.f32 %v2137, %v2923
          %v3002 = vsub.f32 %v2138, %v2925
          %v3003 = vsub.f32 %v2139, %v2927
          %v3004 = vsub.f32 %v2140, %v2929
          %v3005 = vsub.f32 %v2141, %v2931
          %v3006 = vsub.f32 %v2142, %v2933
          %v3007 = vsub.f32 %v2143, %v2935
          %v3008 = vsub.f32 %v2144, %v2937
          %v3009 = vsub.f32 %v2145, %v2939
          %v3010 = vsub.f32 %v2146, %v2941
          %v3011 = vsub.f32 %v2147, %v2943
          %v3012 = vsub.f32 %v2148, %v2945
          %v3013 = vsub.f32 %v2149, %v2947
          %v3014 = vsub.f32 %v2150, %v2949
          %v3015 = vsub.f32 %v2151, %v2951
          %3048 = vrot.lane.b32.xlu0 %v2984, 127
          %v3049 = vpop.permute.xlu0 %3048
          %3050 = vrot.lane.b32.xlu0 %v2985, 127
          %v3051 = vpop.permute.xlu0 %3050
          %3052 = vrot.lane.b32.xlu0 %v2986, 127
          %v3053 = vpop.permute.xlu0 %3052
          %3054 = vrot.lane.b32.xlu0 %v2987, 127
          %v3055 = vpop.permute.xlu0 %3054
          %3056 = vrot.lane.b32.xlu0 %v2988, 127
          %v3057 = vpop.permute.xlu0 %3056
          %3058 = vrot.lane.b32.xlu0 %v2989, 127
          %v3059 = vpop.permute.xlu0 %3058
          %3060 = vrot.lane.b32.xlu0 %v2990, 127
          %v3061 = vpop.permute.xlu0 %3060
          %3062 = vrot.lane.b32.xlu0 %v2991, 127
          %v3063 = vpop.permute.xlu0 %3062
          %3064 = vrot.lane.b32.xlu0 %v2992, 127
          %v3065 = vpop.permute.xlu0 %3064
          %3066 = vrot.lane.b32.xlu0 %v2993, 127
          %v3067 = vpop.permute.xlu0 %3066
          %3068 = vrot.lane.b32.xlu0 %v2994, 127
          %v3069 = vpop.permute.xlu0 %3068
          %3070 = vrot.lane.b32.xlu0 %v2995, 127
          %v3071 = vpop.permute.xlu0 %3070
          %3072 = vrot.lane.b32.xlu0 %v2996, 127
          %v3073 = vpop.permute.xlu0 %3072
          %3074 = vrot.lane.b32.xlu0 %v2997, 127
          %v3075 = vpop.permute.xlu0 %3074
          %3076 = vrot.lane.b32.xlu0 %v2998, 127
          %v3077 = vpop.permute.xlu0 %3076
          %3078 = vrot.lane.b32.xlu0 %v2999, 127
          %v3079 = vpop.permute.xlu0 %3078
          %3080 = vrot.lane.b32.xlu0 %v3000, 127
          %v3081 = vpop.permute.xlu0 %3080
          %3082 = vrot.lane.b32.xlu0 %v3001, 127
          %v3083 = vpop.permute.xlu0 %3082
          %3084 = vrot.lane.b32.xlu0 %v3002, 127
          %v3085 = vpop.permute.xlu0 %3084
          %3086 = vrot.lane.b32.xlu0 %v3003, 127
          %v3087 = vpop.permute.xlu0 %3086
          %3088 = vrot.lane.b32.xlu0 %v3004, 127
          %v3089 = vpop.permute.xlu0 %3088
          %3090 = vrot.lane.b32.xlu0 %v3005, 127
          %v3091 = vpop.permute.xlu0 %3090
          %3092 = vrot.lane.b32.xlu0 %v3006, 127
          %v3093 = vpop.permute.xlu0 %3092
          %3094 = vrot.lane.b32.xlu0 %v3007, 127
          %v3095 = vpop.permute.xlu0 %3094
          %3096 = vrot.lane.b32.xlu0 %v3008, 127
          %v3097 = vpop.permute.xlu0 %3096
          %3098 = vrot.lane.b32.xlu0 %v3009, 127
          %v3099 = vpop.permute.xlu0 %3098
          %3100 = vrot.lane.b32.xlu0 %v3010, 127
          %v3101 = vpop.permute.xlu0 %3100
          %3102 = vrot.lane.b32.xlu0 %v3011, 127
          %v3103 = vpop.permute.xlu0 %3102
          %3104 = vrot.lane.b32.xlu0 %v3012, 127
          %v3105 = vpop.permute.xlu0 %3104
          %3106 = vrot.lane.b32.xlu0 %v3013, 127
          %v3107 = vpop.permute.xlu0 %3106
          %3108 = vrot.lane.b32.xlu0 %v3014, 127
          %v3109 = vpop.permute.xlu0 %3108
          %3110 = vrot.lane.b32.xlu0 %v3015, 127
          %v3111 = vpop.permute.xlu0 %3110
          %v3144 = vmul.f32 %v2824, %v3049
          %v3145 = vmul.f32 %v2825, %v3051
          %v3146 = vmul.f32 %v2826, %v3053
          %v3147 = vmul.f32 %v2827, %v3055
          %v3148 = vmul.f32 %v2828, %v3057
          %v3149 = vmul.f32 %v2829, %v3059
          %v3150 = vmul.f32 %v2830, %v3061
          %v3151 = vmul.f32 %v2831, %v3063
          %v3152 = vmul.f32 %v2832, %v3065
          %v3153 = vmul.f32 %v2833, %v3067
          %v3154 = vmul.f32 %v2834, %v3069
          %v3155 = vmul.f32 %v2835, %v3071
          %v3156 = vmul.f32 %v2836, %v3073
          %v3157 = vmul.f32 %v2837, %v3075
          %v3158 = vmul.f32 %v2838, %v3077
          %v3159 = vmul.f32 %v2839, %v3079
          %v3160 = vmul.f32 %v2840, %v3081
          %v3161 = vmul.f32 %v2841, %v3083
          %v3162 = vmul.f32 %v2842, %v3085
          %v3163 = vmul.f32 %v2843, %v3087
          %v3164 = vmul.f32 %v2844, %v3089
          %v3165 = vmul.f32 %v2845, %v3091
          %v3166 = vmul.f32 %v2846, %v3093
          %v3167 = vmul.f32 %v2847, %v3095
          %v3168 = vmul.f32 %v2848, %v3097
          %v3169 = vmul.f32 %v2849, %v3099
          %v3170 = vmul.f32 %v2850, %v3101
          %v3171 = vmul.f32 %v2851, %v3103
          %v3172 = vmul.f32 %v2852, %v3105
          %v3173 = vmul.f32 %v2853, %v3107
          %v3174 = vmul.f32 %v2854, %v3109
          %v3175 = vmul.f32 %v2855, %v3111
          %v3176 = vsub.f32 %v1639, %v1671
          %v3177 = vsub.f32 %v1640, %v1672
          %v3178 = vsub.f32 %v1641, %v1673
          %v3179 = vsub.f32 %v1642, %v1674
          %v3180 = vsub.f32 %v1643, %v1675
          %v3181 = vsub.f32 %v1644, %v1676
          %v3182 = vsub.f32 %v1645, %v1677
          %v3183 = vsub.f32 %v1646, %v1678
          %v3184 = vsub.f32 %v1647, %v1679
          %v3185 = vsub.f32 %v1648, %v1680
          %v3186 = vsub.f32 %v1649, %v1681
          %v3187 = vsub.f32 %v1650, %v1682
          %v3188 = vsub.f32 %v1651, %v1683
          %v3189 = vsub.f32 %v1652, %v1684
          %v3190 = vsub.f32 %v1653, %v1685
          %v3191 = vsub.f32 %v1654, %v1686
          %v3192 = vsub.f32 %v1655, %v1687
          %v3193 = vsub.f32 %v1656, %v1688
          %v3194 = vsub.f32 %v1657, %v1689
          %v3195 = vsub.f32 %v1658, %v1690
          %v3196 = vsub.f32 %v1659, %v1691
          %v3197 = vsub.f32 %v1660, %v1692
          %v3198 = vsub.f32 %v1661, %v1693
          %v3199 = vsub.f32 %v1662, %v1694
          %v3200 = vsub.f32 %v1663, %v1695
          %v3201 = vsub.f32 %v1664, %v1696
          %v3202 = vsub.f32 %v1665, %v1697
          %v3203 = vsub.f32 %v1666, %v1698
          %v3204 = vsub.f32 %v1667, %v1699
          %v3205 = vsub.f32 %v1668, %v1700
          %v3206 = vsub.f32 %v1669, %v1701
          %v3207 = vsub.f32 %v1670, %v1702
          %v3208 = vrcp.pop %v3176
          %v3209 = vmul.f32 %v3144, %v3208
          %v3210 = vrcp.pop %v3177
          %v3211 = vmul.f32 %v3145, %v3210
          %v3212 = vrcp.pop %v3178
          %v3213 = vmul.f32 %v3146, %v3212
          %v3214 = vrcp.pop %v3179
          %v3215 = vmul.f32 %v3147, %v3214
          %v3216 = vrcp.pop %v3180
          %v3217 = vmul.f32 %v3148, %v3216
          %v3218 = vrcp.pop %v3181
          %v3219 = vmul.f32 %v3149, %v3218
          %v3220 = vrcp.pop %v3182
          %v3221 = vmul.f32 %v3150, %v3220
          %v3222 = vrcp.pop %v3183
          %v3223 = vmul.f32 %v3151, %v3222
          %v3224 = vrcp.pop %v3184
          %v3225 = vmul.f32 %v3152, %v3224
          %v3226 = vrcp.pop %v3185
          %v3227 = vmul.f32 %v3153, %v3226
          %v3228 = vrcp.pop %v3186
          %v3229 = vmul.f32 %v3154, %v3228
          %v3230 = vrcp.pop %v3187
          %v3231 = vmul.f32 %v3155, %v3230
          %v3232 = vrcp.pop %v3188
          %v3233 = vmul.f32 %v3156, %v3232
          %v3234 = vrcp.pop %v3189
          %v3235 = vmul.f32 %v3157, %v3234
          %v3236 = vrcp.pop %v3190
          %v3237 = vmul.f32 %v3158, %v3236
          %v3238 = vrcp.pop %v3191
          %v3239 = vmul.f32 %v3159, %v3238
          %v3240 = vrcp.pop %v3192
          %v3241 = vmul.f32 %v3160, %v3240
          %v3242 = vrcp.pop %v3193
          %v3243 = vmul.f32 %v3161, %v3242
          %v3244 = vrcp.pop %v3194
          %v3245 = vmul.f32 %v3162, %v3244
          %v3246 = vrcp.pop %v3195
          %v3247 = vmul.f32 %v3163, %v3246
          %v3248 = vrcp.pop %v3196
          %v3249 = vmul.f32 %v3164, %v3248
          %v3250 = vrcp.pop %v3197
          %v3251 = vmul.f32 %v3165, %v3250
          %v3252 = vrcp.pop %v3198
          %v3253 = vmul.f32 %v3166, %v3252
          %v3254 = vrcp.pop %v3199
          %v3255 = vmul.f32 %v3167, %v3254
          %v3256 = vrcp.pop %v3200
          %v3257 = vmul.f32 %v3168, %v3256
          %v3258 = vrcp.pop %v3201
          %v3259 = vmul.f32 %v3169, %v3258
          %v3260 = vrcp.pop %v3202
          %v3261 = vmul.f32 %v3170, %v3260
          %v3262 = vrcp.pop %v3203
          %v3263 = vmul.f32 %v3171, %v3262
          %v3264 = vrcp.pop %v3204
          %v3265 = vmul.f32 %v3172, %v3264
          %v3266 = vrcp.pop %v3205
          %v3267 = vmul.f32 %v3173, %v3266
          %v3268 = vrcp.pop %v3206
          %v3269 = vmul.f32 %v3174, %v3268
          %v3270 = vrcp.pop %v3207
          %v3271 = vmul.f32 %v3175, %v3270
          %vm3272 = vcmask 7168
          %v3273 = vsel %vm3272, %v3209, 0.0
          %v3274 = vsel %vm3272, %v3211, 0.0
          %v3275 = vadd.f32 %v3273, %v3274
          %v3276 = vsel %vm3272, %v3213, 0.0
          %v3277 = vadd.f32 %v3275, %v3276
          %v3278 = vsel %vm3272, %v3215, 0.0
          %v3279 = vadd.f32 %v3277, %v3278
          %v3280 = vsel %vm3272, %v3217, 0.0
          %v3281 = vadd.f32 %v3279, %v3280
          %v3282 = vsel %vm3272, %v3219, 0.0
          %v3283 = vadd.f32 %v3281, %v3282
          %v3284 = vsel %vm3272, %v3221, 0.0
          %v3285 = vadd.f32 %v3283, %v3284
          %v3286 = vsel %vm3272, %v3223, 0.0
          %v3287 = vadd.f32 %v3285, %v3286
          %v3288 = vsel %vm3272, %v3225, 0.0
          %v3289 = vadd.f32 %v3287, %v3288
          %v3290 = vsel %vm3272, %v3227, 0.0
          %v3291 = vadd.f32 %v3289, %v3290
          %v3292 = vsel %vm3272, %v3229, 0.0
          %v3293 = vadd.f32 %v3291, %v3292
          %v3294 = vsel %vm3272, %v3231, 0.0
          %v3295 = vadd.f32 %v3293, %v3294
          %v3296 = vsel %vm3272, %v3233, 0.0
          %v3297 = vadd.f32 %v3295, %v3296
          %v3298 = vsel %vm3272, %v3235, 0.0
          %v3299 = vadd.f32 %v3297, %v3298
          %v3300 = vsel %vm3272, %v3237, 0.0
          %v3301 = vadd.f32 %v3299, %v3300
          %v3302 = vsel %vm3272, %v3239, 0.0
          %v3303 = vadd.f32 %v3301, %v3302
          %v3304 = vsel %vm3272, %v3241, 0.0
          %v3305 = vadd.f32 %v3303, %v3304
          %v3306 = vsel %vm3272, %v3243, 0.0
          %v3307 = vadd.f32 %v3305, %v3306
          %v3308 = vsel %vm3272, %v3245, 0.0
          %v3309 = vadd.f32 %v3307, %v3308
          %v3310 = vsel %vm3272, %v3247, 0.0
          %v3311 = vadd.f32 %v3309, %v3310
          %v3312 = vsel %vm3272, %v3249, 0.0
          %v3313 = vadd.f32 %v3311, %v3312
          %v3314 = vsel %vm3272, %v3251, 0.0
          %v3315 = vadd.f32 %v3313, %v3314
          %v3316 = vsel %vm3272, %v3253, 0.0
          %v3317 = vadd.f32 %v3315, %v3316
          %v3318 = vsel %vm3272, %v3255, 0.0
          %v3319 = vadd.f32 %v3317, %v3318
          %v3320 = vsel %vm3272, %v3257, 0.0
          %v3321 = vadd.f32 %v3319, %v3320
          %v3322 = vsel %vm3272, %v3259, 0.0
          %v3323 = vadd.f32 %v3321, %v3322
          %v3324 = vsel %vm3272, %v3261, 0.0
          %v3325 = vadd.f32 %v3323, %v3324
          %v3326 = vsel %vm3272, %v3263, 0.0
          %v3327 = vadd.f32 %v3325, %v3326
          %v3328 = vsel %vm3272, %v3265, 0.0
          %v3329 = vadd.f32 %v3327, %v3328
          %v3330 = vsel %vm3272, %v3267, 0.0
          %v3331 = vadd.f32 %v3329, %v3330
          %v3332 = vsel %vm3272, %v3269, 0.0
          %v3333 = vadd.f32 %v3331, %v3332
          %v3334 = vsel %vm3272, %v3271, 0.0
          %v3335 = vadd.f32 %v3333, %v3334
          %3336 = vadd.xlane.f32.xlu0 %v3335
          %v3337 = vpop.xlane.xlu0 %3336
          %v3338 = vrot.slane %v3337, 4
          %v3339 = vadd.f32 %v3337, %v3338
          %v3340 = vrot.slane %v3339, 2
          %v3341 = vadd.f32 %v3339, %v3340
          %v3342 = vrot.slane %v3341, 1
          %v3343 = vadd.f32 %v3341, %v3342
          %s3344 = vtos %v3343
          %v3345 = vstv %s3344
          %3346 = vst [vmem:[%s252] sm:$0xff] %v3345
        $region40: #{tpu_custom_call.1} parent=31 // pred_fallthru
          _
        %s3347 = sand.u32 %s137, 1
        %s3348 = scalar_lea.sflag [#allocation7], %s3347
        %s3349 = sand.u32 %s137, 1
        %s3350 = smul.addr %s3349, 8
        %s3351 = scalar_lea.vmem [#allocation6], %s3350
        // Predicated region
        $region41: #{tpu_custom_call.1} parent=31 // pred_check
          %p3352 = pneg %p147
        $region42: #{tpu_custom_call.1} parent=31 // pred_check_branch
          %3354 = sbr.rel (%p3352) target = $region44
        $region43: #{tpu_custom_call.1} parent=31 // pred_region
          %s3356 = ssub.s32 128, 128
          %3357 = vsyncadd %s3348, %s3356
          %s3358 = sadd.s32 %s30, %s29
          %s3359 = smul.addr %s3358, 128
          %s3360 = scalar_lea.hbm %s4, %s3359
          %s3362 = sshll.u32 %s3351, 4
          %s3363 = int_to_ptr.vmem [resolvable:$true] %s3362
          %3365 = dma.vmem_to_hbm [thread:$0]  %s3363, 128, %s3360, %s3348
        $region44: #{tpu_custom_call.1} parent=31 // pred_fallthru
          _
      $region32: #{tpu_custom_call.1} parent=5 // pred_fallthru
        _
      %p3366 = scmp.le.s32.totalorder 2, %s19
      // Predicated region
      $region45: #{tpu_custom_call.1} parent=5 // pred_check
        %p3367 = pneg %p3366
      $region46: #{tpu_custom_call.1} parent=5 // pred_check_branch
        %3369 = sbr.rel (%p3367) target = $region48
      $region47: #{tpu_custom_call.1} parent=5 // pred_region
        %s3370 = ssub.s32 %s19, 2
        // Predicated region
        $region49: #{tpu_custom_call.1} parent=47 // pred_check
          %p3371 = pneg %p153
        $region50: #{tpu_custom_call.1} parent=47 // pred_check_branch
          %3373 = sbr.rel (%p3371) target = $region52
        $region51: #{tpu_custom_call.1} parent=47 // pred_region
          %s3374 = sand.u32 %s138, 1
          %s3375 = scalar_lea.sflag [#allocation7], %s3374
          %s3376 = sand.u32 %s138, 1
          %s3377 = smul.addr %s3376, 8
          %s3378 = scalar_lea.vmem [#allocation6], %s3377
          %3379 = dma.done %s3375, 128
        $region52: #{tpu_custom_call.1} parent=47 // pred_fallthru
          _
      $region48: #{tpu_custom_call.1} parent=5 // pred_fallthru
        _
    $region6: #{tpu_custom_call.1} parent=1 // loop_footer
      %s23 = sadd.s32 1, %s19
    $region7: #{tpu_custom_call.1} parent=1 // loop_footer_branch
      %18 = sbr.rel target = $region3
    $region8: #{tpu_custom_call.1} parent=1 // loop_exit
      _
    %3380 = vsyncpa [#allocation7], 1
    %s3381 = scalar_lea.sflag [#allocation7], 1
    %3382 = vsyncpa %s3381, 1

</llo_original>
